<compile_context>
chip_gen: v7x
topology: tpu7x:2x2x1
jax: 0.10.0
libtpu: 0.0.40
codegen_flags: <defaults>
</compile_context>

<pallas_src>
import jax
import jax.numpy as jnp
from jax.experimental import pallas as pl
from jax.experimental.pallas import tpu as pltpu

HIDDEN_DIMS = [128, 256, 512, 1024]
OUT_DIM = 3
PAD_OUT = 128       # lane-dense padded output width (128 keeps vst unmasked)
MAX_TM = 1024       # row-tile cap: amortizes per-step overhead, VMEM-safe on v5e
ROW_QUANTUM = 16    # bf16 sublane quantum for the streamed z tile


def _round_up(x, m):
    return -(-x // m) * m


def _leaky_relu(x, negative_slope=0.2):
    return jnp.where(x > 0, x, negative_slope * x)


def _choose_tm(rows):
    """Adaptive row tile.

    - tiny batches: a single tile of exactly round_up(rows, 16) rows (no
      wasted padded MXU work),
    - rows >= 32: split so the parallel grid axis has >= 2 steps (feeds both
      v7x TensorCores),
    - capped at MAX_TM rows to amortize per-grid-step overhead on v6e/v7x
      without approaching v5e's 16 MiB scoped-VMEM default.
    """
    rows_q = _round_up(rows, ROW_QUANTUM)
    if rows_q < 2 * ROW_QUANTUM:
        return rows_q
    half = _round_up(rows_q // 2, ROW_QUANTUM)
    return min(MAX_TM, half)


def generator_mlp_kernel(
    z_ref,
    w1_ref, b1_ref,
    w2_ref, b2_ref,
    w3_ref, b3_ref,
    w4_ref, b4_ref,
    w5_ref, b5_ref,
    out_ref,
):
    # All dots run on the MXU in bf16 with f32 accumulation; bias add,
    # LeakyReLU and the final clamp stay in f32 on the VPU. Activations are
    # plain values -> the compiler gives each layer disjoint VMEM temporaries
    # (no write-after-read aliasing between consecutive layers).
    h = z_ref[...]                                               # bf16 (tm, noise)
    h = _leaky_relu(
        jnp.dot(h, w1_ref[...], preferred_element_type=jnp.float32) + b1_ref[...]
    ).astype(jnp.bfloat16)                                       # (tm, 128)
    h = _leaky_relu(
        jnp.dot(h, w2_ref[...], preferred_element_type=jnp.float32) + b2_ref[...]
    ).astype(jnp.bfloat16)                                       # (tm, 256)
    h = _leaky_relu(
        jnp.dot(h, w3_ref[...], preferred_element_type=jnp.float32) + b3_ref[...]
    ).astype(jnp.bfloat16)                                       # (tm, 512)
    h = _leaky_relu(
        jnp.dot(h, w4_ref[...], preferred_element_type=jnp.float32) + b4_ref[...]
    ).astype(jnp.bfloat16)                                       # (tm, 1024)
    out = jnp.dot(h, w5_ref[...], preferred_element_type=jnp.float32) + b5_ref[...]
    out_ref[...] = jnp.clip(out, -1.0, 1.0).astype(out_ref.dtype)


def init_generator_params(key, noise_dim):
    """nn.Linear-style U(-1/sqrt(fan_in), 1/sqrt(fan_in)) init (deterministic).

    Weights are stored as (in_features, out_features) in bf16; biases as
    (1, out_features) in f32. The final (1024, 3) layer is zero-padded to
    PAD_OUT output lanes so the kernel's output store is lane-dense.
    """
    dims = [noise_dim] + HIDDEN_DIMS + [OUT_DIM]
    params = []
    for i in range(len(dims) - 1):
        key, kw, kb = jax.random.split(key, 3)
        fan_in, fan_out = dims[i], dims[i + 1]
        bound = 1.0 / float(fan_in) ** 0.5
        w = jax.random.uniform(kw, (fan_in, fan_out), jnp.float32, -bound, bound)
        b = jax.random.uniform(kb, (1, fan_out), jnp.float32, -bound, bound)
        if i == len(dims) - 2:  # pad the final (1024, 3) layer to 128 lanes
            w = jnp.pad(w, ((0, 0), (0, PAD_OUT - fan_out)))
            b = jnp.pad(b, ((0, 0), (0, PAD_OUT - fan_out)))
        params.append((w.astype(jnp.bfloat16), b.astype(jnp.float32)))
    return params


def _param_specs(params, single_buffer_weights):
    """Constant-index_map specs: weights/biases stay VMEM-resident across the
    grid. With single_buffer_weights we also drop the (pointless) second
    pipeline buffer for them."""
    extra = {}
    if single_buffer_weights:
        extra = dict(pipeline_mode=pl.Buffered(1))
    specs = []
    for (w, b) in params:
        specs.append(pl.BlockSpec(w.shape, lambda i: (0, 0), **extra))
        specs.append(pl.BlockSpec(b.shape, lambda i: (0, 0), **extra))
    return specs


def generator_forward(z, params):
    """z: (batch, n_lags, noise_dim) -> (batch, n_lags, 3), clamped to [-1, 1]."""
    batch, n_lags, noise_dim = z.shape
    rows = batch * n_lags
    tm = _choose_tm(rows)
    rows_padded = pl.cdiv(rows, tm) * tm

    # Stream z in bf16 (halves the only per-step streamed DMA; LHS is already
    # MXU-native). Pad rows so every block / store is full-width.
    z2d = z.reshape(rows, noise_dim).astype(jnp.bfloat16)
    if rows_padded != rows:
        z2d = jnp.pad(z2d, ((0, rows_padded - rows), (0, 0)))

    flat_params = []
    for (w, b) in params:
        flat_params += [w, b]

    grid = (rows_padded // tm,)

    def run(single_buffer_weights):
        return pl.pallas_call(
            generator_mlp_kernel,
            out_shape=jax.ShapeDtypeStruct((rows_padded, PAD_OUT), jnp.float32),
            grid=grid,
            in_specs=[pl.BlockSpec((tm, noise_dim), lambda i: (i, 0))]
                     + _param_specs(params, single_buffer_weights),
            out_specs=pl.BlockSpec((tm, PAD_OUT), lambda i: (i, 0)),
            compiler_params=pltpu.CompilerParams(
                dimension_semantics=("parallel",)),
        )(z2d, *flat_params)

    try:
        out2d = run(single_buffer_weights=True)
    except Exception:
        # pl.Buffered(1) not supported by this JAX version -> default
        # double-buffering (costs ~1.6 MiB extra resident VMEM, still safe).
        out2d = run(single_buffer_weights=False)

    # Padded rows / padded output lanes are computed but discarded here.
    return out2d[:rows, :OUT_DIM].reshape(batch, n_lags, OUT_DIM)


if __name__ == "__main__":
    # Small, module-consistent shapes: batch=2, n_lags=8, noise_dim=32.
    batch_size = 2
    n_lags = 8
    noise_dim = 32

    key = jax.random.PRNGKey(0)
    key_params, key_z = jax.random.split(key)

    params = init_generator_params(key_params, noise_dim)

    # torch.randn(batch_size, n_lags, noise_dim) -> deterministic JAX noise.
    z = jax.random.normal(key_z, (batch_size, n_lags, noise_dim), jnp.float32)

    out = generator_forward(z, params)
    out = jax.block_until_ready(out)

    assert out.shape == (batch_size, n_lags, 3)
    assert bool(jnp.all(out <= 1.0)) and bool(jnp.all(out >= -1.0))
    assert bool(jnp.all(jnp.isfinite(out)))

    print("KERNEL_OK")
</pallas_src>

<mosaic_0001>
module attributes {stable_mosaic.version = 11 : i64} {
  func.func @generator_mlp_kernel(%arg0: i32, %arg1: memref<16x32xbf16, #tpu.memory_space<vmem>>, %arg2: memref<32x128xbf16, #tpu.memory_space<vmem>>, %arg3: memref<1x128xf32, #tpu.memory_space<vmem>>, %arg4: memref<128x256xbf16, #tpu.memory_space<vmem>>, %arg5: memref<1x256xf32, #tpu.memory_space<vmem>>, %arg6: memref<256x512xbf16, #tpu.memory_space<vmem>>, %arg7: memref<1x512xf32, #tpu.memory_space<vmem>>, %arg8: memref<512x1024xbf16, #tpu.memory_space<vmem>>, %arg9: memref<1x1024xf32, #tpu.memory_space<vmem>>, %arg10: memref<1024x128xbf16, #tpu.memory_space<vmem>>, %arg11: memref<1x128xf32, #tpu.memory_space<vmem>>, %arg12: memref<16x128xf32, #tpu.memory_space<vmem>>) attributes {dimension_semantics = [#tpu.dimension_semantics<parallel>], iteration_bounds = array<i64: 1>, scalar_prefetch = 0 : i64, scratch_operands = 0 : i64, tpu.core_type = #tpu.core_type<tc>, window_params = [{transform_indices = @transform_0, window_bounds = array<i64: 16, 32>}, {pipeline_mode = #tpu.pipeline_mode<synchronous>, transform_indices = @transform_1, window_bounds = array<i64: 32, 128>}, {pipeline_mode = #tpu.pipeline_mode<synchronous>, transform_indices = @transform_2, window_bounds = array<i64: 1, 128>}, {pipeline_mode = #tpu.pipeline_mode<synchronous>, transform_indices = @transform_3, window_bounds = array<i64: 128, 256>}, {pipeline_mode = #tpu.pipeline_mode<synchronous>, transform_indices = @transform_4, window_bounds = array<i64: 1, 256>}, {pipeline_mode = #tpu.pipeline_mode<synchronous>, transform_indices = @transform_5, window_bounds = array<i64: 256, 512>}, {pipeline_mode = #tpu.pipeline_mode<synchronous>, transform_indices = @transform_6, window_bounds = array<i64: 1, 512>}, {pipeline_mode = #tpu.pipeline_mode<synchronous>, transform_indices = @transform_7, window_bounds = array<i64: 512, 1024>}, {pipeline_mode = #tpu.pipeline_mode<synchronous>, transform_indices = @transform_8, window_bounds = array<i64: 1, 1024>}, {pipeline_mode = #tpu.pipeline_mode<synchronous>, transform_indices = @transform_9, window_bounds = array<i64: 1024, 128>}, {pipeline_mode = #tpu.pipeline_mode<synchronous>, transform_indices = @transform_10, window_bounds = array<i64: 1, 128>}, {transform_indices = @transform_11, window_bounds = array<i64: 16, 128>}]} {
    %c0 = arith.constant 0 : index
    %c0_0 = arith.constant 0 : index
    %0 = vector.load %arg1[%c0, %c0_0] : memref<16x32xbf16, #tpu.memory_space<vmem>>, vector<16x32xbf16>
    %c0_1 = arith.constant 0 : index
    %c0_2 = arith.constant 0 : index
    %1 = vector.load %arg2[%c0_1, %c0_2] : memref<32x128xbf16, #tpu.memory_space<vmem>>, vector<32x128xbf16>
    %cst = arith.constant dense<0.000000e+00> : vector<16x128xf32>
    %2 = tpu.matmul %0, %1, %cst {dimension_numbers = #tpu.dot_dimension_numbers<[1], [0], [0], [1], [0, 0, 1, 1], [], []>} : vector<16x32xbf16>, vector<32x128xbf16>, vector<16x128xf32> -> vector<16x128xf32>
    %c0_3 = arith.constant 0 : index
    %c0_4 = arith.constant 0 : index
    %3 = vector.load %arg3[%c0_3, %c0_4] : memref<1x128xf32, #tpu.memory_space<vmem>>, vector<1x128xf32>
    %4 = vector.broadcast %3 : vector<1x128xf32> to vector<16x128xf32>
    %5 = arith.addf %2, %4 : vector<16x128xf32>
    %cst_5 = arith.constant 0.000000e+00 : f32
    %6 = vector.broadcast %cst_5 : f32 to vector<16x128xf32>
    %7 = arith.cmpf ogt, %5, %6 : vector<16x128xf32>
    %cst_6 = arith.constant 2.000000e-01 : f32
    %8 = vector.broadcast %cst_6 : f32 to vector<16x128xf32>
    %9 = arith.mulf %8, %5 : vector<16x128xf32>
    %10 = arith.select %7, %5, %9 : vector<16x128xi1>, vector<16x128xf32>
    %11 = arith.truncf %10 : vector<16x128xf32> to vector<16x128xbf16>
    %c0_7 = arith.constant 0 : index
    %c0_8 = arith.constant 0 : index
    %12 = vector.load %arg4[%c0_7, %c0_8] : memref<128x256xbf16, #tpu.memory_space<vmem>>, vector<128x256xbf16>
    %cst_9 = arith.constant dense<0.000000e+00> : vector<16x256xf32>
    %13 = tpu.matmul %11, %12, %cst_9 {dimension_numbers = #tpu.dot_dimension_numbers<[1], [0], [0], [1], [0, 0, 1, 1], [], []>} : vector<16x128xbf16>, vector<128x256xbf16>, vector<16x256xf32> -> vector<16x256xf32>
    %c0_10 = arith.constant 0 : index
    %c0_11 = arith.constant 0 : index
    %14 = vector.load %arg5[%c0_10, %c0_11] : memref<1x256xf32, #tpu.memory_space<vmem>>, vector<1x256xf32>
    %15 = vector.broadcast %14 : vector<1x256xf32> to vector<16x256xf32>
    %16 = arith.addf %13, %15 : vector<16x256xf32>
    %cst_12 = arith.constant 0.000000e+00 : f32
    %17 = vector.broadcast %cst_12 : f32 to vector<16x256xf32>
    %18 = arith.cmpf ogt, %16, %17 : vector<16x256xf32>
    %cst_13 = arith.constant 2.000000e-01 : f32
    %19 = vector.broadcast %cst_13 : f32 to vector<16x256xf32>
    %20 = arith.mulf %19, %16 : vector<16x256xf32>
    %21 = arith.select %18, %16, %20 : vector<16x256xi1>, vector<16x256xf32>
    %22 = arith.truncf %21 : vector<16x256xf32> to vector<16x256xbf16>
    %c0_14 = arith.constant 0 : index
    %c0_15 = arith.constant 0 : index
    %23 = vector.load %arg6[%c0_14, %c0_15] : memref<256x512xbf16, #tpu.memory_space<vmem>>, vector<256x512xbf16>
    %cst_16 = arith.constant dense<0.000000e+00> : vector<16x512xf32>
    %24 = tpu.matmul %22, %23, %cst_16 {dimension_numbers = #tpu.dot_dimension_numbers<[1], [0], [0], [1], [0, 0, 1, 1], [], []>} : vector<16x256xbf16>, vector<256x512xbf16>, vector<16x512xf32> -> vector<16x512xf32>
    %c0_17 = arith.constant 0 : index
    %c0_18 = arith.constant 0 : index
    %25 = vector.load %arg7[%c0_17, %c0_18] : memref<1x512xf32, #tpu.memory_space<vmem>>, vector<1x512xf32>
    %26 = vector.broadcast %25 : vector<1x512xf32> to vector<16x512xf32>
    %27 = arith.addf %24, %26 : vector<16x512xf32>
    %cst_19 = arith.constant 0.000000e+00 : f32
    %28 = vector.broadcast %cst_19 : f32 to vector<16x512xf32>
    %29 = arith.cmpf ogt, %27, %28 : vector<16x512xf32>
    %cst_20 = arith.constant 2.000000e-01 : f32
    %30 = vector.broadcast %cst_20 : f32 to vector<16x512xf32>
    %31 = arith.mulf %30, %27 : vector<16x512xf32>
    %32 = arith.select %29, %27, %31 : vector<16x512xi1>, vector<16x512xf32>
    %33 = arith.truncf %32 : vector<16x512xf32> to vector<16x512xbf16>
    %c0_21 = arith.constant 0 : index
    %c0_22 = arith.constant 0 : index
    %34 = vector.load %arg8[%c0_21, %c0_22] : memref<512x1024xbf16, #tpu.memory_space<vmem>>, vector<512x1024xbf16>
    %cst_23 = arith.constant dense<0.000000e+00> : vector<16x1024xf32>
    %35 = tpu.matmul %33, %34, %cst_23 {dimension_numbers = #tpu.dot_dimension_numbers<[1], [0], [0], [1], [0, 0, 1, 1], [], []>} : vector<16x512xbf16>, vector<512x1024xbf16>, vector<16x1024xf32> -> vector<16x1024xf32>
    %c0_24 = arith.constant 0 : index
    %c0_25 = arith.constant 0 : index
    %36 = vector.load %arg9[%c0_24, %c0_25] : memref<1x1024xf32, #tpu.memory_space<vmem>>, vector<1x1024xf32>
    %37 = vector.broadcast %36 : vector<1x1024xf32> to vector<16x1024xf32>
    %38 = arith.addf %35, %37 : vector<16x1024xf32>
    %cst_26 = arith.constant 0.000000e+00 : f32
    %39 = vector.broadcast %cst_26 : f32 to vector<16x1024xf32>
    %40 = arith.cmpf ogt, %38, %39 : vector<16x1024xf32>
    %cst_27 = arith.constant 2.000000e-01 : f32
    %41 = vector.broadcast %cst_27 : f32 to vector<16x1024xf32>
    %42 = arith.mulf %41, %38 : vector<16x1024xf32>
    %43 = arith.select %40, %38, %42 : vector<16x1024xi1>, vector<16x1024xf32>
    %44 = arith.truncf %43 : vector<16x1024xf32> to vector<16x1024xbf16>
    %c0_28 = arith.constant 0 : index
    %c0_29 = arith.constant 0 : index
    %45 = vector.load %arg10[%c0_28, %c0_29] : memref<1024x128xbf16, #tpu.memory_space<vmem>>, vector<1024x128xbf16>
    %cst_30 = arith.constant dense<0.000000e+00> : vector<16x128xf32>
    %46 = tpu.matmul %44, %45, %cst_30 {dimension_numbers = #tpu.dot_dimension_numbers<[1], [0], [0], [1], [0, 0, 1, 1], [], []>} : vector<16x1024xbf16>, vector<1024x128xbf16>, vector<16x128xf32> -> vector<16x128xf32>
    %c0_31 = arith.constant 0 : index
    %c0_32 = arith.constant 0 : index
    %47 = vector.load %arg11[%c0_31, %c0_32] : memref<1x128xf32, #tpu.memory_space<vmem>>, vector<1x128xf32>
    %48 = vector.broadcast %47 : vector<1x128xf32> to vector<16x128xf32>
    %49 = arith.addf %46, %48 : vector<16x128xf32>
    %cst_33 = arith.constant -1.000000e+00 : f32
    %cst_34 = arith.constant 1.000000e+00 : f32
    %50 = vector.broadcast %cst_33 : f32 to vector<16x128xf32>
    %51 = arith.maximumf %50, %49 : vector<16x128xf32>
    %52 = vector.broadcast %cst_34 : f32 to vector<16x128xf32>
    %53 = arith.minimumf %52, %51 : vector<16x128xf32>
    %c0_35 = arith.constant 0 : index
    %c0_36 = arith.constant 0 : index
    %54 = vector.load %arg12[%c0_35, %c0_36] : memref<16x128xf32, #tpu.memory_space<vmem>>, vector<16x128xf32>
    tpu.vector_store %arg12[%c0_35, %c0_36], %53 {strides = array<i32>} : memref<16x128xf32, #tpu.memory_space<vmem>>, vector<16x128xf32>,
    return
  }
  func.func @transform_0(%arg0: i32) -> (i32, i32) {
    %c0_i32 = arith.constant 0 : i32
    %c0_i32_0 = arith.constant 0 : i32
    return %arg0, %c0_i32 : i32, i32
  }
  func.func @transform_1(%arg0: i32) -> (i32, i32) {
    %c0_i32 = arith.constant 0 : i32
    %c0_i32_0 = arith.constant 0 : i32
    %c0_i32_1 = arith.constant 0 : i32
    return %c0_i32, %c0_i32_0 : i32, i32
  }
  func.func @transform_2(%arg0: i32) -> (i32, i32) {
    %c0_i32 = arith.constant 0 : i32
    %c0_i32_0 = arith.constant 0 : i32
    %c0_i32_1 = arith.constant 0 : i32
    return %c0_i32, %c0_i32_0 : i32, i32
  }
  func.func @transform_3(%arg0: i32) -> (i32, i32) {
    %c0_i32 = arith.constant 0 : i32
    %c0_i32_0 = arith.constant 0 : i32
    %c0_i32_1 = arith.constant 0 : i32
    return %c0_i32, %c0_i32_0 : i32, i32
  }
  func.func @transform_4(%arg0: i32) -> (i32, i32) {
    %c0_i32 = arith.constant 0 : i32
    %c0_i32_0 = arith.constant 0 : i32
    %c0_i32_1 = arith.constant 0 : i32
    return %c0_i32, %c0_i32_0 : i32, i32
  }
  func.func @transform_5(%arg0: i32) -> (i32, i32) {
    %c0_i32 = arith.constant 0 : i32
    %c0_i32_0 = arith.constant 0 : i32
    %c0_i32_1 = arith.constant 0 : i32
    return %c0_i32, %c0_i32_0 : i32, i32
  }
  func.func @transform_6(%arg0: i32) -> (i32, i32) {
    %c0_i32 = arith.constant 0 : i32
    %c0_i32_0 = arith.constant 0 : i32
    %c0_i32_1 = arith.constant 0 : i32
    return %c0_i32, %c0_i32_0 : i32, i32
  }
  func.func @transform_7(%arg0: i32) -> (i32, i32) {
    %c0_i32 = arith.constant 0 : i32
    %c0_i32_0 = arith.constant 0 : i32
    %c0_i32_1 = arith.constant 0 : i32
    return %c0_i32, %c0_i32_0 : i32, i32
  }
  func.func @transform_8(%arg0: i32) -> (i32, i32) {
    %c0_i32 = arith.constant 0 : i32
    %c0_i32_0 = arith.constant 0 : i32
    %c0_i32_1 = arith.constant 0 : i32
    return %c0_i32, %c0_i32_0 : i32, i32
  }
  func.func @transform_9(%arg0: i32) -> (i32, i32) {
    %c0_i32 = arith.constant 0 : i32
    %c0_i32_0 = arith.constant 0 : i32
    %c0_i32_1 = arith.constant 0 : i32
    return %c0_i32, %c0_i32_0 : i32, i32
  }
  func.func @transform_10(%arg0: i32) -> (i32, i32) {
    %c0_i32 = arith.constant 0 : i32
    %c0_i32_0 = arith.constant 0 : i32
    %c0_i32_1 = arith.constant 0 : i32
    return %c0_i32, %c0_i32_0 : i32, i32
  }
  func.func @transform_11(%arg0: i32) -> (i32, i32) {
    %c0_i32 = arith.constant 0 : i32
    %c0_i32_0 = arith.constant 0 : i32
    return %arg0, %c0_i32 : i32, i32
  }
}

module attributes {stable_mosaic.version = 11 : i64} {
  func.func @generator_mlp_kernel(%arg0: i32, %arg1: memref<16x32xbf16, #tpu.memory_space<vmem>>, %arg2: memref<32x128xbf16, #tpu.memory_space<vmem>>, %arg3: memref<1x128xf32, #tpu.memory_space<vmem>>, %arg4: memref<128x256xbf16, #tpu.memory_space<vmem>>, %arg5: memref<1x256xf32, #tpu.memory_space<vmem>>, %arg6: memref<256x512xbf16, #tpu.memory_space<vmem>>, %arg7: memref<1x512xf32, #tpu.memory_space<vmem>>, %arg8: memref<512x1024xbf16, #tpu.memory_space<vmem>>, %arg9: memref<1x1024xf32, #tpu.memory_space<vmem>>, %arg10: memref<1024x128xbf16, #tpu.memory_space<vmem>>, %arg11: memref<1x128xf32, #tpu.memory_space<vmem>>, %arg12: memref<16x128xf32, #tpu.memory_space<vmem>>) attributes {dimension_semantics = [#tpu.dimension_semantics<parallel>], iteration_bounds = array<i64: 1>, scalar_prefetch = 0 : i64, scratch_operands = 0 : i64, tpu.core_type = #tpu.core_type<tc>, window_params = [{transform_indices = @transform_0, window_bounds = array<i64: 16, 32>}, {pipeline_mode = #tpu.pipeline_mode<synchronous>, transform_indices = @transform_1, window_bounds = array<i64: 32, 128>}, {pipeline_mode = #tpu.pipeline_mode<synchronous>, transform_indices = @transform_2, window_bounds = array<i64: 1, 128>}, {pipeline_mode = #tpu.pipeline_mode<synchronous>, transform_indices = @transform_3, window_bounds = array<i64: 128, 256>}, {pipeline_mode = #tpu.pipeline_mode<synchronous>, transform_indices = @transform_4, window_bounds = array<i64: 1, 256>}, {pipeline_mode = #tpu.pipeline_mode<synchronous>, transform_indices = @transform_5, window_bounds = array<i64: 256, 512>}, {pipeline_mode = #tpu.pipeline_mode<synchronous>, transform_indices = @transform_6, window_bounds = array<i64: 1, 512>}, {pipeline_mode = #tpu.pipeline_mode<synchronous>, transform_indices = @transform_7, window_bounds = array<i64: 512, 1024>}, {pipeline_mode = #tpu.pipeline_mode<synchronous>, transform_indices = @transform_8, window_bounds = array<i64: 1, 1024>}, {pipeline_mode = #tpu.pipeline_mode<synchronous>, transform_indices = @transform_9, window_bounds = array<i64: 1024, 128>}, {pipeline_mode = #tpu.pipeline_mode<synchronous>, transform_indices = @transform_10, window_bounds = array<i64: 1, 128>}, {transform_indices = @transform_11, window_bounds = array<i64: 16, 128>}]} {
    %c0 = arith.constant 0 : index
    %c0_0 = arith.constant 0 : index
    %0 = vector.load %arg1[%c0, %c0_0] : memref<16x32xbf16, #tpu.memory_space<vmem>>, vector<16x32xbf16>
    %c0_1 = arith.constant 0 : index
    %c0_2 = arith.constant 0 : index
    %1 = vector.load %arg2[%c0_1, %c0_2] : memref<32x128xbf16, #tpu.memory_space<vmem>>, vector<32x128xbf16>
    %cst = arith.constant dense<0.000000e+00> : vector<16x128xf32>
    %2 = tpu.matmul %0, %1, %cst {dimension_numbers = #tpu.dot_dimension_numbers<[1], [0], [0], [1], [0, 0, 1, 1], [], []>} : vector<16x32xbf16>, vector<32x128xbf16>, vector<16x128xf32> -> vector<16x128xf32>
    %c0_3 = arith.constant 0 : index
    %c0_4 = arith.constant 0 : index
    %3 = vector.load %arg3[%c0_3, %c0_4] : memref<1x128xf32, #tpu.memory_space<vmem>>, vector<1x128xf32>
    %4 = vector.broadcast %3 : vector<1x128xf32> to vector<16x128xf32>
    %5 = arith.addf %2, %4 : vector<16x128xf32>
    %cst_5 = arith.constant 0.000000e+00 : f32
    %6 = vector.broadcast %cst_5 : f32 to vector<16x128xf32>
    %7 = arith.cmpf ogt, %5, %6 : vector<16x128xf32>
    %cst_6 = arith.constant 2.000000e-01 : f32
    %8 = vector.broadcast %cst_6 : f32 to vector<16x128xf32>
    %9 = arith.mulf %8, %5 : vector<16x128xf32>
    %10 = arith.select %7, %5, %9 : vector<16x128xi1>, vector<16x128xf32>
    %11 = arith.truncf %10 : vector<16x128xf32> to vector<16x128xbf16>
    %c0_7 = arith.constant 0 : index
    %c0_8 = arith.constant 0 : index
    %12 = vector.load %arg4[%c0_7, %c0_8] : memref<128x256xbf16, #tpu.memory_space<vmem>>, vector<128x256xbf16>
    %cst_9 = arith.constant dense<0.000000e+00> : vector<16x256xf32>
    %13 = tpu.matmul %11, %12, %cst_9 {dimension_numbers = #tpu.dot_dimension_numbers<[1], [0], [0], [1], [0, 0, 1, 1], [], []>} : vector<16x128xbf16>, vector<128x256xbf16>, vector<16x256xf32> -> vector<16x256xf32>
    %c0_10 = arith.constant 0 : index
    %c0_11 = arith.constant 0 : index
    %14 = vector.load %arg5[%c0_10, %c0_11] : memref<1x256xf32, #tpu.memory_space<vmem>>, vector<1x256xf32>
    %15 = vector.broadcast %14 : vector<1x256xf32> to vector<16x256xf32>
    %16 = arith.addf %13, %15 : vector<16x256xf32>
    %cst_12 = arith.constant 0.000000e+00 : f32
    %17 = vector.broadcast %cst_12 : f32 to vector<16x256xf32>
    %18 = arith.cmpf ogt, %16, %17 : vector<16x256xf32>
    %cst_13 = arith.constant 2.000000e-01 : f32
    %19 = vector.broadcast %cst_13 : f32 to vector<16x256xf32>
    %20 = arith.mulf %19, %16 : vector<16x256xf32>
    %21 = arith.select %18, %16, %20 : vector<16x256xi1>, vector<16x256xf32>
    %22 = arith.truncf %21 : vector<16x256xf32> to vector<16x256xbf16>
    %c0_14 = arith.constant 0 : index
    %c0_15 = arith.constant 0 : index
    %23 = vector.load %arg6[%c0_14, %c0_15] : memref<256x512xbf16, #tpu.memory_space<vmem>>, vector<256x512xbf16>
    %cst_16 = arith.constant dense<0.000000e+00> : vector<16x512xf32>
    %24 = tpu.matmul %22, %23, %cst_16 {dimension_numbers = #tpu.dot_dimension_numbers<[1], [0], [0], [1], [0, 0, 1, 1], [], []>} : vector<16x256xbf16>, vector<256x512xbf16>, vector<16x512xf32> -> vector<16x512xf32>
    %c0_17 = arith.constant 0 : index
    %c0_18 = arith.constant 0 : index
    %25 = vector.load %arg7[%c0_17, %c0_18] : memref<1x512xf32, #tpu.memory_space<vmem>>, vector<1x512xf32>
    %26 = vector.broadcast %25 : vector<1x512xf32> to vector<16x512xf32>
    %27 = arith.addf %24, %26 : vector<16x512xf32>
    %cst_19 = arith.constant 0.000000e+00 : f32
    %28 = vector.broadcast %cst_19 : f32 to vector<16x512xf32>
    %29 = arith.cmpf ogt, %27, %28 : vector<16x512xf32>
    %cst_20 = arith.constant 2.000000e-01 : f32
    %30 = vector.broadcast %cst_20 : f32 to vector<16x512xf32>
    %31 = arith.mulf %30, %27 : vector<16x512xf32>
    %32 = arith.select %29, %27, %31 : vector<16x512xi1>, vector<16x512xf32>
    %33 = arith.truncf %32 : vector<16x512xf32> to vector<16x512xbf16>
    %c0_21 = arith.constant 0 : index
    %c0_22 = arith.constant 0 : index
    %34 = vector.load %arg8[%c0_21, %c0_22] : memref<512x1024xbf16, #tpu.memory_space<vmem>>, vector<512x1024xbf16>
    %cst_23 = arith.constant dense<0.000000e+00> : vector<16x1024xf32>
    %35 = tpu.matmul %33, %34, %cst_23 {dimension_numbers = #tpu.dot_dimension_numbers<[1], [0], [0], [1], [0, 0, 1, 1], [], []>} : vector<16x512xbf16>, vector<512x1024xbf16>, vector<16x1024xf32> -> vector<16x1024xf32>
    %c0_24 = arith.constant 0 : index
    %c0_25 = arith.constant 0 : index
    %36 = vector.load %arg9[%c0_24, %c0_25] : memref<1x1024xf32, #tpu.memory_space<vmem>>, vector<1x1024xf32>
    %37 = vector.broadcast %36 : vector<1x1024xf32> to vector<16x1024xf32>
    %38 = arith.addf %35, %37 : vector<16x1024xf32>
    %cst_26 = arith.constant 0.000000e+00 : f32
    %39 = vector.broadcast %cst_26 : f32 to vector<16x1024xf32>
    %40 = arith.cmpf ogt, %38, %39 : vector<16x1024xf32>
    %cst_27 = arith.constant 2.000000e-01 : f32
    %41 = vector.broadcast %cst_27 : f32 to vector<16x1024xf32>
    %42 = arith.mulf %41, %38 : vector<16x1024xf32>
    %43 = arith.select %40, %38, %42 : vector<16x1024xi1>, vector<16x1024xf32>
    %44 = arith.truncf %43 : vector<16x1024xf32> to vector<16x1024xbf16>
    %c0_28 = arith.constant 0 : index
    %c0_29 = arith.constant 0 : index
    %45 = vector.load %arg10[%c0_28, %c0_29] : memref<1024x128xbf16, #tpu.memory_space<vmem>>, vector<1024x128xbf16>
    %cst_30 = arith.constant dense<0.000000e+00> : vector<16x128xf32>
    %46 = tpu.matmul %44, %45, %cst_30 {dimension_numbers = #tpu.dot_dimension_numbers<[1], [0], [0], [1], [0, 0, 1, 1], [], []>} : vector<16x1024xbf16>, vector<1024x128xbf16>, vector<16x128xf32> -> vector<16x128xf32>
    %c0_31 = arith.constant 0 : index
    %c0_32 = arith.constant 0 : index
    %47 = vector.load %arg11[%c0_31, %c0_32] : memref<1x128xf32, #tpu.memory_space<vmem>>, vector<1x128xf32>
    %48 = vector.broadcast %47 : vector<1x128xf32> to vector<16x128xf32>
    %49 = arith.addf %46, %48 : vector<16x128xf32>
    %cst_33 = arith.constant -1.000000e+00 : f32
    %cst_34 = arith.constant 1.000000e+00 : f32
    %50 = vector.broadcast %cst_33 : f32 to vector<16x128xf32>
    %51 = arith.maximumf %50, %49 : vector<16x128xf32>
    %52 = vector.broadcast %cst_34 : f32 to vector<16x128xf32>
    %53 = arith.minimumf %52, %51 : vector<16x128xf32>
    %c0_35 = arith.constant 0 : index
    %c0_36 = arith.constant 0 : index
    %54 = vector.load %arg12[%c0_35, %c0_36] : memref<16x128xf32, #tpu.memory_space<vmem>>, vector<16x128xf32>
    tpu.vector_store %arg12[%c0_35, %c0_36], %53 {strides = array<i32>} : memref<16x128xf32, #tpu.memory_space<vmem>>, vector<16x128xf32>,
    return
  }
  func.func @transform_0(%arg0: i32) -> (i32, i32) {
    %c0_i32 = arith.constant 0 : i32
    %c0_i32_0 = arith.constant 0 : i32
    return %arg0, %c0_i32 : i32, i32
  }
  func.func @transform_1(%arg0: i32) -> (i32, i32) {
    %c0_i32 = arith.constant 0 : i32
    %c0_i32_0 = arith.constant 0 : i32
    %c0_i32_1 = arith.constant 0 : i32
    return %c0_i32, %c0_i32_0 : i32, i32
  }
  func.func @transform_2(%arg0: i32) -> (i32, i32) {
    %c0_i32 = arith.constant 0 : i32
    %c0_i32_0 = arith.constant 0 : i32
    %c0_i32_1 = arith.constant 0 : i32
    return %c0_i32, %c0_i32_0 : i32, i32
  }
  func.func @transform_3(%arg0: i32) -> (i32, i32) {
    %c0_i32 = arith.constant 0 : i32
    %c0_i32_0 = arith.constant 0 : i32
    %c0_i32_1 = arith.constant 0 : i32
    return %c0_i32, %c0_i32_0 : i32, i32
  }
  func.func @transform_4(%arg0: i32) -> (i32, i32) {
    %c0_i32 = arith.constant 0 : i32
    %c0_i32_0 = arith.constant 0 : i32
    %c0_i32_1 = arith.constant 0 : i32
    return %c0_i32, %c0_i32_0 : i32, i32
  }
  func.func @transform_5(%arg0: i32) -> (i32, i32) {
    %c0_i32 = arith.constant 0 : i32
    %c0_i32_0 = arith.constant 0 : i32
    %c0_i32_1 = arith.constant 0 : i32
    return %c0_i32, %c0_i32_0 : i32, i32
  }
  func.func @transform_6(%arg0: i32) -> (i32, i32) {
    %c0_i32 = arith.constant 0 : i32
    %c0_i32_0 = arith.constant 0 : i32
    %c0_i32_1 = arith.constant 0 : i32
    return %c0_i32, %c0_i32_0 : i32, i32
  }
  func.func @transform_7(%arg0: i32) -> (i32, i32) {
    %c0_i32 = arith.constant 0 : i32
    %c0_i32_0 = arith.constant 0 : i32
    %c0_i32_1 = arith.constant 0 : i32
    return %c0_i32, %c0_i32_0 : i32, i32
  }
  func.func @transform_8(%arg0: i32) -> (i32, i32) {
    %c0_i32 = arith.constant 0 : i32
    %c0_i32_0 = arith.constant 0 : i32
    %c0_i32_1 = arith.constant 0 : i32
    return %c0_i32, %c0_i32_0 : i32, i32
  }
  func.func @transform_9(%arg0: i32) -> (i32, i32) {
    %c0_i32 = arith.constant 0 : i32
    %c0_i32_0 = arith.constant 0 : i32
    %c0_i32_1 = arith.constant 0 : i32
    return %c0_i32, %c0_i32_0 : i32, i32
  }
  func.func @transform_10(%arg0: i32) -> (i32, i32) {
    %c0_i32 = arith.constant 0 : i32
    %c0_i32_0 = arith.constant 0 : i32
    %c0_i32_1 = arith.constant 0 : i32
    return %c0_i32, %c0_i32_0 : i32, i32
  }
  func.func @transform_11(%arg0: i32) -> (i32, i32) {
    %c0_i32 = arith.constant 0 : i32
    %c0_i32_0 = arith.constant 0 : i32
    return %arg0, %c0_i32 : i32, i32
  }
}

</mosaic_0001>

<llo_original>
// kernel: tpu_custom_call.1
$region0: #{tpu_custom_call.1}
  #allocation0 [shape = 'u32[]', space=smem, size = 0x4, offset = 0x4, fixed_abs, tag = 'smem constant byte address 0x4 - core index']
  #allocation1 [shape = 'u32[144,128]{1,0:T(1,128)}', space=vmem, size = 0x12000, scoped, tag = 'internal scratch']
  %s0 = inlined_call_operand.hbm [shape: bf16[16,32], index: 0, kind: input, shape index: {}]
  %s1 = inlined_call_operand.hbm [shape: bf16[32,128], index: 1, kind: input, shape index: {}]
  %s2 = inlined_call_operand.vmem [shape: f32[1,128], index: 2, kind: input, shape index: {}]
  %s3 = inlined_call_operand.hbm [shape: bf16[128,256], index: 3, kind: input, shape index: {}]
  %s4 = inlined_call_operand.vmem [shape: f32[1,256], index: 4, kind: input, shape index: {}]
  %s5 = inlined_call_operand.hbm [shape: bf16[256,512], index: 5, kind: input, shape index: {}]
  %s6 = inlined_call_operand.vmem [shape: f32[1,512], index: 6, kind: input, shape index: {}]
  %s7 = inlined_call_operand.hbm [shape: bf16[512,1024], index: 7, kind: input, shape index: {}]
  %s8 = inlined_call_operand.vmem [shape: f32[1,1024], index: 8, kind: input, shape index: {}]
  %s9 = inlined_call_operand.hbm [shape: bf16[1024,128], index: 9, kind: input, shape index: {}]
  %s10 = inlined_call_operand.vmem [shape: f32[1,128], index: 10, kind: input, shape index: {}]
  %s11 = inlined_call_operand.hbm [shape: f32[16,128], index: 11, kind: output, shape index: {}]
  %s12 = sld [smem:[#allocation0]]
  $region78: #{tpu_custom_call.1} parent=0
    _
  %s14 = ssub.s32 1, %s12
  %s15 = scalar_select 0, %s14, %s12
  $region1: #{tpu_custom_call.1} parent=0
    #allocation2 [shape = 'u8[4096]{0}', space=vmem, size = 0x1000, scoped, tag = 'input window, operand 0, single buffered']
    #allocation3 [shape = 's32[1]{0}', space=sflag, size = 0x4, scoped, tag = 'scoped memory for tpu_custom_call.1']
    #allocation4 [shape = 's32[1]{0}', space=sflag, size = 0x4, scoped, tag = 'scoped memory for tpu_custom_call.1']
    #allocation5 [shape = 'u8[8192]{0}', space=vmem, size = 0x2000, scoped, tag = 'input window, operand 1, single buffered']
    #allocation6 [shape = 's32[1]{0}', space=sflag, size = 0x4, scoped, tag = 'scoped memory for tpu_custom_call.1']
    #allocation7 [shape = 'u8[65536]{0}', space=vmem, size = 0x10000, scoped, tag = 'input window, operand 3, single buffered']
    #allocation8 [shape = 'u8[262144]{0}', space=vmem, size = 0x40000, scoped, tag = 'input window, operand 5, single buffered']
    #allocation9 [shape = 's32[1]{0}', space=sflag, size = 0x4, scoped, tag = 'scoped memory for tpu_custom_call.1']
    #allocation10 [shape = 'u8[1048576]{0}', space=vmem, size = 0x100000, scoped, tag = 'input window, operand 7, single buffered']
    #allocation11 [shape = 'u8[262144]{0}', space=vmem, size = 0x40000, scoped, tag = 'input window, operand 9, single buffered']
    #allocation12 [shape = 's32[1]{0}', space=sflag, size = 0x4, scoped, tag = 'scoped memory for tpu_custom_call.1']
    #allocation13 [shape = 'u8[8192]{0}', space=vmem, size = 0x2000, scoped, tag = 'output window, operand 0, single buffered']
    %16 = vsyncpa [#allocation3], 0
    %17 = vsyncpa [#allocation6], 0
    %18 = vsyncpa [#allocation9], 0
    %19 = vsyncpa [#allocation12], 0
    %20 = vsyncpa [#allocation4], 0
    // Predicated region
    $region2: #{tpu_custom_call.1} parent=1 // pred_check
      _
    $region3: #{tpu_custom_call.1} parent=1 // pred_check_branch
      %22 = sbr.rel (0) target = $region5
    $region4: #{tpu_custom_call.1} parent=1 // pred_region
      %s24 = ssub.s32 128, 128
      %25 = vsyncadd [#allocation3], %s24
      %s26 = sshll.u32 [#allocation2], 4
      %s27 = int_to_ptr.vmem [resolvable:$true] %s26
      %32 = dma.hbm_to_vmem [thread:$0]  %s0, 128, %s27, [#allocation3], 64, 64, 4
    $region5: #{tpu_custom_call.1} parent=1 // pred_fallthru
      _
    // Predicated region
    $region6: #{tpu_custom_call.1} parent=1 // pred_check
      _
    $region7: #{tpu_custom_call.1} parent=1 // pred_check_branch
      %34 = sbr.rel (0) target = $region9
    $region8: #{tpu_custom_call.1} parent=1 // pred_region
      %s36 = ssub.s32 256, 256
      %37 = vsyncadd [#allocation6], %s36
      %s38 = sshll.u32 [#allocation5], 4
      %s39 = int_to_ptr.vmem [resolvable:$true] %s38
      %44 = dma.hbm_to_vmem [thread:$0]  %s1, 256, %s39, [#allocation6], 64, 64, 4
    $region9: #{tpu_custom_call.1} parent=1 // pred_fallthru
      _
    // Predicated region
    $region10: #{tpu_custom_call.1} parent=1 // pred_check
      _
    $region11: #{tpu_custom_call.1} parent=1 // pred_check_branch
      %46 = sbr.rel (0) target = $region13
    $region12: #{tpu_custom_call.1} parent=1 // pred_region
      _
    $region13: #{tpu_custom_call.1} parent=1 // pred_fallthru
      _
    // Predicated region
    $region14: #{tpu_custom_call.1} parent=1 // pred_check
      _
    $region15: #{tpu_custom_call.1} parent=1 // pred_check_branch
      %48 = sbr.rel (0) target = $region17
    $region16: #{tpu_custom_call.1} parent=1 // pred_region
      %s50 = ssub.s32 2048, 2048
      %51 = vsyncadd [#allocation6], %s50
      %s52 = sshll.u32 [#allocation7], 4
      %s53 = int_to_ptr.vmem [resolvable:$true] %s52
      %58 = dma.hbm_to_vmem [thread:$0]  %s3, 2048, %s53, [#allocation6], 128, 128, 8
    $region17: #{tpu_custom_call.1} parent=1 // pred_fallthru
      _
    // Predicated region
    $region18: #{tpu_custom_call.1} parent=1 // pred_check
      _
    $region19: #{tpu_custom_call.1} parent=1 // pred_check_branch
      %60 = sbr.rel (0) target = $region21
    $region20: #{tpu_custom_call.1} parent=1 // pred_region
      _
    $region21: #{tpu_custom_call.1} parent=1 // pred_fallthru
      _
    // Predicated region
    $region22: #{tpu_custom_call.1} parent=1 // pred_check
      _
    $region23: #{tpu_custom_call.1} parent=1 // pred_check_branch
      %62 = sbr.rel (0) target = $region25
    $region24: #{tpu_custom_call.1} parent=1 // pred_region
      %s64 = ssub.s32 8192, 8192
      %65 = vsyncadd [#allocation9], %s64
      %s66 = sshll.u32 [#allocation8], 4
      %s67 = int_to_ptr.vmem [resolvable:$true] %s66
      %72 = dma.hbm_to_vmem [thread:$0]  %s5, 8192, %s67, [#allocation9], 256, 256, 16
    $region25: #{tpu_custom_call.1} parent=1 // pred_fallthru
      _
    // Predicated region
    $region26: #{tpu_custom_call.1} parent=1 // pred_check
      _
    $region27: #{tpu_custom_call.1} parent=1 // pred_check_branch
      %74 = sbr.rel (0) target = $region29
    $region28: #{tpu_custom_call.1} parent=1 // pred_region
      _
    $region29: #{tpu_custom_call.1} parent=1 // pred_fallthru
      _
    // Predicated region
    $region30: #{tpu_custom_call.1} parent=1 // pred_check
      _
    $region31: #{tpu_custom_call.1} parent=1 // pred_check_branch
      %76 = sbr.rel (0) target = $region33
    $region32: #{tpu_custom_call.1} parent=1 // pred_region
      %s78 = ssub.s32 32768, 32768
      %79 = vsyncadd [#allocation9], %s78
      %s80 = sshll.u32 [#allocation10], 4
      %s81 = int_to_ptr.vmem [resolvable:$true] %s80
      %86 = dma.hbm_to_vmem [thread:$0]  %s7, 32768, %s81, [#allocation9], 512, 512, 32
    $region33: #{tpu_custom_call.1} parent=1 // pred_fallthru
      _
    // Predicated region
    $region34: #{tpu_custom_call.1} parent=1 // pred_check
      _
    $region35: #{tpu_custom_call.1} parent=1 // pred_check_branch
      %88 = sbr.rel (0) target = $region37
    $region36: #{tpu_custom_call.1} parent=1 // pred_region
      _
    $region37: #{tpu_custom_call.1} parent=1 // pred_fallthru
      _
    // Predicated region
    $region38: #{tpu_custom_call.1} parent=1 // pred_check
      _
    $region39: #{tpu_custom_call.1} parent=1 // pred_check_branch
      %90 = sbr.rel (0) target = $region41
    $region40: #{tpu_custom_call.1} parent=1 // pred_region
      %s92 = ssub.s32 8192, 8192
      %93 = vsyncadd [#allocation12], %s92
      %s94 = sshll.u32 [#allocation11], 4
      %s95 = int_to_ptr.vmem [resolvable:$true] %s94
      %100 = dma.hbm_to_vmem [thread:$0]  %s9, 8192, %s95, [#allocation12], 64, 64, 4
    $region41: #{tpu_custom_call.1} parent=1 // pred_fallthru
      _
    // Predicated region
    $region42: #{tpu_custom_call.1} parent=1 // pred_check
      _
    $region43: #{tpu_custom_call.1} parent=1 // pred_check_branch
      %102 = sbr.rel (0) target = $region45
    $region44: #{tpu_custom_call.1} parent=1 // pred_region
      _
    $region45: #{tpu_custom_call.1} parent=1 // pred_fallthru
      _
    // Predicated region
    $region46: #{tpu_custom_call.1} parent=1 // pred_check
      _
    $region47: #{tpu_custom_call.1} parent=1 // pred_check_branch
      %104 = sbr.rel (0) target = $region49
    $region48: #{tpu_custom_call.1} parent=1 // pred_region
      %105 = dma.done [#allocation3], 128
    $region49: #{tpu_custom_call.1} parent=1 // pred_fallthru
      _
    // Predicated region
    $region50: #{tpu_custom_call.1} parent=1 // pred_check
      _
    $region51: #{tpu_custom_call.1} parent=1 // pred_check_branch
      %107 = sbr.rel (0) target = $region53
    $region52: #{tpu_custom_call.1} parent=1 // pred_region
      %108 = dma.done [#allocation6], 256
    $region53: #{tpu_custom_call.1} parent=1 // pred_fallthru
      _
    // Predicated region
    $region54: #{tpu_custom_call.1} parent=1 // pred_check
      _
    $region55: #{tpu_custom_call.1} parent=1 // pred_check_branch
      %110 = sbr.rel (0) target = $region57
    $region56: #{tpu_custom_call.1} parent=1 // pred_region
      %111 = dma.done [#allocation6], 2048
    $region57: #{tpu_custom_call.1} parent=1 // pred_fallthru
      _
    // Predicated region
    $region58: #{tpu_custom_call.1} parent=1 // pred_check
      _
    $region59: #{tpu_custom_call.1} parent=1 // pred_check_branch
      %113 = sbr.rel (0) target = $region61
    $region60: #{tpu_custom_call.1} parent=1 // pred_region
      %114 = dma.done [#allocation9], 8192
    $region61: #{tpu_custom_call.1} parent=1 // pred_fallthru
      _
    // Predicated region
    $region62: #{tpu_custom_call.1} parent=1 // pred_check
      _
    $region63: #{tpu_custom_call.1} parent=1 // pred_check_branch
      %116 = sbr.rel (0) target = $region65
    $region64: #{tpu_custom_call.1} parent=1 // pred_region
      %117 = dma.done [#allocation9], 32768
    $region65: #{tpu_custom_call.1} parent=1 // pred_fallthru
      _
    // Predicated region
    $region66: #{tpu_custom_call.1} parent=1 // pred_check
      _
    $region67: #{tpu_custom_call.1} parent=1 // pred_check_branch
      %119 = sbr.rel (0) target = $region69
    $region68: #{tpu_custom_call.1} parent=1 // pred_region
      %120 = dma.done [#allocation12], 8192
    $region69: #{tpu_custom_call.1} parent=1 // pred_fallthru
      _
    %v122 = vld [vmem:[#allocation2] sm:$0xf]
    %v123 = vld [vmem:[#allocation2 + $0x4] sm:$0xf]
    %v124 = vld [vmem:[#allocation5] sm:$0xf]
    %v125 = vld [vmem:[#allocation5 + $0x4] sm:$0xf]
    %v126 = vld [vmem:[#allocation5 + $0x8] sm:$0xf]
    %v127 = vld [vmem:[#allocation5 + $0xc] sm:$0xf]
    %v128 = vld [vmem:[%s2] sm:$0x1]
    %v130 = vlaneseq
    %v131 = vshrl.u32 %v130, 7
    %v132 = vsub.s32 0, %v131
    %v133 = vrot.slane %v128, %v132
    %v137 = vunpack.c.l.b16 %v122
    %v138 = vunpack.c.l.b16 %v123
    %v139 = vpack.c.b16 %v138, %v137
    %v144 = vunpack.c.l.b16 %v124
    %v145 = vunpack.c.l.b16 %v125
    %v146 = vunpack.c.l.b16 %v126
    %v147 = vunpack.c.l.b16 %v127
    %v148 = vpack.c.b16 %v145, %v144
    %v149 = vpack.c.b16 %v147, %v146
    %vm152 = vcmask 261120
    %v154 = vsel %vm152, %v139, 0
    %156 = vmatprep.subr.bf16.mxu0 0
    %157 = vmatpush1.bf16.msra.mxu0 %v148
    %158 = vmatprep.subr.bf16.mxu0 0
    %159 = vmatpush1.bf16.msra.mxu0 %v149
    %160 = vmatprep.subr.bf16.mxu0 0
    %161 = vmatpush1.bf16.msra.mxu0 0
    %162 = vmatprep.subr.bf16.mxu0 0
    %163 = vmatpush1.bf16.msra.mxu0 0
    %164 = vmatprep.subr.bf16.mxu0 0
    %165 = vmatpush1.bf16.msra.mxu0 0
    %166 = vmatprep.subr.bf16.mxu0 0
    %167 = vmatpush1.bf16.msra.mxu0 0
    %168 = vmatprep.subr.bf16.mxu0 0
    %169 = vmatpush1.bf16.msra.mxu0 0
    %170 = vmatprep.subr.bf16.mxu0 0
    %171 = vmatpush1.bf16.msra.mxu0 0
    %172 = vmatprep.subr.bf16.mxu0 0
    %173 = vmatpush1.bf16.msra.mxu0 0
    %174 = vmatprep.subr.bf16.mxu0 0
    %175 = vmatpush1.bf16.msra.mxu0 0
    %176 = vmatprep.subr.bf16.mxu0 0
    %177 = vmatpush1.bf16.msra.mxu0 0
    %178 = vmatprep.subr.bf16.mxu0 0
    %179 = vmatpush1.bf16.msra.mxu0 0
    %180 = vmatprep.subr.bf16.mxu0 0
    %181 = vmatpush1.bf16.msra.mxu0 0
    %182 = vmatprep.subr.bf16.mxu0 0
    %183 = vmatpush1.bf16.msra.mxu0 0
    %184 = vmatprep.subr.bf16.mxu0 0
    %185 = vmatpush1.bf16.msra.mxu0 0
    %186 = vmatprep.subr.bf16.mxu0 0
    %187 = vmatpush1.bf16.msra.mxu0 0
    %188 = vmatprep.mubr.bf16.mxu0 0
    %189 = vmatmul.mubr.bf16.gmra.mrb[0].mxu0 %v154
    %v190 = vpop.f32.mrb[0].mxu0
    %v191 = vadd.f32 %v133, %v190
    %v192 = vpop.f32.mrb[0].mxu0
    %v193 = vpop.f32.mrb[0].mxu0
    %v194 = vadd.f32 %v133, %v193
    %v195 = vpop.f32.mrb[0].mxu0
    %196 = vdwg.mxu0
    %vm197 = vcmp.gt.f32.partialorder %v191, 0.0
    %vm198 = vcmp.gt.f32.partialorder %v194, 0.0
    %v199 = vmul.f32 %v191, 0.2
    %v200 = vmul.f32 %v194, 0.2
    %v201 = vsel %vm197, %v191, %v199
    %v202 = vsel %vm198, %v194, %v200
    %v203 = vpack.c.bf16 %v202, %v201
    %v204 = vld [vmem:[#allocation7] sm:$0xff]
    %v205 = vld [vmem:[#allocation7 + $0x8] sm:$0xff]
    %v206 = vld [vmem:[#allocation7 + $0x10] sm:$0xff]
    %v207 = vld [vmem:[#allocation7 + $0x18] sm:$0xff]
    %v208 = vld [vmem:[#allocation7 + $0x20] sm:$0xff]
    %v209 = vld [vmem:[#allocation7 + $0x28] sm:$0xff]
    %v210 = vld [vmem:[#allocation7 + $0x30] sm:$0xff]
    %v211 = vld [vmem:[#allocation7 + $0x38] sm:$0xff]
    %v212 = vld [vmem:[#allocation7 + $0x40] sm:$0xff]
    %v213 = vld [vmem:[#allocation7 + $0x48] sm:$0xff]
    %v214 = vld [vmem:[#allocation7 + $0x50] sm:$0xff]
    %v215 = vld [vmem:[#allocation7 + $0x58] sm:$0xff]
    %v216 = vld [vmem:[#allocation7 + $0x60] sm:$0xff]
    %v217 = vld [vmem:[#allocation7 + $0x68] sm:$0xff]
    %v218 = vld [vmem:[#allocation7 + $0x70] sm:$0xff]
    %v219 = vld [vmem:[#allocation7 + $0x78] sm:$0xff]
    %v220 = vld [vmem:[%s4] sm:$0x3]
    %v222 = vlaneseq
    %v223 = vshrl.u32 %v222, 7
    %v224 = vsub.s32 0, %v223
    %v225 = vrot.slane %v220, %v224
    %v226 = vlaneseq
    %v227 = vshrl.u32 %v226, 7
    %v228 = vsub.s32 1, %v227
    %v229 = vrot.slane %v220, %v228
    %v248 = vunpack.c.l.b16 %v204
    %v249 = vunpack.c.h.b16 %v204
    %v250 = vunpack.c.l.b16 %v205
    %v251 = vunpack.c.h.b16 %v205
    %v252 = vunpack.c.l.b16 %v206
    %v253 = vunpack.c.h.b16 %v206
    %v254 = vunpack.c.l.b16 %v207
    %v255 = vunpack.c.h.b16 %v207
    %v256 = vunpack.c.l.b16 %v208
    %v257 = vunpack.c.h.b16 %v208
    %v258 = vunpack.c.l.b16 %v209
    %v259 = vunpack.c.h.b16 %v209
    %v260 = vunpack.c.l.b16 %v210
    %v261 = vunpack.c.h.b16 %v210
    %v262 = vunpack.c.l.b16 %v211
    %v263 = vunpack.c.h.b16 %v211
    %v264 = vunpack.c.l.b16 %v212
    %v265 = vunpack.c.h.b16 %v212
    %v266 = vunpack.c.l.b16 %v213
    %v267 = vunpack.c.h.b16 %v213
    %v268 = vunpack.c.l.b16 %v214
    %v269 = vunpack.c.h.b16 %v214
    %v270 = vunpack.c.l.b16 %v215
    %v271 = vunpack.c.h.b16 %v215
    %v272 = vunpack.c.l.b16 %v216
    %v273 = vunpack.c.h.b16 %v216
    %v274 = vunpack.c.l.b16 %v217
    %v275 = vunpack.c.h.b16 %v217
    %v276 = vunpack.c.l.b16 %v218
    %v277 = vunpack.c.h.b16 %v218
    %v278 = vunpack.c.l.b16 %v219
    %v279 = vunpack.c.h.b16 %v219
    %v280 = vpack.c.b16 %v250, %v248
    %v281 = vpack.c.b16 %v251, %v249
    %v282 = vpack.c.b16 %v254, %v252
    %v283 = vpack.c.b16 %v255, %v253
    %v284 = vpack.c.b16 %v258, %v256
    %v285 = vpack.c.b16 %v259, %v257
    %v286 = vpack.c.b16 %v262, %v260
    %v287 = vpack.c.b16 %v263, %v261
    %v288 = vpack.c.b16 %v266, %v264
    %v289 = vpack.c.b16 %v267, %v265
    %v290 = vpack.c.b16 %v270, %v268
    %v291 = vpack.c.b16 %v271, %v269
    %v292 = vpack.c.b16 %v274, %v272
    %v293 = vpack.c.b16 %v275, %v273
    %v294 = vpack.c.b16 %v278, %v276
    %v295 = vpack.c.b16 %v279, %v277
    %312 = vmatprep.subr.bf16.mxu0 %v281
    %313 = vmatpush1.bf16.msra.mxu0 %v280
    %314 = vmatprep.subr.bf16.mxu0 %v283
    %315 = vmatpush1.bf16.msra.mxu0 %v282
    %316 = vmatprep.subr.bf16.mxu0 %v285
    %317 = vmatpush1.bf16.msra.mxu0 %v284
    %318 = vmatprep.subr.bf16.mxu0 %v287
    %319 = vmatpush1.bf16.msra.mxu0 %v286
    %320 = vmatprep.subr.bf16.mxu0 %v289
    %321 = vmatpush1.bf16.msra.mxu0 %v288
    %322 = vmatprep.subr.bf16.mxu0 %v291
    %323 = vmatpush1.bf16.msra.mxu0 %v290
    %324 = vmatprep.subr.bf16.mxu0 %v293
    %325 = vmatpush1.bf16.msra.mxu0 %v292
    %326 = vmatprep.subr.bf16.mxu0 %v295
    %327 = vmatpush1.bf16.msra.mxu0 %v294
    %328 = vmatprep.subr.bf16.mxu0 0
    %329 = vmatpush1.bf16.msra.mxu0 0
    %330 = vmatprep.subr.bf16.mxu0 0
    %331 = vmatpush1.bf16.msra.mxu0 0
    %332 = vmatprep.subr.bf16.mxu0 0
    %333 = vmatpush1.bf16.msra.mxu0 0
    %334 = vmatprep.subr.bf16.mxu0 0
    %335 = vmatpush1.bf16.msra.mxu0 0
    %336 = vmatprep.subr.bf16.mxu0 0
    %337 = vmatpush1.bf16.msra.mxu0 0
    %338 = vmatprep.subr.bf16.mxu0 0
    %339 = vmatpush1.bf16.msra.mxu0 0
    %340 = vmatprep.subr.bf16.mxu0 0
    %341 = vmatpush1.bf16.msra.mxu0 0
    %342 = vmatprep.subr.bf16.mxu0 0
    %343 = vmatpush1.bf16.msra.mxu0 0
    %344 = vmatprep.mubr.bf16.mxu0 0
    %345 = vmatmul.mubr.bf16.gmra.mrb[0].mxu0 %v203
    %v346 = vpop.f32.mrb[0].mxu0
    %v347 = vadd.f32 %v225, %v346
    %v348 = vpop.f32.mrb[0].mxu0
    %v349 = vadd.f32 %v229, %v348
    %v350 = vpop.f32.mrb[0].mxu0
    %v351 = vadd.f32 %v225, %v350
    %v352 = vpop.f32.mrb[0].mxu0
    %v353 = vadd.f32 %v229, %v352
    %354 = vdwg.mxu0
    %vm355 = vcmp.gt.f32.partialorder %v347, 0.0
    %vm356 = vcmp.gt.f32.partialorder %v349, 0.0
    %vm357 = vcmp.gt.f32.partialorder %v351, 0.0
    %vm358 = vcmp.gt.f32.partialorder %v353, 0.0
    %v359 = vmul.f32 %v347, 0.2
    %v360 = vmul.f32 %v349, 0.2
    %v361 = vmul.f32 %v351, 0.2
    %v362 = vmul.f32 %v353, 0.2
    %v363 = vsel %vm355, %v347, %v359
    %v364 = vsel %vm356, %v349, %v360
    %v365 = vsel %vm357, %v351, %v361
    %v366 = vsel %vm358, %v353, %v362
    %v367 = vpack.c.bf16 %v365, %v363
    %v368 = vpack.c.bf16 %v366, %v364
    %v369 = vld [vmem:[#allocation8] sm:$0xff]
    %v370 = vld [vmem:[#allocation8 + $0x8] sm:$0xff]
    %v371 = vld [vmem:[#allocation8 + $0x10] sm:$0xff]
    %v372 = vld [vmem:[#allocation8 + $0x18] sm:$0xff]
    %v373 = vld [vmem:[#allocation8 + $0x20] sm:$0xff]
    %v374 = vld [vmem:[#allocation8 + $0x28] sm:$0xff]
    %v375 = vld [vmem:[#allocation8 + $0x30] sm:$0xff]
    %v376 = vld [vmem:[#allocation8 + $0x38] sm:$0xff]
    %v377 = vld [vmem:[#allocation8 + $0x40] sm:$0xff]
    %v378 = vld [vmem:[#allocation8 + $0x48] sm:$0xff]
    %v379 = vld [vmem:[#allocation8 + $0x50] sm:$0xff]
    %v380 = vld [vmem:[#allocation8 + $0x58] sm:$0xff]
    %v381 = vld [vmem:[#allocation8 + $0x60] sm:$0xff]
    %v382 = vld [vmem:[#allocation8 + $0x68] sm:$0xff]
    %v383 = vld [vmem:[#allocation8 + $0x70] sm:$0xff]
    %v384 = vld [vmem:[#allocation8 + $0x78] sm:$0xff]
    %v385 = vld [vmem:[#allocation8 + $0x80] sm:$0xff]
    %v386 = vld [vmem:[#allocation8 + $0x88] sm:$0xff]
    %v387 = vld [vmem:[#allocation8 + $0x90] sm:$0xff]
    %v388 = vld [vmem:[#allocation8 + $0x98] sm:$0xff]
    %v389 = vld [vmem:[#allocation8 + $0xa0] sm:$0xff]
    %v390 = vld [vmem:[#allocation8 + $0xa8] sm:$0xff]
    %v391 = vld [vmem:[#allocation8 + $0xb0] sm:$0xff]
    %v392 = vld [vmem:[#allocation8 + $0xb8] sm:$0xff]
    %v393 = vld [vmem:[#allocation8 + $0xc0] sm:$0xff]
    %v394 = vld [vmem:[#allocation8 + $0xc8] sm:$0xff]
    %v395 = vld [vmem:[#allocation8 + $0xd0] sm:$0xff]
    %v396 = vld [vmem:[#allocation8 + $0xd8] sm:$0xff]
    %v397 = vld [vmem:[#allocation8 + $0xe0] sm:$0xff]
    %v398 = vld [vmem:[#allocation8 + $0xe8] sm:$0xff]
    %v399 = vld [vmem:[#allocation8 + $0xf0] sm:$0xff]
    %v400 = vld [vmem:[#allocation8 + $0xf8] sm:$0xff]
    %v401 = vld [vmem:[#allocation8 + $0x100] sm:$0xff]
    %v402 = vld [vmem:[#allocation8 + $0x108] sm:$0xff]
    %v403 = vld [vmem:[#allocation8 + $0x110] sm:$0xff]
    %v404 = vld [vmem:[#allocation8 + $0x118] sm:$0xff]
    %v405 = vld [vmem:[#allocation8 + $0x120] sm:$0xff]
    %v406 = vld [vmem:[#allocation8 + $0x128] sm:$0xff]
    %v407 = vld [vmem:[#allocation8 + $0x130] sm:$0xff]
    %v408 = vld [vmem:[#allocation8 + $0x138] sm:$0xff]
    %v409 = vld [vmem:[#allocation8 + $0x140] sm:$0xff]
    %v410 = vld [vmem:[#allocation8 + $0x148] sm:$0xff]
    %v411 = vld [vmem:[#allocation8 + $0x150] sm:$0xff]
    %v412 = vld [vmem:[#allocation8 + $0x158] sm:$0xff]
    %v413 = vld [vmem:[#allocation8 + $0x160] sm:$0xff]
    %v414 = vld [vmem:[#allocation8 + $0x168] sm:$0xff]
    %v415 = vld [vmem:[#allocation8 + $0x170] sm:$0xff]
    %v416 = vld [vmem:[#allocation8 + $0x178] sm:$0xff]
    %v417 = vld [vmem:[#allocation8 + $0x180] sm:$0xff]
    %v418 = vld [vmem:[#allocation8 + $0x188] sm:$0xff]
    %v419 = vld [vmem:[#allocation8 + $0x190] sm:$0xff]
    %v420 = vld [vmem:[#allocation8 + $0x198] sm:$0xff]
    %v421 = vld [vmem:[#allocation8 + $0x1a0] sm:$0xff]
    %v422 = vld [vmem:[#allocation8 + $0x1a8] sm:$0xff]
    %v423 = vld [vmem:[#allocation8 + $0x1b0] sm:$0xff]
    %v424 = vld [vmem:[#allocation8 + $0x1b8] sm:$0xff]
    %v425 = vld [vmem:[#allocation8 + $0x1c0] sm:$0xff]
    %v426 = vld [vmem:[#allocation8 + $0x1c8] sm:$0xff]
    %v427 = vld [vmem:[#allocation8 + $0x1d0] sm:$0xff]
    %v428 = vld [vmem:[#allocation8 + $0x1d8] sm:$0xff]
    %v429 = vld [vmem:[#allocation8 + $0x1e0] sm:$0xff]
    %v430 = vld [vmem:[#allocation8 + $0x1e8] sm:$0xff]
    %v431 = vld [vmem:[#allocation8 + $0x1f0] sm:$0xff]
    %v432 = vld [vmem:[#allocation8 + $0x1f8] sm:$0xff]
    %v433 = vld [vmem:[%s6] sm:$0xf]
    %v435 = vlaneseq
    %v436 = vshrl.u32 %v435, 7
    %v437 = vsub.s32 0, %v436
    %v438 = vrot.slane %v433, %v437
    %v439 = vlaneseq
    %v440 = vshrl.u32 %v439, 7
    %v441 = vsub.s32 1, %v440
    %v442 = vrot.slane %v433, %v441
    %v443 = vlaneseq
    %v444 = vshrl.u32 %v443, 7
    %v445 = vsub.s32 2, %v444
    %v446 = vrot.slane %v433, %v445
    %v447 = vlaneseq
    %v448 = vshrl.u32 %v447, 7
    %v449 = vsub.s32 3, %v448
    %v450 = vrot.slane %v433, %v449
    %v519 = vunpack.c.l.b16 %v369
    %v520 = vunpack.c.h.b16 %v369
    %v521 = vunpack.c.l.b16 %v370
    %v522 = vunpack.c.h.b16 %v370
    %v523 = vunpack.c.l.b16 %v371
    %v524 = vunpack.c.h.b16 %v371
    %v525 = vunpack.c.l.b16 %v372
    %v526 = vunpack.c.h.b16 %v372
    %v527 = vunpack.c.l.b16 %v373
    %v528 = vunpack.c.h.b16 %v373
    %v529 = vunpack.c.l.b16 %v374
    %v530 = vunpack.c.h.b16 %v374
    %v531 = vunpack.c.l.b16 %v375
    %v532 = vunpack.c.h.b16 %v375
    %v533 = vunpack.c.l.b16 %v376
    %v534 = vunpack.c.h.b16 %v376
    %v535 = vunpack.c.l.b16 %v377
    %v536 = vunpack.c.h.b16 %v377
    %v537 = vunpack.c.l.b16 %v378
    %v538 = vunpack.c.h.b16 %v378
    %v539 = vunpack.c.l.b16 %v379
    %v540 = vunpack.c.h.b16 %v379
    %v541 = vunpack.c.l.b16 %v380
    %v542 = vunpack.c.h.b16 %v380
    %v543 = vunpack.c.l.b16 %v381
    %v544 = vunpack.c.h.b16 %v381
    %v545 = vunpack.c.l.b16 %v382
    %v546 = vunpack.c.h.b16 %v382
    %v547 = vunpack.c.l.b16 %v383
    %v548 = vunpack.c.h.b16 %v383
    %v549 = vunpack.c.l.b16 %v384
    %v550 = vunpack.c.h.b16 %v384
    %v551 = vunpack.c.l.b16 %v385
    %v552 = vunpack.c.h.b16 %v385
    %v553 = vunpack.c.l.b16 %v386
    %v554 = vunpack.c.h.b16 %v386
    %v555 = vunpack.c.l.b16 %v387
    %v556 = vunpack.c.h.b16 %v387
    %v557 = vunpack.c.l.b16 %v388
    %v558 = vunpack.c.h.b16 %v388
    %v559 = vunpack.c.l.b16 %v389
    %v560 = vunpack.c.h.b16 %v389
    %v561 = vunpack.c.l.b16 %v390
    %v562 = vunpack.c.h.b16 %v390
    %v563 = vunpack.c.l.b16 %v391
    %v564 = vunpack.c.h.b16 %v391
    %v565 = vunpack.c.l.b16 %v392
    %v566 = vunpack.c.h.b16 %v392
    %v567 = vunpack.c.l.b16 %v393
    %v568 = vunpack.c.h.b16 %v393
    %v569 = vunpack.c.l.b16 %v394
    %v570 = vunpack.c.h.b16 %v394
    %v571 = vunpack.c.l.b16 %v395
    %v572 = vunpack.c.h.b16 %v395
    %v573 = vunpack.c.l.b16 %v396
    %v574 = vunpack.c.h.b16 %v396
    %v575 = vunpack.c.l.b16 %v397
    %v576 = vunpack.c.h.b16 %v397
    %v577 = vunpack.c.l.b16 %v398
    %v578 = vunpack.c.h.b16 %v398
    %v579 = vunpack.c.l.b16 %v399
    %v580 = vunpack.c.h.b16 %v399
    %v581 = vunpack.c.l.b16 %v400
    %v582 = vunpack.c.h.b16 %v400
    %v583 = vunpack.c.l.b16 %v401
    %v584 = vunpack.c.h.b16 %v401
    %v585 = vunpack.c.l.b16 %v402
    %v586 = vunpack.c.h.b16 %v402
    %v587 = vunpack.c.l.b16 %v403
    %v588 = vunpack.c.h.b16 %v403
    %v589 = vunpack.c.l.b16 %v404
    %v590 = vunpack.c.h.b16 %v404
    %v591 = vunpack.c.l.b16 %v405
    %v592 = vunpack.c.h.b16 %v405
    %v593 = vunpack.c.l.b16 %v406
    %v594 = vunpack.c.h.b16 %v406
    %v595 = vunpack.c.l.b16 %v407
    %v596 = vunpack.c.h.b16 %v407
    %v597 = vunpack.c.l.b16 %v408
    %v598 = vunpack.c.h.b16 %v408
    %v599 = vunpack.c.l.b16 %v409
    %v600 = vunpack.c.h.b16 %v409
    %v601 = vunpack.c.l.b16 %v410
    %v602 = vunpack.c.h.b16 %v410
    %v603 = vunpack.c.l.b16 %v411
    %v604 = vunpack.c.h.b16 %v411
    %v605 = vunpack.c.l.b16 %v412
    %v606 = vunpack.c.h.b16 %v412
    %v607 = vunpack.c.l.b16 %v413
    %v608 = vunpack.c.h.b16 %v413
    %v609 = vunpack.c.l.b16 %v414
    %v610 = vunpack.c.h.b16 %v414
    %v611 = vunpack.c.l.b16 %v415
    %v612 = vunpack.c.h.b16 %v415
    %v613 = vunpack.c.l.b16 %v416
    %v614 = vunpack.c.h.b16 %v416
    %v615 = vunpack.c.l.b16 %v417
    %v616 = vunpack.c.h.b16 %v417
    %v617 = vunpack.c.l.b16 %v418
    %v618 = vunpack.c.h.b16 %v418
    %v619 = vunpack.c.l.b16 %v419
    %v620 = vunpack.c.h.b16 %v419
    %v621 = vunpack.c.l.b16 %v420
    %v622 = vunpack.c.h.b16 %v420
    %v623 = vunpack.c.l.b16 %v421
    %v624 = vunpack.c.h.b16 %v421
    %v625 = vunpack.c.l.b16 %v422
    %v626 = vunpack.c.h.b16 %v422
    %v627 = vunpack.c.l.b16 %v423
    %v628 = vunpack.c.h.b16 %v423
    %v629 = vunpack.c.l.b16 %v424
    %v630 = vunpack.c.h.b16 %v424
    %v631 = vunpack.c.l.b16 %v425
    %v632 = vunpack.c.h.b16 %v425
    %v633 = vunpack.c.l.b16 %v426
    %v634 = vunpack.c.h.b16 %v426
    %v635 = vunpack.c.l.b16 %v427
    %v636 = vunpack.c.h.b16 %v427
    %v637 = vunpack.c.l.b16 %v428
    %v638 = vunpack.c.h.b16 %v428
    %v639 = vunpack.c.l.b16 %v429
    %v640 = vunpack.c.h.b16 %v429
    %v641 = vunpack.c.l.b16 %v430
    %v642 = vunpack.c.h.b16 %v430
    %v643 = vunpack.c.l.b16 %v431
    %v644 = vunpack.c.h.b16 %v431
    %v645 = vunpack.c.l.b16 %v432
    %v646 = vunpack.c.h.b16 %v432
    %v647 = vpack.c.b16 %v523, %v519
    %v648 = vpack.c.b16 %v524, %v520
    %v649 = vpack.c.b16 %v525, %v521
    %v650 = vpack.c.b16 %v526, %v522
    %v651 = vpack.c.b16 %v531, %v527
    %v652 = vpack.c.b16 %v532, %v528
    %v653 = vpack.c.b16 %v533, %v529
    %v654 = vpack.c.b16 %v534, %v530
    %v655 = vpack.c.b16 %v539, %v535
    %v656 = vpack.c.b16 %v540, %v536
    %v657 = vpack.c.b16 %v541, %v537
    %v658 = vpack.c.b16 %v542, %v538
    %v659 = vpack.c.b16 %v547, %v543
    %v660 = vpack.c.b16 %v548, %v544
    %v661 = vpack.c.b16 %v549, %v545
    %v662 = vpack.c.b16 %v550, %v546
    %v663 = vpack.c.b16 %v555, %v551
    %v664 = vpack.c.b16 %v556, %v552
    %v665 = vpack.c.b16 %v557, %v553
    %v666 = vpack.c.b16 %v558, %v554
    %v667 = vpack.c.b16 %v563, %v559
    %v668 = vpack.c.b16 %v564, %v560
    %v669 = vpack.c.b16 %v565, %v561
    %v670 = vpack.c.b16 %v566, %v562
    %v671 = vpack.c.b16 %v571, %v567
    %v672 = vpack.c.b16 %v572, %v568
    %v673 = vpack.c.b16 %v573, %v569
    %v674 = vpack.c.b16 %v574, %v570
    %v675 = vpack.c.b16 %v579, %v575
    %v676 = vpack.c.b16 %v580, %v576
    %v677 = vpack.c.b16 %v581, %v577
    %v678 = vpack.c.b16 %v582, %v578
    %v679 = vpack.c.b16 %v587, %v583
    %v680 = vpack.c.b16 %v588, %v584
    %v681 = vpack.c.b16 %v589, %v585
    %v682 = vpack.c.b16 %v590, %v586
    %v683 = vpack.c.b16 %v595, %v591
    %v684 = vpack.c.b16 %v596, %v592
    %v685 = vpack.c.b16 %v597, %v593
    %v686 = vpack.c.b16 %v598, %v594
    %v687 = vpack.c.b16 %v603, %v599
    %v688 = vpack.c.b16 %v604, %v600
    %v689 = vpack.c.b16 %v605, %v601
    %v690 = vpack.c.b16 %v606, %v602
    %v691 = vpack.c.b16 %v611, %v607
    %v692 = vpack.c.b16 %v612, %v608
    %v693 = vpack.c.b16 %v613, %v609
    %v694 = vpack.c.b16 %v614, %v610
    %v695 = vpack.c.b16 %v619, %v615
    %v696 = vpack.c.b16 %v620, %v616
    %v697 = vpack.c.b16 %v621, %v617
    %v698 = vpack.c.b16 %v622, %v618
    %v699 = vpack.c.b16 %v627, %v623
    %v700 = vpack.c.b16 %v628, %v624
    %v701 = vpack.c.b16 %v629, %v625
    %v702 = vpack.c.b16 %v630, %v626
    %v703 = vpack.c.b16 %v635, %v631
    %v704 = vpack.c.b16 %v636, %v632
    %v705 = vpack.c.b16 %v637, %v633
    %v706 = vpack.c.b16 %v638, %v634
    %v707 = vpack.c.b16 %v643, %v639
    %v708 = vpack.c.b16 %v644, %v640
    %v709 = vpack.c.b16 %v645, %v641
    %v710 = vpack.c.b16 %v646, %v642
    %775 = vmatprep.subr.bf16.mxu0 %v648
    %776 = vmatpush1.bf16.msra.mxu0 %v647
    %777 = vmatprep.subr.bf16.mxu0 %v652
    %778 = vmatpush1.bf16.msra.mxu0 %v651
    %779 = vmatprep.subr.bf16.mxu0 %v656
    %780 = vmatpush1.bf16.msra.mxu0 %v655
    %781 = vmatprep.subr.bf16.mxu0 %v660
    %782 = vmatpush1.bf16.msra.mxu0 %v659
    %783 = vmatprep.subr.bf16.mxu0 %v664
    %784 = vmatpush1.bf16.msra.mxu0 %v663
    %785 = vmatprep.subr.bf16.mxu0 %v668
    %786 = vmatpush1.bf16.msra.mxu0 %v667
    %787 = vmatprep.subr.bf16.mxu0 %v672
    %788 = vmatpush1.bf16.msra.mxu0 %v671
    %789 = vmatprep.subr.bf16.mxu0 %v676
    %790 = vmatpush1.bf16.msra.mxu0 %v675
    %791 = vmatprep.subr.bf16.mxu0 %v680
    %792 = vmatpush1.bf16.msra.mxu0 %v679
    %793 = vmatprep.subr.bf16.mxu0 %v684
    %794 = vmatpush1.bf16.msra.mxu0 %v683
    %795 = vmatprep.subr.bf16.mxu0 %v688
    %796 = vmatpush1.bf16.msra.mxu0 %v687
    %797 = vmatprep.subr.bf16.mxu0 %v692
    %798 = vmatpush1.bf16.msra.mxu0 %v691
    %799 = vmatprep.subr.bf16.mxu0 %v696
    %800 = vmatpush1.bf16.msra.mxu0 %v695
    %801 = vmatprep.subr.bf16.mxu0 %v700
    %802 = vmatpush1.bf16.msra.mxu0 %v699
    %803 = vmatprep.subr.bf16.mxu0 %v704
    %804 = vmatpush1.bf16.msra.mxu0 %v703
    %805 = vmatprep.subr.bf16.mxu0 %v708
    %806 = vmatpush1.bf16.msra.mxu0 %v707
    %807 = vmatprep.mubr.bf16.mxu0 %v368
    %808 = vmatmul.mubr.bf16.gmra.mrb[0].mxu0 %v367
    %v809 = vpop.f32.mrb[0].mxu0
    %v810 = vadd.f32 %v438, %v809
    %v811 = vpop.f32.mrb[0].mxu0
    %v812 = vadd.f32 %v442, %v811
    %v813 = vpop.f32.mrb[0].mxu0
    %v814 = vadd.f32 %v438, %v813
    %v815 = vpop.f32.mrb[0].mxu0
    %v816 = vadd.f32 %v442, %v815
    %817 = vdwg.mxu0
    %818 = vmatprep.subr.bf16.mxu0 %v650
    %819 = vmatpush1.bf16.msra.mxu0 %v649
    %820 = vmatprep.subr.bf16.mxu0 %v654
    %821 = vmatpush1.bf16.msra.mxu0 %v653
    %822 = vmatprep.subr.bf16.mxu0 %v658
    %823 = vmatpush1.bf16.msra.mxu0 %v657
    %824 = vmatprep.subr.bf16.mxu0 %v662
    %825 = vmatpush1.bf16.msra.mxu0 %v661
    %826 = vmatprep.subr.bf16.mxu0 %v666
    %827 = vmatpush1.bf16.msra.mxu0 %v665
    %828 = vmatprep.subr.bf16.mxu0 %v670
    %829 = vmatpush1.bf16.msra.mxu0 %v669
    %830 = vmatprep.subr.bf16.mxu0 %v674
    %831 = vmatpush1.bf16.msra.mxu0 %v673
    %832 = vmatprep.subr.bf16.mxu0 %v678
    %833 = vmatpush1.bf16.msra.mxu0 %v677
    %834 = vmatprep.subr.bf16.mxu0 %v682
    %835 = vmatpush1.bf16.msra.mxu0 %v681
    %836 = vmatprep.subr.bf16.mxu0 %v686
    %837 = vmatpush1.bf16.msra.mxu0 %v685
    %838 = vmatprep.subr.bf16.mxu0 %v690
    %839 = vmatpush1.bf16.msra.mxu0 %v689
    %840 = vmatprep.subr.bf16.mxu0 %v694
    %841 = vmatpush1.bf16.msra.mxu0 %v693
    %842 = vmatprep.subr.bf16.mxu0 %v698
    %843 = vmatpush1.bf16.msra.mxu0 %v697
    %844 = vmatprep.subr.bf16.mxu0 %v702
    %845 = vmatpush1.bf16.msra.mxu0 %v701
    %846 = vmatprep.subr.bf16.mxu0 %v706
    %847 = vmatpush1.bf16.msra.mxu0 %v705
    %848 = vmatprep.subr.bf16.mxu0 %v710
    %849 = vmatpush1.bf16.msra.mxu0 %v709
    %850 = vmatprep.mubr.bf16.mxu0 %v368
    %851 = vmatmul.mubr.bf16.gmra.mrb[0].mxu0 %v367
    %v852 = vpop.f32.mrb[0].mxu0
    %v853 = vadd.f32 %v446, %v852
    %v854 = vpop.f32.mrb[0].mxu0
    %v855 = vadd.f32 %v450, %v854
    %v856 = vpop.f32.mrb[0].mxu0
    %v857 = vadd.f32 %v446, %v856
    %v858 = vpop.f32.mrb[0].mxu0
    %v859 = vadd.f32 %v450, %v858
    %860 = vdwg.mxu0
    %vm861 = vcmp.gt.f32.partialorder %v810, 0.0
    %vm862 = vcmp.gt.f32.partialorder %v812, 0.0
    %vm863 = vcmp.gt.f32.partialorder %v853, 0.0
    %vm864 = vcmp.gt.f32.partialorder %v855, 0.0
    %vm865 = vcmp.gt.f32.partialorder %v814, 0.0
    %vm866 = vcmp.gt.f32.partialorder %v816, 0.0
    %vm867 = vcmp.gt.f32.partialorder %v857, 0.0
    %vm868 = vcmp.gt.f32.partialorder %v859, 0.0
    %v869 = vmul.f32 %v810, 0.2
    %v870 = vmul.f32 %v812, 0.2
    %v871 = vmul.f32 %v853, 0.2
    %v872 = vmul.f32 %v855, 0.2
    %v873 = vmul.f32 %v814, 0.2
    %v874 = vmul.f32 %v816, 0.2
    %v875 = vmul.f32 %v857, 0.2
    %v876 = vmul.f32 %v859, 0.2
    %v877 = vsel %vm861, %v810, %v869
    %v878 = vsel %vm862, %v812, %v870
    %v879 = vsel %vm863, %v853, %v871
    %v880 = vsel %vm864, %v855, %v872
    %v881 = vsel %vm865, %v814, %v873
    %v882 = vsel %vm866, %v816, %v874
    %v883 = vsel %vm867, %v857, %v875
    %v884 = vsel %vm868, %v859, %v876
    %v885 = vpack.c.bf16 %v881, %v877
    %v886 = vpack.c.bf16 %v882, %v878
    %v887 = vpack.c.bf16 %v883, %v879
    %v888 = vpack.c.bf16 %v884, %v880
    %v889 = vld [vmem:[#allocation10] sm:$0xff]
    %v890 = vld [vmem:[#allocation10 + $0x8] sm:$0xff]
    %v891 = vld [vmem:[#allocation10 + $0x10] sm:$0xff]
    %v892 = vld [vmem:[#allocation10 + $0x18] sm:$0xff]
    %v893 = vld [vmem:[#allocation10 + $0x20] sm:$0xff]
    %v894 = vld [vmem:[#allocation10 + $0x28] sm:$0xff]
    %v895 = vld [vmem:[#allocation10 + $0x30] sm:$0xff]
    %v896 = vld [vmem:[#allocation10 + $0x38] sm:$0xff]
    %v897 = vld [vmem:[#allocation10 + $0x40] sm:$0xff]
    %v898 = vld [vmem:[#allocation10 + $0x48] sm:$0xff]
    %v899 = vld [vmem:[#allocation10 + $0x50] sm:$0xff]
    %v900 = vld [vmem:[#allocation10 + $0x58] sm:$0xff]
    %v901 = vld [vmem:[#allocation10 + $0x60] sm:$0xff]
    %v902 = vld [vmem:[#allocation10 + $0x68] sm:$0xff]
    %v903 = vld [vmem:[#allocation10 + $0x70] sm:$0xff]
    %v904 = vld [vmem:[#allocation10 + $0x78] sm:$0xff]
    %v905 = vld [vmem:[#allocation10 + $0x80] sm:$0xff]
    %v906 = vld [vmem:[#allocation10 + $0x88] sm:$0xff]
    %v907 = vld [vmem:[#allocation10 + $0x90] sm:$0xff]
    %v908 = vld [vmem:[#allocation10 + $0x98] sm:$0xff]
    %v909 = vld [vmem:[#allocation10 + $0xa0] sm:$0xff]
    %v910 = vld [vmem:[#allocation10 + $0xa8] sm:$0xff]
    %v911 = vld [vmem:[#allocation10 + $0xb0] sm:$0xff]
    %v912 = vld [vmem:[#allocation10 + $0xb8] sm:$0xff]
    %v913 = vld [vmem:[#allocation10 + $0xc0] sm:$0xff]
    %v914 = vld [vmem:[#allocation10 + $0xc8] sm:$0xff]
    %v915 = vld [vmem:[#allocation10 + $0xd0] sm:$0xff]
    %v916 = vld [vmem:[#allocation10 + $0xd8] sm:$0xff]
    %v917 = vld [vmem:[#allocation10 + $0xe0] sm:$0xff]
    %v918 = vld [vmem:[#allocation10 + $0xe8] sm:$0xff]
    %v919 = vld [vmem:[#allocation10 + $0xf0] sm:$0xff]
    %v920 = vld [vmem:[#allocation10 + $0xf8] sm:$0xff]
    %v921 = vld [vmem:[#allocation10 + $0x100] sm:$0xff]
    %v922 = vld [vmem:[#allocation10 + $0x108] sm:$0xff]
    %v923 = vld [vmem:[#allocation10 + $0x110] sm:$0xff]
    %v924 = vld [vmem:[#allocation10 + $0x118] sm:$0xff]
    %v925 = vld [vmem:[#allocation10 + $0x120] sm:$0xff]
    %v926 = vld [vmem:[#allocation10 + $0x128] sm:$0xff]
    %v927 = vld [vmem:[#allocation10 + $0x130] sm:$0xff]
    %v928 = vld [vmem:[#allocation10 + $0x138] sm:$0xff]
    %v929 = vld [vmem:[#allocation10 + $0x140] sm:$0xff]
    %v930 = vld [vmem:[#allocation10 + $0x148] sm:$0xff]
    %v931 = vld [vmem:[#allocation10 + $0x150] sm:$0xff]
    %v932 = vld [vmem:[#allocation10 + $0x158] sm:$0xff]
    %v933 = vld [vmem:[#allocation10 + $0x160] sm:$0xff]
    %v934 = vld [vmem:[#allocation10 + $0x168] sm:$0xff]
    %v935 = vld [vmem:[#allocation10 + $0x170] sm:$0xff]
    %v936 = vld [vmem:[#allocation10 + $0x178] sm:$0xff]
    %v937 = vld [vmem:[#allocation10 + $0x180] sm:$0xff]
    %v938 = vld [vmem:[#allocation10 + $0x188] sm:$0xff]
    %v939 = vld [vmem:[#allocation10 + $0x190] sm:$0xff]
    %v940 = vld [vmem:[#allocation10 + $0x198] sm:$0xff]
    %v941 = vld [vmem:[#allocation10 + $0x1a0] sm:$0xff]
    %v942 = vld [vmem:[#allocation10 + $0x1a8] sm:$0xff]
    %v943 = vld [vmem:[#allocation10 + $0x1b0] sm:$0xff]
    %v944 = vld [vmem:[#allocation10 + $0x1b8] sm:$0xff]
    %v945 = vld [vmem:[#allocation10 + $0x1c0] sm:$0xff]
    %v946 = vld [vmem:[#allocation10 + $0x1c8] sm:$0xff]
    %v947 = vld [vmem:[#allocation10 + $0x1d0] sm:$0xff]
    %v948 = vld [vmem:[#allocation10 + $0x1d8] sm:$0xff]
    %v949 = vld [vmem:[#allocation10 + $0x1e0] sm:$0xff]
    %v950 = vld [vmem:[#allocation10 + $0x1e8] sm:$0xff]
    %v951 = vld [vmem:[#allocation10 + $0x1f0] sm:$0xff]
    %v952 = vld [vmem:[#allocation10 + $0x1f8] sm:$0xff]
    %v953 = vld [vmem:[#allocation10 + $0x200] sm:$0xff]
    %v954 = vld [vmem:[#allocation10 + $0x208] sm:$0xff]
    %v955 = vld [vmem:[#allocation10 + $0x210] sm:$0xff]
    %v956 = vld [vmem:[#allocation10 + $0x218] sm:$0xff]
    %v957 = vld [vmem:[#allocation10 + $0x220] sm:$0xff]
    %v958 = vld [vmem:[#allocation10 + $0x228] sm:$0xff]
    %v959 = vld [vmem:[#allocation10 + $0x230] sm:$0xff]
    %v960 = vld [vmem:[#allocation10 + $0x238] sm:$0xff]
    %v961 = vld [vmem:[#allocation10 + $0x240] sm:$0xff]
    %v962 = vld [vmem:[#allocation10 + $0x248] sm:$0xff]
    %v963 = vld [vmem:[#allocation10 + $0x250] sm:$0xff]
    %v964 = vld [vmem:[#allocation10 + $0x258] sm:$0xff]
    %v965 = vld [vmem:[#allocation10 + $0x260] sm:$0xff]
    %v966 = vld [vmem:[#allocation10 + $0x268] sm:$0xff]
    %v967 = vld [vmem:[#allocation10 + $0x270] sm:$0xff]
    %v968 = vld [vmem:[#allocation10 + $0x278] sm:$0xff]
    %v969 = vld [vmem:[#allocation10 + $0x280] sm:$0xff]
    %v970 = vld [vmem:[#allocation10 + $0x288] sm:$0xff]
    %v971 = vld [vmem:[#allocation10 + $0x290] sm:$0xff]
    %v972 = vld [vmem:[#allocation10 + $0x298] sm:$0xff]
    %v973 = vld [vmem:[#allocation10 + $0x2a0] sm:$0xff]
    %v974 = vld [vmem:[#allocation10 + $0x2a8] sm:$0xff]
    %v975 = vld [vmem:[#allocation10 + $0x2b0] sm:$0xff]
    %v976 = vld [vmem:[#allocation10 + $0x2b8] sm:$0xff]
    %v977 = vld [vmem:[#allocation10 + $0x2c0] sm:$0xff]
    %v978 = vld [vmem:[#allocation10 + $0x2c8] sm:$0xff]
    %v979 = vld [vmem:[#allocation10 + $0x2d0] sm:$0xff]
    %v980 = vld [vmem:[#allocation10 + $0x2d8] sm:$0xff]
    %v981 = vld [vmem:[#allocation10 + $0x2e0] sm:$0xff]
    %v982 = vld [vmem:[#allocation10 + $0x2e8] sm:$0xff]
    %v983 = vld [vmem:[#allocation10 + $0x2f0] sm:$0xff]
    %v984 = vld [vmem:[#allocation10 + $0x2f8] sm:$0xff]
    %v985 = vld [vmem:[#allocation10 + $0x300] sm:$0xff]
    %v986 = vld [vmem:[#allocation10 + $0x308] sm:$0xff]
    %v987 = vld [vmem:[#allocation10 + $0x310] sm:$0xff]
    %v988 = vld [vmem:[#allocation10 + $0x318] sm:$0xff]
    %v989 = vld [vmem:[#allocation10 + $0x320] sm:$0xff]
    %v990 = vld [vmem:[#allocation10 + $0x328] sm:$0xff]
    %v991 = vld [vmem:[#allocation10 + $0x330] sm:$0xff]
    %v992 = vld [vmem:[#allocation10 + $0x338] sm:$0xff]
    %v993 = vld [vmem:[#allocation10 + $0x340] sm:$0xff]
    %v994 = vld [vmem:[#allocation10 + $0x348] sm:$0xff]
    %v995 = vld [vmem:[#allocation10 + $0x350] sm:$0xff]
    %v996 = vld [vmem:[#allocation10 + $0x358] sm:$0xff]
    %v997 = vld [vmem:[#allocation10 + $0x360] sm:$0xff]
    %v998 = vld [vmem:[#allocation10 + $0x368] sm:$0xff]
    %v999 = vld [vmem:[#allocation10 + $0x370] sm:$0xff]
    %v1000 = vld [vmem:[#allocation10 + $0x378] sm:$0xff]
    %v1001 = vld [vmem:[#allocation10 + $0x380] sm:$0xff]
    %v1002 = vld [vmem:[#allocation10 + $0x388] sm:$0xff]
    %v1003 = vld [vmem:[#allocation10 + $0x390] sm:$0xff]
    %v1004 = vld [vmem:[#allocation10 + $0x398] sm:$0xff]
    %v1005 = vld [vmem:[#allocation10 + $0x3a0] sm:$0xff]
    %v1006 = vld [vmem:[#allocation10 + $0x3a8] sm:$0xff]
    %v1007 = vld [vmem:[#allocation10 + $0x3b0] sm:$0xff]
    %v1008 = vld [vmem:[#allocation10 + $0x3b8] sm:$0xff]
    %v1009 = vld [vmem:[#allocation10 + $0x3c0] sm:$0xff]
    %v1010 = vld [vmem:[#allocation10 + $0x3c8] sm:$0xff]
    %v1011 = vld [vmem:[#allocation10 + $0x3d0] sm:$0xff]
    %v1012 = vld [vmem:[#allocation10 + $0x3d8] sm:$0xff]
    %v1013 = vld [vmem:[#allocation10 + $0x3e0] sm:$0xff]
    %v1014 = vld [vmem:[#allocation10 + $0x3e8] sm:$0xff]
    %v1015 = vld [vmem:[#allocation10 + $0x3f0] sm:$0xff]
    %v1016 = vld [vmem:[#allocation10 + $0x3f8] sm:$0xff]
    %v1017 = vld [vmem:[#allocation10 + $0x400] sm:$0xff]
    %v1018 = vld [vmem:[#allocation10 + $0x408] sm:$0xff]
    %v1019 = vld [vmem:[#allocation10 + $0x410] sm:$0xff]
    %v1020 = vld [vmem:[#allocation10 + $0x418] sm:$0xff]
    %v1021 = vld [vmem:[#allocation10 + $0x420] sm:$0xff]
    %v1022 = vld [vmem:[#allocation10 + $0x428] sm:$0xff]
    %v1023 = vld [vmem:[#allocation10 + $0x430] sm:$0xff]
    %v1024 = vld [vmem:[#allocation10 + $0x438] sm:$0xff]
    %v1025 = vld [vmem:[#allocation10 + $0x440] sm:$0xff]
    %v1026 = vld [vmem:[#allocation10 + $0x448] sm:$0xff]
    %v1027 = vld [vmem:[#allocation10 + $0x450] sm:$0xff]
    %v1028 = vld [vmem:[#allocation10 + $0x458] sm:$0xff]
    %v1029 = vld [vmem:[#allocation10 + $0x460] sm:$0xff]
    %v1030 = vld [vmem:[#allocation10 + $0x468] sm:$0xff]
    %v1031 = vld [vmem:[#allocation10 + $0x470] sm:$0xff]
    %v1032 = vld [vmem:[#allocation10 + $0x478] sm:$0xff]
    %v1033 = vld [vmem:[#allocation10 + $0x480] sm:$0xff]
    %v1034 = vld [vmem:[#allocation10 + $0x488] sm:$0xff]
    %v1035 = vld [vmem:[#allocation10 + $0x490] sm:$0xff]
    %v1036 = vld [vmem:[#allocation10 + $0x498] sm:$0xff]
    %v1037 = vld [vmem:[#allocation10 + $0x4a0] sm:$0xff]
    %v1038 = vld [vmem:[#allocation10 + $0x4a8] sm:$0xff]
    %v1039 = vld [vmem:[#allocation10 + $0x4b0] sm:$0xff]
    %v1040 = vld [vmem:[#allocation10 + $0x4b8] sm:$0xff]
    %v1041 = vld [vmem:[#allocation10 + $0x4c0] sm:$0xff]
    %v1042 = vld [vmem:[#allocation10 + $0x4c8] sm:$0xff]
    %v1043 = vld [vmem:[#allocation10 + $0x4d0] sm:$0xff]
    %v1044 = vld [vmem:[#allocation10 + $0x4d8] sm:$0xff]
    %v1045 = vld [vmem:[#allocation10 + $0x4e0] sm:$0xff]
    %v1046 = vld [vmem:[#allocation10 + $0x4e8] sm:$0xff]
    %v1047 = vld [vmem:[#allocation10 + $0x4f0] sm:$0xff]
    %v1048 = vld [vmem:[#allocation10 + $0x4f8] sm:$0xff]
    %v1049 = vld [vmem:[#allocation10 + $0x500] sm:$0xff]
    %v1050 = vld [vmem:[#allocation10 + $0x508] sm:$0xff]
    %v1051 = vld [vmem:[#allocation10 + $0x510] sm:$0xff]
    %v1052 = vld [vmem:[#allocation10 + $0x518] sm:$0xff]
    %v1053 = vld [vmem:[#allocation10 + $0x520] sm:$0xff]
    %v1054 = vld [vmem:[#allocation10 + $0x528] sm:$0xff]
    %v1055 = vld [vmem:[#allocation10 + $0x530] sm:$0xff]
    %v1056 = vld [vmem:[#allocation10 + $0x538] sm:$0xff]
    %v1057 = vld [vmem:[#allocation10 + $0x540] sm:$0xff]
    %v1058 = vld [vmem:[#allocation10 + $0x548] sm:$0xff]
    %v1059 = vld [vmem:[#allocation10 + $0x550] sm:$0xff]
    %v1060 = vld [vmem:[#allocation10 + $0x558] sm:$0xff]
    %v1061 = vld [vmem:[#allocation10 + $0x560] sm:$0xff]
    %v1062 = vld [vmem:[#allocation10 + $0x568] sm:$0xff]
    %v1063 = vld [vmem:[#allocation10 + $0x570] sm:$0xff]
    %v1064 = vld [vmem:[#allocation10 + $0x578] sm:$0xff]
    %v1065 = vld [vmem:[#allocation10 + $0x580] sm:$0xff]
    %v1066 = vld [vmem:[#allocation10 + $0x588] sm:$0xff]
    %v1067 = vld [vmem:[#allocation10 + $0x590] sm:$0xff]
    %v1068 = vld [vmem:[#allocation10 + $0x598] sm:$0xff]
    %v1069 = vld [vmem:[#allocation10 + $0x5a0] sm:$0xff]
    %v1070 = vld [vmem:[#allocation10 + $0x5a8] sm:$0xff]
    %v1071 = vld [vmem:[#allocation10 + $0x5b0] sm:$0xff]
    %v1072 = vld [vmem:[#allocation10 + $0x5b8] sm:$0xff]
    %v1073 = vld [vmem:[#allocation10 + $0x5c0] sm:$0xff]
    %v1074 = vld [vmem:[#allocation10 + $0x5c8] sm:$0xff]
    %v1075 = vld [vmem:[#allocation10 + $0x5d0] sm:$0xff]
    %v1076 = vld [vmem:[#allocation10 + $0x5d8] sm:$0xff]
    %v1077 = vld [vmem:[#allocation10 + $0x5e0] sm:$0xff]
    %v1078 = vld [vmem:[#allocation10 + $0x5e8] sm:$0xff]
    %v1079 = vld [vmem:[#allocation10 + $0x5f0] sm:$0xff]
    %v1080 = vld [vmem:[#allocation10 + $0x5f8] sm:$0xff]
    %v1081 = vld [vmem:[#allocation10 + $0x600] sm:$0xff]
    %v1082 = vld [vmem:[#allocation10 + $0x608] sm:$0xff]
    %v1083 = vld [vmem:[#allocation10 + $0x610] sm:$0xff]
    %v1084 = vld [vmem:[#allocation10 + $0x618] sm:$0xff]
    %v1085 = vld [vmem:[#allocation10 + $0x620] sm:$0xff]
    %v1086 = vld [vmem:[#allocation10 + $0x628] sm:$0xff]
    %v1087 = vld [vmem:[#allocation10 + $0x630] sm:$0xff]
    %v1088 = vld [vmem:[#allocation10 + $0x638] sm:$0xff]
    %v1089 = vld [vmem:[#allocation10 + $0x640] sm:$0xff]
    %v1090 = vld [vmem:[#allocation10 + $0x648] sm:$0xff]
    %v1091 = vld [vmem:[#allocation10 + $0x650] sm:$0xff]
    %v1092 = vld [vmem:[#allocation10 + $0x658] sm:$0xff]
    %v1093 = vld [vmem:[#allocation10 + $0x660] sm:$0xff]
    %v1094 = vld [vmem:[#allocation10 + $0x668] sm:$0xff]
    %v1095 = vld [vmem:[#allocation10 + $0x670] sm:$0xff]
    %v1096 = vld [vmem:[#allocation10 + $0x678] sm:$0xff]
    %v1097 = vld [vmem:[#allocation10 + $0x680] sm:$0xff]
    %v1098 = vld [vmem:[#allocation10 + $0x688] sm:$0xff]
    %v1099 = vld [vmem:[#allocation10 + $0x690] sm:$0xff]
    %v1100 = vld [vmem:[#allocation10 + $0x698] sm:$0xff]
    %v1101 = vld [vmem:[#allocation10 + $0x6a0] sm:$0xff]
    %v1102 = vld [vmem:[#allocation10 + $0x6a8] sm:$0xff]
    %v1103 = vld [vmem:[#allocation10 + $0x6b0] sm:$0xff]
    %v1104 = vld [vmem:[#allocation10 + $0x6b8] sm:$0xff]
    %v1105 = vld [vmem:[#allocation10 + $0x6c0] sm:$0xff]
    %v1106 = vld [vmem:[#allocation10 + $0x6c8] sm:$0xff]
    %v1107 = vld [vmem:[#allocation10 + $0x6d0] sm:$0xff]
    %v1108 = vld [vmem:[#allocation10 + $0x6d8] sm:$0xff]
    %v1109 = vld [vmem:[#allocation10 + $0x6e0] sm:$0xff]
    %v1110 = vld [vmem:[#allocation10 + $0x6e8] sm:$0xff]
    %v1111 = vld [vmem:[#allocation10 + $0x6f0] sm:$0xff]
    %v1112 = vld [vmem:[#allocation10 + $0x6f8] sm:$0xff]
    %v1113 = vld [vmem:[#allocation10 + $0x700] sm:$0xff]
    %v1114 = vld [vmem:[#allocation10 + $0x708] sm:$0xff]
    %v1115 = vld [vmem:[#allocation10 + $0x710] sm:$0xff]
    %v1116 = vld [vmem:[#allocation10 + $0x718] sm:$0xff]
    %v1117 = vld [vmem:[#allocation10 + $0x720] sm:$0xff]
    %v1118 = vld [vmem:[#allocation10 + $0x728] sm:$0xff]
    %v1119 = vld [vmem:[#allocation10 + $0x730] sm:$0xff]
    %v1120 = vld [vmem:[#allocation10 + $0x738] sm:$0xff]
    %v1121 = vld [vmem:[#allocation10 + $0x740] sm:$0xff]
    %v1122 = vld [vmem:[#allocation10 + $0x748] sm:$0xff]
    %v1123 = vld [vmem:[#allocation10 + $0x750] sm:$0xff]
    %v1124 = vld [vmem:[#allocation10 + $0x758] sm:$0xff]
    %v1125 = vld [vmem:[#allocation10 + $0x760] sm:$0xff]
    %v1126 = vld [vmem:[#allocation10 + $0x768] sm:$0xff]
    %v1127 = vld [vmem:[#allocation10 + $0x770] sm:$0xff]
    %v1128 = vld [vmem:[#allocation10 + $0x778] sm:$0xff]
    %v1129 = vld [vmem:[#allocation10 + $0x780] sm:$0xff]
    %v1130 = vld [vmem:[#allocation10 + $0x788] sm:$0xff]
    %v1131 = vld [vmem:[#allocation10 + $0x790] sm:$0xff]
    %v1132 = vld [vmem:[#allocation10 + $0x798] sm:$0xff]
    %v1133 = vld [vmem:[#allocation10 + $0x7a0] sm:$0xff]
    %v1134 = vld [vmem:[#allocation10 + $0x7a8] sm:$0xff]
    %v1135 = vld [vmem:[#allocation10 + $0x7b0] sm:$0xff]
    %v1136 = vld [vmem:[#allocation10 + $0x7b8] sm:$0xff]
    %v1137 = vld [vmem:[#allocation10 + $0x7c0] sm:$0xff]
    %v1138 = vld [vmem:[#allocation10 + $0x7c8] sm:$0xff]
    %v1139 = vld [vmem:[#allocation10 + $0x7d0] sm:$0xff]
    %v1140 = vld [vmem:[#allocation10 + $0x7d8] sm:$0xff]
    %v1141 = vld [vmem:[#allocation10 + $0x7e0] sm:$0xff]
    %v1142 = vld [vmem:[#allocation10 + $0x7e8] sm:$0xff]
    %v1143 = vld [vmem:[#allocation10 + $0x7f0] sm:$0xff]
    %v1144 = vld [vmem:[#allocation10 + $0x7f8] sm:$0xff]
    %v1145 = vld [vmem:[%s8] sm:$0xff]
    %v1147 = vlaneseq
    %v1148 = vshrl.u32 %v1147, 7
    %v1149 = vsub.s32 0, %v1148
    %v1150 = vrot.slane %v1145, %v1149
    %v1151 = vlaneseq
    %v1152 = vshrl.u32 %v1151, 7
    %v1153 = vsub.s32 1, %v1152
    %v1154 = vrot.slane %v1145, %v1153
    %v1155 = vlaneseq
    %v1156 = vshrl.u32 %v1155, 7
    %v1157 = vsub.s32 2, %v1156
    %v1158 = vrot.slane %v1145, %v1157
    %v1159 = vlaneseq
    %v1160 = vshrl.u32 %v1159, 7
    %v1161 = vsub.s32 3, %v1160
    %v1162 = vrot.slane %v1145, %v1161
    %v1163 = vlaneseq
    %v1164 = vshrl.u32 %v1163, 7
    %v1165 = vsub.s32 4, %v1164
    %v1166 = vrot.slane %v1145, %v1165
    %v1167 = vlaneseq
    %v1168 = vshrl.u32 %v1167, 7
    %v1169 = vsub.s32 5, %v1168
    %v1170 = vrot.slane %v1145, %v1169
    %v1171 = vlaneseq
    %v1172 = vshrl.u32 %v1171, 7
    %v1173 = vsub.s32 6, %v1172
    %v1174 = vrot.slane %v1145, %v1173
    %v1175 = vlaneseq
    %v1176 = vshrl.u32 %v1175, 7
    %v1177 = vsub.s32 7, %v1176
    %v1178 = vrot.slane %v1145, %v1177
    %v1443 = vunpack.c.l.b16 %v889
    %v1444 = vunpack.c.h.b16 %v889
    %v1445 = vunpack.c.l.b16 %v890
    %v1446 = vunpack.c.h.b16 %v890
    %v1447 = vunpack.c.l.b16 %v891
    %v1448 = vunpack.c.h.b16 %v891
    %v1449 = vunpack.c.l.b16 %v892
    %v1450 = vunpack.c.h.b16 %v892
    %v1451 = vunpack.c.l.b16 %v893
    %v1452 = vunpack.c.h.b16 %v893
    %v1453 = vunpack.c.l.b16 %v894
    %v1454 = vunpack.c.h.b16 %v894
    %v1455 = vunpack.c.l.b16 %v895
    %v1456 = vunpack.c.h.b16 %v895
    %v1457 = vunpack.c.l.b16 %v896
    %v1458 = vunpack.c.h.b16 %v896
    %v1459 = vunpack.c.l.b16 %v897
    %v1460 = vunpack.c.h.b16 %v897
    %v1461 = vunpack.c.l.b16 %v898
    %v1462 = vunpack.c.h.b16 %v898
    %v1463 = vunpack.c.l.b16 %v899
    %v1464 = vunpack.c.h.b16 %v899
    %v1465 = vunpack.c.l.b16 %v900
    %v1466 = vunpack.c.h.b16 %v900
    %v1467 = vunpack.c.l.b16 %v901
    %v1468 = vunpack.c.h.b16 %v901
    %v1469 = vunpack.c.l.b16 %v902
    %v1470 = vunpack.c.h.b16 %v902
    %v1471 = vunpack.c.l.b16 %v903
    %v1472 = vunpack.c.h.b16 %v903
    %v1473 = vunpack.c.l.b16 %v904
    %v1474 = vunpack.c.h.b16 %v904
    %v1475 = vunpack.c.l.b16 %v905
    %v1476 = vunpack.c.h.b16 %v905
    %v1477 = vunpack.c.l.b16 %v906
    %v1478 = vunpack.c.h.b16 %v906
    %v1479 = vunpack.c.l.b16 %v907
    %v1480 = vunpack.c.h.b16 %v907
    %v1481 = vunpack.c.l.b16 %v908
    %v1482 = vunpack.c.h.b16 %v908
    %v1483 = vunpack.c.l.b16 %v909
    %v1484 = vunpack.c.h.b16 %v909
    %v1485 = vunpack.c.l.b16 %v910
    %v1486 = vunpack.c.h.b16 %v910
    %v1487 = vunpack.c.l.b16 %v911
    %v1488 = vunpack.c.h.b16 %v911
    %v1489 = vunpack.c.l.b16 %v912
    %v1490 = vunpack.c.h.b16 %v912
    %v1491 = vunpack.c.l.b16 %v913
    %v1492 = vunpack.c.h.b16 %v913
    %v1493 = vunpack.c.l.b16 %v914
    %v1494 = vunpack.c.h.b16 %v914
    %v1495 = vunpack.c.l.b16 %v915
    %v1496 = vunpack.c.h.b16 %v915
    %v1497 = vunpack.c.l.b16 %v916
    %v1498 = vunpack.c.h.b16 %v916
    %v1499 = vunpack.c.l.b16 %v917
    %v1500 = vunpack.c.h.b16 %v917
    %v1501 = vunpack.c.l.b16 %v918
    %v1502 = vunpack.c.h.b16 %v918
    %v1503 = vunpack.c.l.b16 %v919
    %v1504 = vunpack.c.h.b16 %v919
    %v1505 = vunpack.c.l.b16 %v920
    %v1506 = vunpack.c.h.b16 %v920
    %v1507 = vunpack.c.l.b16 %v921
    %v1508 = vunpack.c.h.b16 %v921
    %v1509 = vunpack.c.l.b16 %v922
    %v1510 = vunpack.c.h.b16 %v922
    %v1511 = vunpack.c.l.b16 %v923
    %v1512 = vunpack.c.h.b16 %v923
    %v1513 = vunpack.c.l.b16 %v924
    %v1514 = vunpack.c.h.b16 %v924
    %v1515 = vunpack.c.l.b16 %v925
    %v1516 = vunpack.c.h.b16 %v925
    %v1517 = vunpack.c.l.b16 %v926
    %v1518 = vunpack.c.h.b16 %v926
    %v1519 = vunpack.c.l.b16 %v927
    %v1520 = vunpack.c.h.b16 %v927
    %v1521 = vunpack.c.l.b16 %v928
    %v1522 = vunpack.c.h.b16 %v928
    %v1523 = vunpack.c.l.b16 %v929
    %v1524 = vunpack.c.h.b16 %v929
    %v1525 = vunpack.c.l.b16 %v930
    %v1526 = vunpack.c.h.b16 %v930
    %v1527 = vunpack.c.l.b16 %v931
    %v1528 = vunpack.c.h.b16 %v931
    %v1529 = vunpack.c.l.b16 %v932
    %v1530 = vunpack.c.h.b16 %v932
    %v1531 = vunpack.c.l.b16 %v933
    %v1532 = vunpack.c.h.b16 %v933
    %v1533 = vunpack.c.l.b16 %v934
    %v1534 = vunpack.c.h.b16 %v934
    %v1535 = vunpack.c.l.b16 %v935
    %v1536 = vunpack.c.h.b16 %v935
    %v1537 = vunpack.c.l.b16 %v936
    %v1538 = vunpack.c.h.b16 %v936
    %v1539 = vunpack.c.l.b16 %v937
    %v1540 = vunpack.c.h.b16 %v937
    %v1541 = vunpack.c.l.b16 %v938
    %v1542 = vunpack.c.h.b16 %v938
    %v1543 = vunpack.c.l.b16 %v939
    %v1544 = vunpack.c.h.b16 %v939
    %v1545 = vunpack.c.l.b16 %v940
    %v1546 = vunpack.c.h.b16 %v940
    %v1547 = vunpack.c.l.b16 %v941
    %v1548 = vunpack.c.h.b16 %v941
    %v1549 = vunpack.c.l.b16 %v942
    %v1550 = vunpack.c.h.b16 %v942
    %v1551 = vunpack.c.l.b16 %v943
    %v1552 = vunpack.c.h.b16 %v943
    %v1553 = vunpack.c.l.b16 %v944
    %v1554 = vunpack.c.h.b16 %v944
    %v1555 = vunpack.c.l.b16 %v945
    %v1556 = vunpack.c.h.b16 %v945
    %v1557 = vunpack.c.l.b16 %v946
    %v1558 = vunpack.c.h.b16 %v946
    %v1559 = vunpack.c.l.b16 %v947
    %v1560 = vunpack.c.h.b16 %v947
    %v1561 = vunpack.c.l.b16 %v948
    %v1562 = vunpack.c.h.b16 %v948
    %v1563 = vunpack.c.l.b16 %v949
    %v1564 = vunpack.c.h.b16 %v949
    %v1565 = vunpack.c.l.b16 %v950
    %v1566 = vunpack.c.h.b16 %v950
    %v1567 = vunpack.c.l.b16 %v951
    %v1568 = vunpack.c.h.b16 %v951
    %v1569 = vunpack.c.l.b16 %v952
    %v1570 = vunpack.c.h.b16 %v952
    %v1571 = vunpack.c.l.b16 %v953
    %v1572 = vunpack.c.h.b16 %v953
    %v1573 = vunpack.c.l.b16 %v954
    %v1574 = vunpack.c.h.b16 %v954
    %v1575 = vunpack.c.l.b16 %v955
    %v1576 = vunpack.c.h.b16 %v955
    %v1577 = vunpack.c.l.b16 %v956
    %v1578 = vunpack.c.h.b16 %v956
    %v1579 = vunpack.c.l.b16 %v957
    %v1580 = vunpack.c.h.b16 %v957
    %v1581 = vunpack.c.l.b16 %v958
    %v1582 = vunpack.c.h.b16 %v958
    %v1583 = vunpack.c.l.b16 %v959
    %v1584 = vunpack.c.h.b16 %v959
    %v1585 = vunpack.c.l.b16 %v960
    %v1586 = vunpack.c.h.b16 %v960
    %v1587 = vunpack.c.l.b16 %v961
    %v1588 = vunpack.c.h.b16 %v961
    %v1589 = vunpack.c.l.b16 %v962
    %v1590 = vunpack.c.h.b16 %v962
    %v1591 = vunpack.c.l.b16 %v963
    %v1592 = vunpack.c.h.b16 %v963
    %v1593 = vunpack.c.l.b16 %v964
    %v1594 = vunpack.c.h.b16 %v964
    %v1595 = vunpack.c.l.b16 %v965
    %v1596 = vunpack.c.h.b16 %v965
    %v1597 = vunpack.c.l.b16 %v966
    %v1598 = vunpack.c.h.b16 %v966
    %v1599 = vunpack.c.l.b16 %v967
    %v1600 = vunpack.c.h.b16 %v967
    %v1601 = vunpack.c.l.b16 %v968
    %v1602 = vunpack.c.h.b16 %v968
    %v1603 = vunpack.c.l.b16 %v969
    %v1604 = vunpack.c.h.b16 %v969
    %v1605 = vunpack.c.l.b16 %v970
    %v1606 = vunpack.c.h.b16 %v970
    %v1607 = vunpack.c.l.b16 %v971
    %v1608 = vunpack.c.h.b16 %v971
    %v1609 = vunpack.c.l.b16 %v972
    %v1610 = vunpack.c.h.b16 %v972
    %v1611 = vunpack.c.l.b16 %v973
    %v1612 = vunpack.c.h.b16 %v973
    %v1613 = vunpack.c.l.b16 %v974
    %v1614 = vunpack.c.h.b16 %v974
    %v1615 = vunpack.c.l.b16 %v975
    %v1616 = vunpack.c.h.b16 %v975
    %v1617 = vunpack.c.l.b16 %v976
    %v1618 = vunpack.c.h.b16 %v976
    %v1619 = vunpack.c.l.b16 %v977
    %v1620 = vunpack.c.h.b16 %v977
    %v1621 = vunpack.c.l.b16 %v978
    %v1622 = vunpack.c.h.b16 %v978
    %v1623 = vunpack.c.l.b16 %v979
    %v1624 = vunpack.c.h.b16 %v979
    %v1625 = vunpack.c.l.b16 %v980
    %v1626 = vunpack.c.h.b16 %v980
    %v1627 = vunpack.c.l.b16 %v981
    %v1628 = vunpack.c.h.b16 %v981
    %v1629 = vunpack.c.l.b16 %v982
    %v1630 = vunpack.c.h.b16 %v982
    %v1631 = vunpack.c.l.b16 %v983
    %v1632 = vunpack.c.h.b16 %v983
    %v1633 = vunpack.c.l.b16 %v984
    %v1634 = vunpack.c.h.b16 %v984
    %v1635 = vunpack.c.l.b16 %v985
    %v1636 = vunpack.c.h.b16 %v985
    %v1637 = vunpack.c.l.b16 %v986
    %v1638 = vunpack.c.h.b16 %v986
    %v1639 = vunpack.c.l.b16 %v987
    %v1640 = vunpack.c.h.b16 %v987
    %v1641 = vunpack.c.l.b16 %v988
    %v1642 = vunpack.c.h.b16 %v988
    %v1643 = vunpack.c.l.b16 %v989
    %v1644 = vunpack.c.h.b16 %v989
    %v1645 = vunpack.c.l.b16 %v990
    %v1646 = vunpack.c.h.b16 %v990
    %v1647 = vunpack.c.l.b16 %v991
    %v1648 = vunpack.c.h.b16 %v991
    %v1649 = vunpack.c.l.b16 %v992
    %v1650 = vunpack.c.h.b16 %v992
    %v1651 = vunpack.c.l.b16 %v993
    %v1652 = vunpack.c.h.b16 %v993
    %v1653 = vunpack.c.l.b16 %v994
    %v1654 = vunpack.c.h.b16 %v994
    %v1655 = vunpack.c.l.b16 %v995
    %v1656 = vunpack.c.h.b16 %v995
    %v1657 = vunpack.c.l.b16 %v996
    %v1658 = vunpack.c.h.b16 %v996
    %v1659 = vunpack.c.l.b16 %v997
    %v1660 = vunpack.c.h.b16 %v997
    %v1661 = vunpack.c.l.b16 %v998
    %v1662 = vunpack.c.h.b16 %v998
    %v1663 = vunpack.c.l.b16 %v999
    %v1664 = vunpack.c.h.b16 %v999
    %v1665 = vunpack.c.l.b16 %v1000
    %v1666 = vunpack.c.h.b16 %v1000
    %v1667 = vunpack.c.l.b16 %v1001
    %v1668 = vunpack.c.h.b16 %v1001
    %v1669 = vunpack.c.l.b16 %v1002
    %v1670 = vunpack.c.h.b16 %v1002
    %v1671 = vunpack.c.l.b16 %v1003
    %v1672 = vunpack.c.h.b16 %v1003
    %v1673 = vunpack.c.l.b16 %v1004
    %v1674 = vunpack.c.h.b16 %v1004
    %v1675 = vunpack.c.l.b16 %v1005
    %v1676 = vunpack.c.h.b16 %v1005
    %v1677 = vunpack.c.l.b16 %v1006
    %v1678 = vunpack.c.h.b16 %v1006
    %v1679 = vunpack.c.l.b16 %v1007
    %v1680 = vunpack.c.h.b16 %v1007
    %v1681 = vunpack.c.l.b16 %v1008
    %v1682 = vunpack.c.h.b16 %v1008
    %v1683 = vunpack.c.l.b16 %v1009
    %v1684 = vunpack.c.h.b16 %v1009
    %v1685 = vunpack.c.l.b16 %v1010
    %v1686 = vunpack.c.h.b16 %v1010
    %v1687 = vunpack.c.l.b16 %v1011
    %v1688 = vunpack.c.h.b16 %v1011
    %v1689 = vunpack.c.l.b16 %v1012
    %v1690 = vunpack.c.h.b16 %v1012
    %v1691 = vunpack.c.l.b16 %v1013
    %v1692 = vunpack.c.h.b16 %v1013
    %v1693 = vunpack.c.l.b16 %v1014
    %v1694 = vunpack.c.h.b16 %v1014
    %v1695 = vunpack.c.l.b16 %v1015
    %v1696 = vunpack.c.h.b16 %v1015
    %v1697 = vunpack.c.l.b16 %v1016
    %v1698 = vunpack.c.h.b16 %v1016
    %v1699 = vunpack.c.l.b16 %v1017
    %v1700 = vunpack.c.h.b16 %v1017
    %v1701 = vunpack.c.l.b16 %v1018
    %v1702 = vunpack.c.h.b16 %v1018
    %v1703 = vunpack.c.l.b16 %v1019
    %v1704 = vunpack.c.h.b16 %v1019
    %v1705 = vunpack.c.l.b16 %v1020
    %v1706 = vunpack.c.h.b16 %v1020
    %v1707 = vunpack.c.l.b16 %v1021
    %v1708 = vunpack.c.h.b16 %v1021
    %v1709 = vunpack.c.l.b16 %v1022
    %v1710 = vunpack.c.h.b16 %v1022
    %v1711 = vunpack.c.l.b16 %v1023
    %v1712 = vunpack.c.h.b16 %v1023
    %v1713 = vunpack.c.l.b16 %v1024
    %v1714 = vunpack.c.h.b16 %v1024
    %v1715 = vunpack.c.l.b16 %v1025
    %v1716 = vunpack.c.h.b16 %v1025
    %v1717 = vunpack.c.l.b16 %v1026
    %v1718 = vunpack.c.h.b16 %v1026
    %v1719 = vunpack.c.l.b16 %v1027
    %v1720 = vunpack.c.h.b16 %v1027
    %v1721 = vunpack.c.l.b16 %v1028
    %v1722 = vunpack.c.h.b16 %v1028
    %v1723 = vunpack.c.l.b16 %v1029
    %v1724 = vunpack.c.h.b16 %v1029
    %v1725 = vunpack.c.l.b16 %v1030
    %v1726 = vunpack.c.h.b16 %v1030
    %v1727 = vunpack.c.l.b16 %v1031
    %v1728 = vunpack.c.h.b16 %v1031
    %v1729 = vunpack.c.l.b16 %v1032
    %v1730 = vunpack.c.h.b16 %v1032
    %v1731 = vunpack.c.l.b16 %v1033
    %v1732 = vunpack.c.h.b16 %v1033
    %v1733 = vunpack.c.l.b16 %v1034
    %v1734 = vunpack.c.h.b16 %v1034
    %v1735 = vunpack.c.l.b16 %v1035
    %v1736 = vunpack.c.h.b16 %v1035
    %v1737 = vunpack.c.l.b16 %v1036
    %v1738 = vunpack.c.h.b16 %v1036
    %v1739 = vunpack.c.l.b16 %v1037
    %v1740 = vunpack.c.h.b16 %v1037
    %v1741 = vunpack.c.l.b16 %v1038
    %v1742 = vunpack.c.h.b16 %v1038
    %v1743 = vunpack.c.l.b16 %v1039
    %v1744 = vunpack.c.h.b16 %v1039
    %v1745 = vunpack.c.l.b16 %v1040
    %v1746 = vunpack.c.h.b16 %v1040
    %v1747 = vunpack.c.l.b16 %v1041
    %v1748 = vunpack.c.h.b16 %v1041
    %v1749 = vunpack.c.l.b16 %v1042
    %v1750 = vunpack.c.h.b16 %v1042
    %v1751 = vunpack.c.l.b16 %v1043
    %v1752 = vunpack.c.h.b16 %v1043
    %v1753 = vunpack.c.l.b16 %v1044
    %v1754 = vunpack.c.h.b16 %v1044
    %v1755 = vunpack.c.l.b16 %v1045
    %v1756 = vunpack.c.h.b16 %v1045
    %v1757 = vunpack.c.l.b16 %v1046
    %v1758 = vunpack.c.h.b16 %v1046
    %v1759 = vunpack.c.l.b16 %v1047
    %v1760 = vunpack.c.h.b16 %v1047
    %v1761 = vunpack.c.l.b16 %v1048
    %v1762 = vunpack.c.h.b16 %v1048
    %v1763 = vunpack.c.l.b16 %v1049
    %v1764 = vunpack.c.h.b16 %v1049
    %v1765 = vunpack.c.l.b16 %v1050
    %v1766 = vunpack.c.h.b16 %v1050
    %v1767 = vunpack.c.l.b16 %v1051
    %v1768 = vunpack.c.h.b16 %v1051
    %v1769 = vunpack.c.l.b16 %v1052
    %v1770 = vunpack.c.h.b16 %v1052
    %v1771 = vunpack.c.l.b16 %v1053
    %v1772 = vunpack.c.h.b16 %v1053
    %v1773 = vunpack.c.l.b16 %v1054
    %v1774 = vunpack.c.h.b16 %v1054
    %v1775 = vunpack.c.l.b16 %v1055
    %v1776 = vunpack.c.h.b16 %v1055
    %v1777 = vunpack.c.l.b16 %v1056
    %v1778 = vunpack.c.h.b16 %v1056
    %v1779 = vunpack.c.l.b16 %v1057
    %v1780 = vunpack.c.h.b16 %v1057
    %v1781 = vunpack.c.l.b16 %v1058
    %v1782 = vunpack.c.h.b16 %v1058
    %v1783 = vunpack.c.l.b16 %v1059
    %v1784 = vunpack.c.h.b16 %v1059
    %v1785 = vunpack.c.l.b16 %v1060
    %v1786 = vunpack.c.h.b16 %v1060
    %v1787 = vunpack.c.l.b16 %v1061
    %v1788 = vunpack.c.h.b16 %v1061
    %v1789 = vunpack.c.l.b16 %v1062
    %v1790 = vunpack.c.h.b16 %v1062
    %v1791 = vunpack.c.l.b16 %v1063
    %v1792 = vunpack.c.h.b16 %v1063
    %v1793 = vunpack.c.l.b16 %v1064
    %v1794 = vunpack.c.h.b16 %v1064
    %v1795 = vunpack.c.l.b16 %v1065
    %v1796 = vunpack.c.h.b16 %v1065
    %v1797 = vunpack.c.l.b16 %v1066
    %v1798 = vunpack.c.h.b16 %v1066
    %v1799 = vunpack.c.l.b16 %v1067
    %v1800 = vunpack.c.h.b16 %v1067
    %v1801 = vunpack.c.l.b16 %v1068
    %v1802 = vunpack.c.h.b16 %v1068
    %v1803 = vunpack.c.l.b16 %v1069
    %v1804 = vunpack.c.h.b16 %v1069
    %v1805 = vunpack.c.l.b16 %v1070
    %v1806 = vunpack.c.h.b16 %v1070
    %v1807 = vunpack.c.l.b16 %v1071
    %v1808 = vunpack.c.h.b16 %v1071
    %v1809 = vunpack.c.l.b16 %v1072
    %v1810 = vunpack.c.h.b16 %v1072
    %v1811 = vunpack.c.l.b16 %v1073
    %v1812 = vunpack.c.h.b16 %v1073
    %v1813 = vunpack.c.l.b16 %v1074
    %v1814 = vunpack.c.h.b16 %v1074
    %v1815 = vunpack.c.l.b16 %v1075
    %v1816 = vunpack.c.h.b16 %v1075
    %v1817 = vunpack.c.l.b16 %v1076
    %v1818 = vunpack.c.h.b16 %v1076
    %v1819 = vunpack.c.l.b16 %v1077
    %v1820 = vunpack.c.h.b16 %v1077
    %v1821 = vunpack.c.l.b16 %v1078
    %v1822 = vunpack.c.h.b16 %v1078
    %v1823 = vunpack.c.l.b16 %v1079
    %v1824 = vunpack.c.h.b16 %v1079
    %v1825 = vunpack.c.l.b16 %v1080
    %v1826 = vunpack.c.h.b16 %v1080
    %v1827 = vunpack.c.l.b16 %v1081
    %v1828 = vunpack.c.h.b16 %v1081
    %v1829 = vunpack.c.l.b16 %v1082
    %v1830 = vunpack.c.h.b16 %v1082
    %v1831 = vunpack.c.l.b16 %v1083
    %v1832 = vunpack.c.h.b16 %v1083
    %v1833 = vunpack.c.l.b16 %v1084
    %v1834 = vunpack.c.h.b16 %v1084
    %v1835 = vunpack.c.l.b16 %v1085
    %v1836 = vunpack.c.h.b16 %v1085
    %v1837 = vunpack.c.l.b16 %v1086
    %v1838 = vunpack.c.h.b16 %v1086
    %v1839 = vunpack.c.l.b16 %v1087
    %v1840 = vunpack.c.h.b16 %v1087
    %v1841 = vunpack.c.l.b16 %v1088
    %v1842 = vunpack.c.h.b16 %v1088
    %v1843 = vunpack.c.l.b16 %v1089
    %v1844 = vunpack.c.h.b16 %v1089
    %v1845 = vunpack.c.l.b16 %v1090
    %v1846 = vunpack.c.h.b16 %v1090
    %v1847 = vunpack.c.l.b16 %v1091
    %v1848 = vunpack.c.h.b16 %v1091
    %v1849 = vunpack.c.l.b16 %v1092
    %v1850 = vunpack.c.h.b16 %v1092
    %v1851 = vunpack.c.l.b16 %v1093
    %v1852 = vunpack.c.h.b16 %v1093
    %v1853 = vunpack.c.l.b16 %v1094
    %v1854 = vunpack.c.h.b16 %v1094
    %v1855 = vunpack.c.l.b16 %v1095
    %v1856 = vunpack.c.h.b16 %v1095
    %v1857 = vunpack.c.l.b16 %v1096
    %v1858 = vunpack.c.h.b16 %v1096
    %v1859 = vunpack.c.l.b16 %v1097
    %v1860 = vunpack.c.h.b16 %v1097
    %v1861 = vunpack.c.l.b16 %v1098
    %v1862 = vunpack.c.h.b16 %v1098
    %v1863 = vunpack.c.l.b16 %v1099
    %v1864 = vunpack.c.h.b16 %v1099
    %v1865 = vunpack.c.l.b16 %v1100
    %v1866 = vunpack.c.h.b16 %v1100
    %v1867 = vunpack.c.l.b16 %v1101
    %v1868 = vunpack.c.h.b16 %v1101
    %v1869 = vunpack.c.l.b16 %v1102
    %v1870 = vunpack.c.h.b16 %v1102
    %v1871 = vunpack.c.l.b16 %v1103
    %v1872 = vunpack.c.h.b16 %v1103
    %v1873 = vunpack.c.l.b16 %v1104
    %v1874 = vunpack.c.h.b16 %v1104
    %v1875 = vunpack.c.l.b16 %v1105
    %v1876 = vunpack.c.h.b16 %v1105
    %v1877 = vunpack.c.l.b16 %v1106
    %v1878 = vunpack.c.h.b16 %v1106
    %v1879 = vunpack.c.l.b16 %v1107
    %v1880 = vunpack.c.h.b16 %v1107
    %v1881 = vunpack.c.l.b16 %v1108
    %v1882 = vunpack.c.h.b16 %v1108
    %v1883 = vunpack.c.l.b16 %v1109
    %v1884 = vunpack.c.h.b16 %v1109
    %v1885 = vunpack.c.l.b16 %v1110
    %v1886 = vunpack.c.h.b16 %v1110
    %v1887 = vunpack.c.l.b16 %v1111
    %v1888 = vunpack.c.h.b16 %v1111
    %v1889 = vunpack.c.l.b16 %v1112
    %v1890 = vunpack.c.h.b16 %v1112
    %v1891 = vunpack.c.l.b16 %v1113
    %v1892 = vunpack.c.h.b16 %v1113
    %v1893 = vunpack.c.l.b16 %v1114
    %v1894 = vunpack.c.h.b16 %v1114
    %v1895 = vunpack.c.l.b16 %v1115
    %v1896 = vunpack.c.h.b16 %v1115
    %v1897 = vunpack.c.l.b16 %v1116
    %v1898 = vunpack.c.h.b16 %v1116
    %v1899 = vunpack.c.l.b16 %v1117
    %v1900 = vunpack.c.h.b16 %v1117
    %v1901 = vunpack.c.l.b16 %v1118
    %v1902 = vunpack.c.h.b16 %v1118
    %v1903 = vunpack.c.l.b16 %v1119
    %v1904 = vunpack.c.h.b16 %v1119
    %v1905 = vunpack.c.l.b16 %v1120
    %v1906 = vunpack.c.h.b16 %v1120
    %v1907 = vunpack.c.l.b16 %v1121
    %v1908 = vunpack.c.h.b16 %v1121
    %v1909 = vunpack.c.l.b16 %v1122
    %v1910 = vunpack.c.h.b16 %v1122
    %v1911 = vunpack.c.l.b16 %v1123
    %v1912 = vunpack.c.h.b16 %v1123
    %v1913 = vunpack.c.l.b16 %v1124
    %v1914 = vunpack.c.h.b16 %v1124
    %v1915 = vunpack.c.l.b16 %v1125
    %v1916 = vunpack.c.h.b16 %v1125
    %v1917 = vunpack.c.l.b16 %v1126
    %v1918 = vunpack.c.h.b16 %v1126
    %v1919 = vunpack.c.l.b16 %v1127
    %v1920 = vunpack.c.h.b16 %v1127
    %v1921 = vunpack.c.l.b16 %v1128
    %v1922 = vunpack.c.h.b16 %v1128
    %v1923 = vunpack.c.l.b16 %v1129
    %v1924 = vunpack.c.h.b16 %v1129
    %v1925 = vunpack.c.l.b16 %v1130
    %v1926 = vunpack.c.h.b16 %v1130
    %v1927 = vunpack.c.l.b16 %v1131
    %v1928 = vunpack.c.h.b16 %v1131
    %v1929 = vunpack.c.l.b16 %v1132
    %v1930 = vunpack.c.h.b16 %v1132
    %v1931 = vunpack.c.l.b16 %v1133
    %v1932 = vunpack.c.h.b16 %v1133
    %v1933 = vunpack.c.l.b16 %v1134
    %v1934 = vunpack.c.h.b16 %v1134
    %v1935 = vunpack.c.l.b16 %v1135
    %v1936 = vunpack.c.h.b16 %v1135
    %v1937 = vunpack.c.l.b16 %v1136
    %v1938 = vunpack.c.h.b16 %v1136
    %v1939 = vunpack.c.l.b16 %v1137
    %v1940 = vunpack.c.h.b16 %v1137
    %v1941 = vunpack.c.l.b16 %v1138
    %v1942 = vunpack.c.h.b16 %v1138
    %v1943 = vunpack.c.l.b16 %v1139
    %v1944 = vunpack.c.h.b16 %v1139
    %v1945 = vunpack.c.l.b16 %v1140
    %v1946 = vunpack.c.h.b16 %v1140
    %v1947 = vunpack.c.l.b16 %v1141
    %v1948 = vunpack.c.h.b16 %v1141
    %v1949 = vunpack.c.l.b16 %v1142
    %v1950 = vunpack.c.h.b16 %v1142
    %v1951 = vunpack.c.l.b16 %v1143
    %v1952 = vunpack.c.h.b16 %v1143
    %v1953 = vunpack.c.l.b16 %v1144
    %v1954 = vunpack.c.h.b16 %v1144
    %v1955 = vpack.c.b16 %v1451, %v1443
    %v1956 = vpack.c.b16 %v1452, %v1444
    %v1957 = vpack.c.b16 %v1453, %v1445
    %v1958 = vpack.c.b16 %v1454, %v1446
    %v1959 = vpack.c.b16 %v1455, %v1447
    %v1960 = vpack.c.b16 %v1456, %v1448
    %v1961 = vpack.c.b16 %v1457, %v1449
    %v1962 = vpack.c.b16 %v1458, %v1450
    %v1963 = vpack.c.b16 %v1467, %v1459
    %v1964 = vpack.c.b16 %v1468, %v1460
    %v1965 = vpack.c.b16 %v1469, %v1461
    %v1966 = vpack.c.b16 %v1470, %v1462
    %v1967 = vpack.c.b16 %v1471, %v1463
    %v1968 = vpack.c.b16 %v1472, %v1464
    %v1969 = vpack.c.b16 %v1473, %v1465
    %v1970 = vpack.c.b16 %v1474, %v1466
    %v1971 = vpack.c.b16 %v1483, %v1475
    %v1972 = vpack.c.b16 %v1484, %v1476
    %v1973 = vpack.c.b16 %v1485, %v1477
    %v1974 = vpack.c.b16 %v1486, %v1478
    %v1975 = vpack.c.b16 %v1487, %v1479
    %v1976 = vpack.c.b16 %v1488, %v1480
    %v1977 = vpack.c.b16 %v1489, %v1481
    %v1978 = vpack.c.b16 %v1490, %v1482
    %v1979 = vpack.c.b16 %v1499, %v1491
    %v1980 = vpack.c.b16 %v1500, %v1492
    %v1981 = vpack.c.b16 %v1501, %v1493
    %v1982 = vpack.c.b16 %v1502, %v1494
    %v1983 = vpack.c.b16 %v1503, %v1495
    %v1984 = vpack.c.b16 %v1504, %v1496
    %v1985 = vpack.c.b16 %v1505, %v1497
    %v1986 = vpack.c.b16 %v1506, %v1498
    %v1987 = vpack.c.b16 %v1515, %v1507
    %v1988 = vpack.c.b16 %v1516, %v1508
    %v1989 = vpack.c.b16 %v1517, %v1509
    %v1990 = vpack.c.b16 %v1518, %v1510
    %v1991 = vpack.c.b16 %v1519, %v1511
    %v1992 = vpack.c.b16 %v1520, %v1512
    %v1993 = vpack.c.b16 %v1521, %v1513
    %v1994 = vpack.c.b16 %v1522, %v1514
    %v1995 = vpack.c.b16 %v1531, %v1523
    %v1996 = vpack.c.b16 %v1532, %v1524
    %v1997 = vpack.c.b16 %v1533, %v1525
    %v1998 = vpack.c.b16 %v1534, %v1526
    %v1999 = vpack.c.b16 %v1535, %v1527
    %v2000 = vpack.c.b16 %v1536, %v1528
    %v2001 = vpack.c.b16 %v1537, %v1529
    %v2002 = vpack.c.b16 %v1538, %v1530
    %v2003 = vpack.c.b16 %v1547, %v1539
    %v2004 = vpack.c.b16 %v1548, %v1540
    %v2005 = vpack.c.b16 %v1549, %v1541
    %v2006 = vpack.c.b16 %v1550, %v1542
    %v2007 = vpack.c.b16 %v1551, %v1543
    %v2008 = vpack.c.b16 %v1552, %v1544
    %v2009 = vpack.c.b16 %v1553, %v1545
    %v2010 = vpack.c.b16 %v1554, %v1546
    %v2011 = vpack.c.b16 %v1563, %v1555
    %v2012 = vpack.c.b16 %v1564, %v1556
    %v2013 = vpack.c.b16 %v1565, %v1557
    %v2014 = vpack.c.b16 %v1566, %v1558
    %v2015 = vpack.c.b16 %v1567, %v1559
    %v2016 = vpack.c.b16 %v1568, %v1560
    %v2017 = vpack.c.b16 %v1569, %v1561
    %v2018 = vpack.c.b16 %v1570, %v1562
    %v2019 = vpack.c.b16 %v1579, %v1571
    %v2020 = vpack.c.b16 %v1580, %v1572
    %v2021 = vpack.c.b16 %v1581, %v1573
    %v2022 = vpack.c.b16 %v1582, %v1574
    %v2023 = vpack.c.b16 %v1583, %v1575
    %v2024 = vpack.c.b16 %v1584, %v1576
    %v2025 = vpack.c.b16 %v1585, %v1577
    %v2026 = vpack.c.b16 %v1586, %v1578
    %v2027 = vpack.c.b16 %v1595, %v1587
    %v2028 = vpack.c.b16 %v1596, %v1588
    %v2029 = vpack.c.b16 %v1597, %v1589
    %v2030 = vpack.c.b16 %v1598, %v1590
    %v2031 = vpack.c.b16 %v1599, %v1591
    %v2032 = vpack.c.b16 %v1600, %v1592
    %v2033 = vpack.c.b16 %v1601, %v1593
    %v2034 = vpack.c.b16 %v1602, %v1594
    %v2035 = vpack.c.b16 %v1611, %v1603
    %v2036 = vpack.c.b16 %v1612, %v1604
    %v2037 = vpack.c.b16 %v1613, %v1605
    %v2038 = vpack.c.b16 %v1614, %v1606
    %v2039 = vpack.c.b16 %v1615, %v1607
    %v2040 = vpack.c.b16 %v1616, %v1608
    %v2041 = vpack.c.b16 %v1617, %v1609
    %v2042 = vpack.c.b16 %v1618, %v1610
    %v2043 = vpack.c.b16 %v1627, %v1619
    %v2044 = vpack.c.b16 %v1628, %v1620
    %v2045 = vpack.c.b16 %v1629, %v1621
    %v2046 = vpack.c.b16 %v1630, %v1622
    %v2047 = vpack.c.b16 %v1631, %v1623
    %v2048 = vpack.c.b16 %v1632, %v1624
    %v2049 = vpack.c.b16 %v1633, %v1625
    %v2050 = vpack.c.b16 %v1634, %v1626
    %v2051 = vpack.c.b16 %v1643, %v1635
    %v2052 = vpack.c.b16 %v1644, %v1636
    %v2053 = vpack.c.b16 %v1645, %v1637
    %v2054 = vpack.c.b16 %v1646, %v1638
    %v2055 = vpack.c.b16 %v1647, %v1639
    %v2056 = vpack.c.b16 %v1648, %v1640
    %v2057 = vpack.c.b16 %v1649, %v1641
    %v2058 = vpack.c.b16 %v1650, %v1642
    %v2059 = vpack.c.b16 %v1659, %v1651
    %v2060 = vpack.c.b16 %v1660, %v1652
    %v2061 = vpack.c.b16 %v1661, %v1653
    %v2062 = vpack.c.b16 %v1662, %v1654
    %v2063 = vpack.c.b16 %v1663, %v1655
    %v2064 = vpack.c.b16 %v1664, %v1656
    %v2065 = vpack.c.b16 %v1665, %v1657
    %v2066 = vpack.c.b16 %v1666, %v1658
    %v2067 = vpack.c.b16 %v1675, %v1667
    %v2068 = vpack.c.b16 %v1676, %v1668
    %v2069 = vpack.c.b16 %v1677, %v1669
    %v2070 = vpack.c.b16 %v1678, %v1670
    %v2071 = vpack.c.b16 %v1679, %v1671
    %v2072 = vpack.c.b16 %v1680, %v1672
    %v2073 = vpack.c.b16 %v1681, %v1673
    %v2074 = vpack.c.b16 %v1682, %v1674
    %v2075 = vpack.c.b16 %v1691, %v1683
    %v2076 = vpack.c.b16 %v1692, %v1684
    %v2077 = vpack.c.b16 %v1693, %v1685
    %v2078 = vpack.c.b16 %v1694, %v1686
    %v2079 = vpack.c.b16 %v1695, %v1687
    %v2080 = vpack.c.b16 %v1696, %v1688
    %v2081 = vpack.c.b16 %v1697, %v1689
    %v2082 = vpack.c.b16 %v1698, %v1690
    %v2083 = vpack.c.b16 %v1707, %v1699
    %v2084 = vpack.c.b16 %v1708, %v1700
    %v2085 = vpack.c.b16 %v1709, %v1701
    %v2086 = vpack.c.b16 %v1710, %v1702
    %v2087 = vpack.c.b16 %v1711, %v1703
    %v2088 = vpack.c.b16 %v1712, %v1704
    %v2089 = vpack.c.b16 %v1713, %v1705
    %v2090 = vpack.c.b16 %v1714, %v1706
    %v2091 = vpack.c.b16 %v1723, %v1715
    %v2092 = vpack.c.b16 %v1724, %v1716
    %v2093 = vpack.c.b16 %v1725, %v1717
    %v2094 = vpack.c.b16 %v1726, %v1718
    %v2095 = vpack.c.b16 %v1727, %v1719
    %v2096 = vpack.c.b16 %v1728, %v1720
    %v2097 = vpack.c.b16 %v1729, %v1721
    %v2098 = vpack.c.b16 %v1730, %v1722
    %v2099 = vpack.c.b16 %v1739, %v1731
    %v2100 = vpack.c.b16 %v1740, %v1732
    %v2101 = vpack.c.b16 %v1741, %v1733
    %v2102 = vpack.c.b16 %v1742, %v1734
    %v2103 = vpack.c.b16 %v1743, %v1735
    %v2104 = vpack.c.b16 %v1744, %v1736
    %v2105 = vpack.c.b16 %v1745, %v1737
    %v2106 = vpack.c.b16 %v1746, %v1738
    %v2107 = vpack.c.b16 %v1755, %v1747
    %v2108 = vpack.c.b16 %v1756, %v1748
    %v2109 = vpack.c.b16 %v1757, %v1749
    %v2110 = vpack.c.b16 %v1758, %v1750
    %v2111 = vpack.c.b16 %v1759, %v1751
    %v2112 = vpack.c.b16 %v1760, %v1752
    %v2113 = vpack.c.b16 %v1761, %v1753
    %v2114 = vpack.c.b16 %v1762, %v1754
    %v2115 = vpack.c.b16 %v1771, %v1763
    %v2116 = vpack.c.b16 %v1772, %v1764
    %v2117 = vpack.c.b16 %v1773, %v1765
    %v2118 = vpack.c.b16 %v1774, %v1766
    %v2119 = vpack.c.b16 %v1775, %v1767
    %v2120 = vpack.c.b16 %v1776, %v1768
    %v2121 = vpack.c.b16 %v1777, %v1769
    %v2122 = vpack.c.b16 %v1778, %v1770
    %v2123 = vpack.c.b16 %v1787, %v1779
    %v2124 = vpack.c.b16 %v1788, %v1780
    %v2125 = vpack.c.b16 %v1789, %v1781
    %v2126 = vpack.c.b16 %v1790, %v1782
    %v2127 = vpack.c.b16 %v1791, %v1783
    %v2128 = vpack.c.b16 %v1792, %v1784
    %v2129 = vpack.c.b16 %v1793, %v1785
    %v2130 = vpack.c.b16 %v1794, %v1786
    %v2131 = vpack.c.b16 %v1803, %v1795
    %v2132 = vpack.c.b16 %v1804, %v1796
    %v2133 = vpack.c.b16 %v1805, %v1797
    %v2134 = vpack.c.b16 %v1806, %v1798
    %v2135 = vpack.c.b16 %v1807, %v1799
    %v2136 = vpack.c.b16 %v1808, %v1800
    %v2137 = vpack.c.b16 %v1809, %v1801
    %v2138 = vpack.c.b16 %v1810, %v1802
    %v2139 = vpack.c.b16 %v1819, %v1811
    %v2140 = vpack.c.b16 %v1820, %v1812
    %v2141 = vpack.c.b16 %v1821, %v1813
    %v2142 = vpack.c.b16 %v1822, %v1814
    %v2143 = vpack.c.b16 %v1823, %v1815
    %v2144 = vpack.c.b16 %v1824, %v1816
    %v2145 = vpack.c.b16 %v1825, %v1817
    %v2146 = vpack.c.b16 %v1826, %v1818
    %v2147 = vpack.c.b16 %v1835, %v1827
    %v2148 = vpack.c.b16 %v1836, %v1828
    %v2149 = vpack.c.b16 %v1837, %v1829
    %v2150 = vpack.c.b16 %v1838, %v1830
    %v2151 = vpack.c.b16 %v1839, %v1831
    %v2152 = vpack.c.b16 %v1840, %v1832
    %v2153 = vpack.c.b16 %v1841, %v1833
    %v2154 = vpack.c.b16 %v1842, %v1834
    %v2155 = vpack.c.b16 %v1851, %v1843
    %v2156 = vpack.c.b16 %v1852, %v1844
    %v2157 = vpack.c.b16 %v1853, %v1845
    %v2158 = vpack.c.b16 %v1854, %v1846
    %v2159 = vpack.c.b16 %v1855, %v1847
    %v2160 = vpack.c.b16 %v1856, %v1848
    %v2161 = vpack.c.b16 %v1857, %v1849
    %v2162 = vpack.c.b16 %v1858, %v1850
    %v2163 = vpack.c.b16 %v1867, %v1859
    %v2164 = vpack.c.b16 %v1868, %v1860
    %v2165 = vpack.c.b16 %v1869, %v1861
    %v2166 = vpack.c.b16 %v1870, %v1862
    %v2167 = vpack.c.b16 %v1871, %v1863
    %v2168 = vpack.c.b16 %v1872, %v1864
    %v2169 = vpack.c.b16 %v1873, %v1865
    %v2170 = vpack.c.b16 %v1874, %v1866
    %v2171 = vpack.c.b16 %v1883, %v1875
    %v2172 = vpack.c.b16 %v1884, %v1876
    %v2173 = vpack.c.b16 %v1885, %v1877
    %v2174 = vpack.c.b16 %v1886, %v1878
    %v2175 = vpack.c.b16 %v1887, %v1879
    %v2176 = vpack.c.b16 %v1888, %v1880
    %v2177 = vpack.c.b16 %v1889, %v1881
    %v2178 = vpack.c.b16 %v1890, %v1882
    %v2179 = vpack.c.b16 %v1899, %v1891
    %v2180 = vpack.c.b16 %v1900, %v1892
    %v2181 = vpack.c.b16 %v1901, %v1893
    %v2182 = vpack.c.b16 %v1902, %v1894
    %v2183 = vpack.c.b16 %v1903, %v1895
    %v2184 = vpack.c.b16 %v1904, %v1896
    %v2185 = vpack.c.b16 %v1905, %v1897
    %v2186 = vpack.c.b16 %v1906, %v1898
    %v2187 = vpack.c.b16 %v1915, %v1907
    %v2188 = vpack.c.b16 %v1916, %v1908
    %v2189 = vpack.c.b16 %v1917, %v1909
    %v2190 = vpack.c.b16 %v1918, %v1910
    %v2191 = vpack.c.b16 %v1919, %v1911
    %v2192 = vpack.c.b16 %v1920, %v1912
    %v2193 = vpack.c.b16 %v1921, %v1913
    %v2194 = vpack.c.b16 %v1922, %v1914
    %v2195 = vpack.c.b16 %v1931, %v1923
    %v2196 = vpack.c.b16 %v1932, %v1924
    %v2197 = vpack.c.b16 %v1933, %v1925
    %v2198 = vpack.c.b16 %v1934, %v1926
    %v2199 = vpack.c.b16 %v1935, %v1927
    %v2200 = vpack.c.b16 %v1936, %v1928
    %v2201 = vpack.c.b16 %v1937, %v1929
    %v2202 = vpack.c.b16 %v1938, %v1930
    %v2203 = vpack.c.b16 %v1947, %v1939
    %v2204 = vpack.c.b16 %v1948, %v1940
    %v2205 = vpack.c.b16 %v1949, %v1941
    %v2206 = vpack.c.b16 %v1950, %v1942
    %v2207 = vpack.c.b16 %v1951, %v1943
    %v2208 = vpack.c.b16 %v1952, %v1944
    %v2209 = vpack.c.b16 %v1953, %v1945
    %v2210 = vpack.c.b16 %v1954, %v1946
    %2467 = vmatprep.subr.bf16.mxu0 %v1956
    %2468 = vmatpush1.bf16.msra.mxu0 %v1955
    %2469 = vmatprep.subr.bf16.mxu0 %v1964
    %2470 = vmatpush1.bf16.msra.mxu0 %v1963
    %2471 = vmatprep.subr.bf16.mxu0 %v1972
    %2472 = vmatpush1.bf16.msra.mxu0 %v1971
    %2473 = vmatprep.subr.bf16.mxu0 %v1980
    %2474 = vmatpush1.bf16.msra.mxu0 %v1979
    %2475 = vmatprep.subr.bf16.mxu0 %v1988
    %2476 = vmatpush1.bf16.msra.mxu0 %v1987
    %2477 = vmatprep.subr.bf16.mxu0 %v1996
    %2478 = vmatpush1.bf16.msra.mxu0 %v1995
    %2479 = vmatprep.subr.bf16.mxu0 %v2004
    %2480 = vmatpush1.bf16.msra.mxu0 %v2003
    %2481 = vmatprep.subr.bf16.mxu0 %v2012
    %2482 = vmatpush1.bf16.msra.mxu0 %v2011
    %2483 = vmatprep.subr.bf16.mxu0 %v2020
    %2484 = vmatpush1.bf16.msra.mxu0 %v2019
    %2485 = vmatprep.subr.bf16.mxu0 %v2028
    %2486 = vmatpush1.bf16.msra.mxu0 %v2027
    %2487 = vmatprep.subr.bf16.mxu0 %v2036
    %2488 = vmatpush1.bf16.msra.mxu0 %v2035
    %2489 = vmatprep.subr.bf16.mxu0 %v2044
    %2490 = vmatpush1.bf16.msra.mxu0 %v2043
    %2491 = vmatprep.subr.bf16.mxu0 %v2052
    %2492 = vmatpush1.bf16.msra.mxu0 %v2051
    %2493 = vmatprep.subr.bf16.mxu0 %v2060
    %2494 = vmatpush1.bf16.msra.mxu0 %v2059
    %2495 = vmatprep.subr.bf16.mxu0 %v2068
    %2496 = vmatpush1.bf16.msra.mxu0 %v2067
    %2497 = vmatprep.subr.bf16.mxu0 %v2076
    %2498 = vmatpush1.bf16.msra.mxu0 %v2075
    %2499 = vmatprep.mubr.bf16.mxu0 %v886
    %2500 = vmatmul.mubr.bf16.gmra.mrb[0].mxu0 %v885
    %v2501 = vpop.f32.mrb[0].mxu0
    %v2502 = vadd.f32 %v1150, %v2501
    %v2503 = vpop.f32.mrb[0].mxu0
    %v2504 = vadd.f32 %v1154, %v2503
    %v2505 = vpop.f32.mrb[0].mxu0
    %v2506 = vadd.f32 %v1150, %v2505
    %v2507 = vpop.f32.mrb[0].mxu0
    %v2508 = vadd.f32 %v1154, %v2507
    %2509 = vdwg.mxu0
    %2510 = vmatprep.subr.bf16.mxu0 %v2084
    %2511 = vmatpush1.bf16.msra.mxu0 %v2083
    %2512 = vmatprep.subr.bf16.mxu0 %v2092
    %2513 = vmatpush1.bf16.msra.mxu0 %v2091
    %2514 = vmatprep.subr.bf16.mxu0 %v2100
    %2515 = vmatpush1.bf16.msra.mxu0 %v2099
    %2516 = vmatprep.subr.bf16.mxu0 %v2108
    %2517 = vmatpush1.bf16.msra.mxu0 %v2107
    %2518 = vmatprep.subr.bf16.mxu0 %v2116
    %2519 = vmatpush1.bf16.msra.mxu0 %v2115
    %2520 = vmatprep.subr.bf16.mxu0 %v2124
    %2521 = vmatpush1.bf16.msra.mxu0 %v2123
    %2522 = vmatprep.subr.bf16.mxu0 %v2132
    %2523 = vmatpush1.bf16.msra.mxu0 %v2131
    %2524 = vmatprep.subr.bf16.mxu0 %v2140
    %2525 = vmatpush1.bf16.msra.mxu0 %v2139
    %2526 = vmatprep.subr.bf16.mxu0 %v2148
    %2527 = vmatpush1.bf16.msra.mxu0 %v2147
    %2528 = vmatprep.subr.bf16.mxu0 %v2156
    %2529 = vmatpush1.bf16.msra.mxu0 %v2155
    %2530 = vmatprep.subr.bf16.mxu0 %v2164
    %2531 = vmatpush1.bf16.msra.mxu0 %v2163
    %2532 = vmatprep.subr.bf16.mxu0 %v2172
    %2533 = vmatpush1.bf16.msra.mxu0 %v2171
    %2534 = vmatprep.subr.bf16.mxu0 %v2180
    %2535 = vmatpush1.bf16.msra.mxu0 %v2179
    %2536 = vmatprep.subr.bf16.mxu0 %v2188
    %2537 = vmatpush1.bf16.msra.mxu0 %v2187
    %2538 = vmatprep.subr.bf16.mxu0 %v2196
    %2539 = vmatpush1.bf16.msra.mxu0 %v2195
    %2540 = vmatprep.subr.bf16.mxu0 %v2204
    %2541 = vmatpush1.bf16.msra.mxu0 %v2203
    %2542 = vmatprep.mubr.bf16.mxu0 %v888
    %2543 = vmatmul.mubr.bf16.gmra.mrb[0].mxu0 %v887
    %v2544 = vpop.f32.mrb[0].mxu0
    %v2545 = vadd.f32 %v2502, %v2544
    %v2546 = vpop.f32.mrb[0].mxu0
    %v2547 = vadd.f32 %v2504, %v2546
    %v2548 = vpop.f32.mrb[0].mxu0
    %v2549 = vadd.f32 %v2506, %v2548
    %v2550 = vpop.f32.mrb[0].mxu0
    %v2551 = vadd.f32 %v2508, %v2550
    %2552 = vdwg.mxu0
    %2553 = vmatprep.subr.bf16.mxu0 %v1958
    %2554 = vmatpush1.bf16.msra.mxu0 %v1957
    %2555 = vmatprep.subr.bf16.mxu0 %v1966
    %2556 = vmatpush1.bf16.msra.mxu0 %v1965
    %2557 = vmatprep.subr.bf16.mxu0 %v1974
    %2558 = vmatpush1.bf16.msra.mxu0 %v1973
    %2559 = vmatprep.subr.bf16.mxu0 %v1982
    %2560 = vmatpush1.bf16.msra.mxu0 %v1981
    %2561 = vmatprep.subr.bf16.mxu0 %v1990
    %2562 = vmatpush1.bf16.msra.mxu0 %v1989
    %2563 = vmatprep.subr.bf16.mxu0 %v1998
    %2564 = vmatpush1.bf16.msra.mxu0 %v1997
    %2565 = vmatprep.subr.bf16.mxu0 %v2006
    %2566 = vmatpush1.bf16.msra.mxu0 %v2005
    %2567 = vmatprep.subr.bf16.mxu0 %v2014
    %2568 = vmatpush1.bf16.msra.mxu0 %v2013
    %2569 = vmatprep.subr.bf16.mxu0 %v2022
    %2570 = vmatpush1.bf16.msra.mxu0 %v2021
    %2571 = vmatprep.subr.bf16.mxu0 %v2030
    %2572 = vmatpush1.bf16.msra.mxu0 %v2029
    %2573 = vmatprep.subr.bf16.mxu0 %v2038
    %2574 = vmatpush1.bf16.msra.mxu0 %v2037
    %2575 = vmatprep.subr.bf16.mxu0 %v2046
    %2576 = vmatpush1.bf16.msra.mxu0 %v2045
    %2577 = vmatprep.subr.bf16.mxu0 %v2054
    %2578 = vmatpush1.bf16.msra.mxu0 %v2053
    %2579 = vmatprep.subr.bf16.mxu0 %v2062
    %2580 = vmatpush1.bf16.msra.mxu0 %v2061
    %2581 = vmatprep.subr.bf16.mxu0 %v2070
    %2582 = vmatpush1.bf16.msra.mxu0 %v2069
    %2583 = vmatprep.subr.bf16.mxu0 %v2078
    %2584 = vmatpush1.bf16.msra.mxu0 %v2077
    %2585 = vmatprep.mubr.bf16.mxu0 %v886
    %2586 = vmatmul.mubr.bf16.gmra.mrb[0].mxu0 %v885
    %v2587 = vpop.f32.mrb[0].mxu0
    %v2588 = vadd.f32 %v1158, %v2587
    %v2589 = vpop.f32.mrb[0].mxu0
    %v2590 = vadd.f32 %v1162, %v2589
    %v2591 = vpop.f32.mrb[0].mxu0
    %v2592 = vadd.f32 %v1158, %v2591
    %v2593 = vpop.f32.mrb[0].mxu0
    %v2594 = vadd.f32 %v1162, %v2593
    %2595 = vdwg.mxu0
    %2596 = vmatprep.subr.bf16.mxu0 %v2086
    %2597 = vmatpush1.bf16.msra.mxu0 %v2085
    %2598 = vmatprep.subr.bf16.mxu0 %v2094
    %2599 = vmatpush1.bf16.msra.mxu0 %v2093
    %2600 = vmatprep.subr.bf16.mxu0 %v2102
    %2601 = vmatpush1.bf16.msra.mxu0 %v2101
    %2602 = vmatprep.subr.bf16.mxu0 %v2110
    %2603 = vmatpush1.bf16.msra.mxu0 %v2109
    %2604 = vmatprep.subr.bf16.mxu0 %v2118
    %2605 = vmatpush1.bf16.msra.mxu0 %v2117
    %2606 = vmatprep.subr.bf16.mxu0 %v2126
    %2607 = vmatpush1.bf16.msra.mxu0 %v2125
    %2608 = vmatprep.subr.bf16.mxu0 %v2134
    %2609 = vmatpush1.bf16.msra.mxu0 %v2133
    %2610 = vmatprep.subr.bf16.mxu0 %v2142
    %2611 = vmatpush1.bf16.msra.mxu0 %v2141
    %2612 = vmatprep.subr.bf16.mxu0 %v2150
    %2613 = vmatpush1.bf16.msra.mxu0 %v2149
    %2614 = vmatprep.subr.bf16.mxu0 %v2158
    %2615 = vmatpush1.bf16.msra.mxu0 %v2157
    %2616 = vmatprep.subr.bf16.mxu0 %v2166
    %2617 = vmatpush1.bf16.msra.mxu0 %v2165
    %2618 = vmatprep.subr.bf16.mxu0 %v2174
    %2619 = vmatpush1.bf16.msra.mxu0 %v2173
    %2620 = vmatprep.subr.bf16.mxu0 %v2182
    %2621 = vmatpush1.bf16.msra.mxu0 %v2181
    %2622 = vmatprep.subr.bf16.mxu0 %v2190
    %2623 = vmatpush1.bf16.msra.mxu0 %v2189
    %2624 = vmatprep.subr.bf16.mxu0 %v2198
    %2625 = vmatpush1.bf16.msra.mxu0 %v2197
    %2626 = vmatprep.subr.bf16.mxu0 %v2206
    %2627 = vmatpush1.bf16.msra.mxu0 %v2205
    %2628 = vmatprep.mubr.bf16.mxu0 %v888
    %2629 = vmatmul.mubr.bf16.gmra.mrb[0].mxu0 %v887
    %v2630 = vpop.f32.mrb[0].mxu0
    %v2631 = vadd.f32 %v2588, %v2630
    %v2632 = vpop.f32.mrb[0].mxu0
    %v2633 = vadd.f32 %v2590, %v2632
    %v2634 = vpop.f32.mrb[0].mxu0
    %v2635 = vadd.f32 %v2592, %v2634
    %v2636 = vpop.f32.mrb[0].mxu0
    %v2637 = vadd.f32 %v2594, %v2636
    %2638 = vdwg.mxu0
    %2639 = vmatprep.subr.bf16.mxu0 %v1960
    %2640 = vmatpush1.bf16.msra.mxu0 %v1959
    %2641 = vmatprep.subr.bf16.mxu0 %v1968
    %2642 = vmatpush1.bf16.msra.mxu0 %v1967
    %2643 = vmatprep.subr.bf16.mxu0 %v1976
    %2644 = vmatpush1.bf16.msra.mxu0 %v1975
    %2645 = vmatprep.subr.bf16.mxu0 %v1984
    %2646 = vmatpush1.bf16.msra.mxu0 %v1983
    %2647 = vmatprep.subr.bf16.mxu0 %v1992
    %2648 = vmatpush1.bf16.msra.mxu0 %v1991
    %2649 = vmatprep.subr.bf16.mxu0 %v2000
    %2650 = vmatpush1.bf16.msra.mxu0 %v1999
    %2651 = vmatprep.subr.bf16.mxu0 %v2008
    %2652 = vmatpush1.bf16.msra.mxu0 %v2007
    %2653 = vmatprep.subr.bf16.mxu0 %v2016
    %2654 = vmatpush1.bf16.msra.mxu0 %v2015
    %2655 = vmatprep.subr.bf16.mxu0 %v2024
    %2656 = vmatpush1.bf16.msra.mxu0 %v2023
    %2657 = vmatprep.subr.bf16.mxu0 %v2032
    %2658 = vmatpush1.bf16.msra.mxu0 %v2031
    %2659 = vmatprep.subr.bf16.mxu0 %v2040
    %2660 = vmatpush1.bf16.msra.mxu0 %v2039
    %2661 = vmatprep.subr.bf16.mxu0 %v2048
    %2662 = vmatpush1.bf16.msra.mxu0 %v2047
    %2663 = vmatprep.subr.bf16.mxu0 %v2056
    %2664 = vmatpush1.bf16.msra.mxu0 %v2055
    %2665 = vmatprep.subr.bf16.mxu0 %v2064
    %2666 = vmatpush1.bf16.msra.mxu0 %v2063
    %2667 = vmatprep.subr.bf16.mxu0 %v2072
    %2668 = vmatpush1.bf16.msra.mxu0 %v2071
    %2669 = vmatprep.subr.bf16.mxu0 %v2080
    %2670 = vmatpush1.bf16.msra.mxu0 %v2079
    %2671 = vmatprep.mubr.bf16.mxu0 %v886
    %2672 = vmatmul.mubr.bf16.gmra.mrb[0].mxu0 %v885
    %v2673 = vpop.f32.mrb[0].mxu0
    %v2674 = vadd.f32 %v1166, %v2673
    %v2675 = vpop.f32.mrb[0].mxu0
    %v2676 = vadd.f32 %v1170, %v2675
    %v2677 = vpop.f32.mrb[0].mxu0
    %v2678 = vadd.f32 %v1166, %v2677
    %v2679 = vpop.f32.mrb[0].mxu0
    %v2680 = vadd.f32 %v1170, %v2679
    %2681 = vdwg.mxu0
    %2682 = vmatprep.subr.bf16.mxu0 %v2088
    %2683 = vmatpush1.bf16.msra.mxu0 %v2087
    %2684 = vmatprep.subr.bf16.mxu0 %v2096
    %2685 = vmatpush1.bf16.msra.mxu0 %v2095
    %2686 = vmatprep.subr.bf16.mxu0 %v2104
    %2687 = vmatpush1.bf16.msra.mxu0 %v2103
    %2688 = vmatprep.subr.bf16.mxu0 %v2112
    %2689 = vmatpush1.bf16.msra.mxu0 %v2111
    %2690 = vmatprep.subr.bf16.mxu0 %v2120
    %2691 = vmatpush1.bf16.msra.mxu0 %v2119
    %2692 = vmatprep.subr.bf16.mxu0 %v2128
    %2693 = vmatpush1.bf16.msra.mxu0 %v2127
    %2694 = vmatprep.subr.bf16.mxu0 %v2136
    %2695 = vmatpush1.bf16.msra.mxu0 %v2135
    %2696 = vmatprep.subr.bf16.mxu0 %v2144
    %2697 = vmatpush1.bf16.msra.mxu0 %v2143
    %2698 = vmatprep.subr.bf16.mxu0 %v2152
    %2699 = vmatpush1.bf16.msra.mxu0 %v2151
    %2700 = vmatprep.subr.bf16.mxu0 %v2160
    %2701 = vmatpush1.bf16.msra.mxu0 %v2159
    %2702 = vmatprep.subr.bf16.mxu0 %v2168
    %2703 = vmatpush1.bf16.msra.mxu0 %v2167
    %2704 = vmatprep.subr.bf16.mxu0 %v2176
    %2705 = vmatpush1.bf16.msra.mxu0 %v2175
    %2706 = vmatprep.subr.bf16.mxu0 %v2184
    %2707 = vmatpush1.bf16.msra.mxu0 %v2183
    %2708 = vmatprep.subr.bf16.mxu0 %v2192
    %2709 = vmatpush1.bf16.msra.mxu0 %v2191
    %2710 = vmatprep.subr.bf16.mxu0 %v2200
    %2711 = vmatpush1.bf16.msra.mxu0 %v2199
    %2712 = vmatprep.subr.bf16.mxu0 %v2208
    %2713 = vmatpush1.bf16.msra.mxu0 %v2207
    %2714 = vmatprep.mubr.bf16.mxu0 %v888
    %2715 = vmatmul.mubr.bf16.gmra.mrb[0].mxu0 %v887
    %v2716 = vpop.f32.mrb[0].mxu0
    %v2717 = vadd.f32 %v2674, %v2716
    %v2718 = vpop.f32.mrb[0].mxu0
    %v2719 = vadd.f32 %v2676, %v2718
    %v2720 = vpop.f32.mrb[0].mxu0
    %v2721 = vadd.f32 %v2678, %v2720
    %v2722 = vpop.f32.mrb[0].mxu0
    %v2723 = vadd.f32 %v2680, %v2722
    %2724 = vdwg.mxu0
    %2725 = vmatprep.subr.bf16.mxu0 %v1962
    %2726 = vmatpush1.bf16.msra.mxu0 %v1961
    %2727 = vmatprep.subr.bf16.mxu0 %v1970
    %2728 = vmatpush1.bf16.msra.mxu0 %v1969
    %2729 = vmatprep.subr.bf16.mxu0 %v1978
    %2730 = vmatpush1.bf16.msra.mxu0 %v1977
    %2731 = vmatprep.subr.bf16.mxu0 %v1986
    %2732 = vmatpush1.bf16.msra.mxu0 %v1985
    %2733 = vmatprep.subr.bf16.mxu0 %v1994
    %2734 = vmatpush1.bf16.msra.mxu0 %v1993
    %2735 = vmatprep.subr.bf16.mxu0 %v2002
    %2736 = vmatpush1.bf16.msra.mxu0 %v2001
    %2737 = vmatprep.subr.bf16.mxu0 %v2010
    %2738 = vmatpush1.bf16.msra.mxu0 %v2009
    %2739 = vmatprep.subr.bf16.mxu0 %v2018
    %2740 = vmatpush1.bf16.msra.mxu0 %v2017
    %2741 = vmatprep.subr.bf16.mxu0 %v2026
    %2742 = vmatpush1.bf16.msra.mxu0 %v2025
    %2743 = vmatprep.subr.bf16.mxu0 %v2034
    %2744 = vmatpush1.bf16.msra.mxu0 %v2033
    %2745 = vmatprep.subr.bf16.mxu0 %v2042
    %2746 = vmatpush1.bf16.msra.mxu0 %v2041
    %2747 = vmatprep.subr.bf16.mxu0 %v2050
    %2748 = vmatpush1.bf16.msra.mxu0 %v2049
    %2749 = vmatprep.subr.bf16.mxu0 %v2058
    %2750 = vmatpush1.bf16.msra.mxu0 %v2057
    %2751 = vmatprep.subr.bf16.mxu0 %v2066
    %2752 = vmatpush1.bf16.msra.mxu0 %v2065
    %2753 = vmatprep.subr.bf16.mxu0 %v2074
    %2754 = vmatpush1.bf16.msra.mxu0 %v2073
    %2755 = vmatprep.subr.bf16.mxu0 %v2082
    %2756 = vmatpush1.bf16.msra.mxu0 %v2081
    %2757 = vmatprep.mubr.bf16.mxu0 %v886
    %2758 = vmatmul.mubr.bf16.gmra.mrb[0].mxu0 %v885
    %v2759 = vpop.f32.mrb[0].mxu0
    %v2760 = vadd.f32 %v1174, %v2759
    %v2761 = vpop.f32.mrb[0].mxu0
    %v2762 = vadd.f32 %v1178, %v2761
    %v2763 = vpop.f32.mrb[0].mxu0
    %v2764 = vadd.f32 %v1174, %v2763
    %v2765 = vpop.f32.mrb[0].mxu0
    %v2766 = vadd.f32 %v1178, %v2765
    %2767 = vdwg.mxu0
    %2768 = vmatprep.subr.bf16.mxu0 %v2090
    %2769 = vmatpush1.bf16.msra.mxu0 %v2089
    %2770 = vmatprep.subr.bf16.mxu0 %v2098
    %2771 = vmatpush1.bf16.msra.mxu0 %v2097
    %2772 = vmatprep.subr.bf16.mxu0 %v2106
    %2773 = vmatpush1.bf16.msra.mxu0 %v2105
    %2774 = vmatprep.subr.bf16.mxu0 %v2114
    %2775 = vmatpush1.bf16.msra.mxu0 %v2113
    %2776 = vmatprep.subr.bf16.mxu0 %v2122
    %2777 = vmatpush1.bf16.msra.mxu0 %v2121
    %2778 = vmatprep.subr.bf16.mxu0 %v2130
    %2779 = vmatpush1.bf16.msra.mxu0 %v2129
    %2780 = vmatprep.subr.bf16.mxu0 %v2138
    %2781 = vmatpush1.bf16.msra.mxu0 %v2137
    %2782 = vmatprep.subr.bf16.mxu0 %v2146
    %2783 = vmatpush1.bf16.msra.mxu0 %v2145
    %2784 = vmatprep.subr.bf16.mxu0 %v2154
    %2785 = vmatpush1.bf16.msra.mxu0 %v2153
    %2786 = vmatprep.subr.bf16.mxu0 %v2162
    %2787 = vmatpush1.bf16.msra.mxu0 %v2161
    %2788 = vmatprep.subr.bf16.mxu0 %v2170
    %2789 = vmatpush1.bf16.msra.mxu0 %v2169
    %2790 = vmatprep.subr.bf16.mxu0 %v2178
    %2791 = vmatpush1.bf16.msra.mxu0 %v2177
    %2792 = vmatprep.subr.bf16.mxu0 %v2186
    %2793 = vmatpush1.bf16.msra.mxu0 %v2185
    %2794 = vmatprep.subr.bf16.mxu0 %v2194
    %2795 = vmatpush1.bf16.msra.mxu0 %v2193
    %2796 = vmatprep.subr.bf16.mxu0 %v2202
    %2797 = vmatpush1.bf16.msra.mxu0 %v2201
    %2798 = vmatprep.subr.bf16.mxu0 %v2210
    %2799 = vmatpush1.bf16.msra.mxu0 %v2209
    %2800 = vmatprep.mubr.bf16.mxu0 %v888
    %2801 = vmatmul.mubr.bf16.gmra.mrb[0].mxu0 %v887
    %v2802 = vpop.f32.mrb[0].mxu0
    %v2803 = vadd.f32 %v2760, %v2802
    %v2804 = vpop.f32.mrb[0].mxu0
    %v2805 = vadd.f32 %v2762, %v2804
    %v2806 = vpop.f32.mrb[0].mxu0
    %v2807 = vadd.f32 %v2764, %v2806
    %v2808 = vpop.f32.mrb[0].mxu0
    %v2809 = vadd.f32 %v2766, %v2808
    %2810 = vdwg.mxu0
    %vm2811 = vcmp.gt.f32.partialorder %v2545, 0.0
    %vm2812 = vcmp.gt.f32.partialorder %v2547, 0.0
    %vm2813 = vcmp.gt.f32.partialorder %v2631, 0.0
    %vm2814 = vcmp.gt.f32.partialorder %v2633, 0.0
    %vm2815 = vcmp.gt.f32.partialorder %v2717, 0.0
    %vm2816 = vcmp.gt.f32.partialorder %v2719, 0.0
    %vm2817 = vcmp.gt.f32.partialorder %v2803, 0.0
    %vm2818 = vcmp.gt.f32.partialorder %v2805, 0.0
    %vm2819 = vcmp.gt.f32.partialorder %v2549, 0.0
    %vm2820 = vcmp.gt.f32.partialorder %v2551, 0.0
    %vm2821 = vcmp.gt.f32.partialorder %v2635, 0.0
    %vm2822 = vcmp.gt.f32.partialorder %v2637, 0.0
    %vm2823 = vcmp.gt.f32.partialorder %v2721, 0.0
    %vm2824 = vcmp.gt.f32.partialorder %v2723, 0.0
    %vm2825 = vcmp.gt.f32.partialorder %v2807, 0.0
    %vm2826 = vcmp.gt.f32.partialorder %v2809, 0.0
    %v2827 = vmul.f32 %v2545, 0.2
    %v2828 = vmul.f32 %v2547, 0.2
    %v2829 = vmul.f32 %v2631, 0.2
    %v2830 = vmul.f32 %v2633, 0.2
    %v2831 = vmul.f32 %v2717, 0.2
    %v2832 = vmul.f32 %v2719, 0.2
    %v2833 = vmul.f32 %v2803, 0.2
    %v2834 = vmul.f32 %v2805, 0.2
    %v2835 = vmul.f32 %v2549, 0.2
    %v2836 = vmul.f32 %v2551, 0.2
    %v2837 = vmul.f32 %v2635, 0.2
    %v2838 = vmul.f32 %v2637, 0.2
    %v2839 = vmul.f32 %v2721, 0.2
    %v2840 = vmul.f32 %v2723, 0.2
    %v2841 = vmul.f32 %v2807, 0.2
    %v2842 = vmul.f32 %v2809, 0.2
    %v2843 = vsel %vm2811, %v2545, %v2827
    %v2844 = vsel %vm2812, %v2547, %v2828
    %v2845 = vsel %vm2813, %v2631, %v2829
    %v2846 = vsel %vm2814, %v2633, %v2830
    %v2847 = vsel %vm2815, %v2717, %v2831
    %v2848 = vsel %vm2816, %v2719, %v2832
    %v2849 = vsel %vm2817, %v2803, %v2833
    %v2850 = vsel %vm2818, %v2805, %v2834
    %v2851 = vsel %vm2819, %v2549, %v2835
    %v2852 = vsel %vm2820, %v2551, %v2836
    %v2853 = vsel %vm2821, %v2635, %v2837
    %v2854 = vsel %vm2822, %v2637, %v2838
    %v2855 = vsel %vm2823, %v2721, %v2839
    %v2856 = vsel %vm2824, %v2723, %v2840
    %v2857 = vsel %vm2825, %v2807, %v2841
    %v2858 = vsel %vm2826, %v2809, %v2842
    %v2859 = vpack.c.bf16 %v2851, %v2843
    %v2860 = vpack.c.bf16 %v2852, %v2844
    %v2861 = vpack.c.bf16 %v2853, %v2845
    %v2862 = vpack.c.bf16 %v2854, %v2846
    %v2863 = vpack.c.bf16 %v2855, %v2847
    %v2864 = vpack.c.bf16 %v2856, %v2848
    %v2865 = vpack.c.bf16 %v2857, %v2849
    %v2866 = vpack.c.bf16 %v2858, %v2850
    %v2867 = vld [vmem:[#allocation11] sm:$0xf]
    %v2868 = vld [vmem:[#allocation11 + $0x4] sm:$0xf]
    %v2869 = vld [vmem:[#allocation11 + $0x8] sm:$0xf]
    %v2870 = vld [vmem:[#allocation11 + $0xc] sm:$0xf]
    %v2871 = vld [vmem:[#allocation11 + $0x10] sm:$0xf]
    %v2872 = vld [vmem:[#allocation11 + $0x14] sm:$0xf]
    %v2873 = vld [vmem:[#allocation11 + $0x18] sm:$0xf]
    %v2874 = vld [vmem:[#allocation11 + $0x1c] sm:$0xf]
    %v2875 = vld [vmem:[#allocation11 + $0x20] sm:$0xf]
    %v2876 = vld [vmem:[#allocation11 + $0x24] sm:$0xf]
    %v2877 = vld [vmem:[#allocation11 + $0x28] sm:$0xf]
    %v2878 = vld [vmem:[#allocation11 + $0x2c] sm:$0xf]
    %v2879 = vld [vmem:[#allocation11 + $0x30] sm:$0xf]
    %v2880 = vld [vmem:[#allocation11 + $0x34] sm:$0xf]
    %v2881 = vld [vmem:[#allocation11 + $0x38] sm:$0xf]
    %v2882 = vld [vmem:[#allocation11 + $0x3c] sm:$0xf]
    %v2883 = vld [vmem:[#allocation11 + $0x40] sm:$0xf]
    %v2884 = vld [vmem:[#allocation11 + $0x44] sm:$0xf]
    %v2885 = vld [vmem:[#allocation11 + $0x48] sm:$0xf]
    %v2886 = vld [vmem:[#allocation11 + $0x4c] sm:$0xf]
    %v2887 = vld [vmem:[#allocation11 + $0x50] sm:$0xf]
    %v2888 = vld [vmem:[#allocation11 + $0x54] sm:$0xf]
    %v2889 = vld [vmem:[#allocation11 + $0x58] sm:$0xf]
    %v2890 = vld [vmem:[#allocation11 + $0x5c] sm:$0xf]
    %v2891 = vld [vmem:[#allocation11 + $0x60] sm:$0xf]
    %v2892 = vld [vmem:[#allocation11 + $0x64] sm:$0xf]
    %v2893 = vld [vmem:[#allocation11 + $0x68] sm:$0xf]
    %v2894 = vld [vmem:[#allocation11 + $0x6c] sm:$0xf]
    %v2895 = vld [vmem:[#allocation11 + $0x70] sm:$0xf]
    %v2896 = vld [vmem:[#allocation11 + $0x74] sm:$0xf]
    %v2897 = vld [vmem:[#allocation11 + $0x78] sm:$0xf]
    %v2898 = vld [vmem:[#allocation11 + $0x7c] sm:$0xf]
    %v2899 = vld [vmem:[#allocation11 + $0x80] sm:$0xf]
    %v2900 = vld [vmem:[#allocation11 + $0x84] sm:$0xf]
    %v2901 = vld [vmem:[#allocation11 + $0x88] sm:$0xf]
    %v2902 = vld [vmem:[#allocation11 + $0x8c] sm:$0xf]
    %v2903 = vld [vmem:[#allocation11 + $0x90] sm:$0xf]
    %v2904 = vld [vmem:[#allocation11 + $0x94] sm:$0xf]
    %v2905 = vld [vmem:[#allocation11 + $0x98] sm:$0xf]
    %v2906 = vld [vmem:[#allocation11 + $0x9c] sm:$0xf]
    %v2907 = vld [vmem:[#allocation11 + $0xa0] sm:$0xf]
    %v2908 = vld [vmem:[#allocation11 + $0xa4] sm:$0xf]
    %v2909 = vld [vmem:[#allocation11 + $0xa8] sm:$0xf]
    %v2910 = vld [vmem:[#allocation11 + $0xac] sm:$0xf]
    %v2911 = vld [vmem:[#allocation11 + $0xb0] sm:$0xf]
    %v2912 = vld [vmem:[#allocation11 + $0xb4] sm:$0xf]
    %v2913 = vld [vmem:[#allocation11 + $0xb8] sm:$0xf]
    %v2914 = vld [vmem:[#allocation11 + $0xbc] sm:$0xf]
    %v2915 = vld [vmem:[#allocation11 + $0xc0] sm:$0xf]
    %v2916 = vld [vmem:[#allocation11 + $0xc4] sm:$0xf]
    %v2917 = vld [vmem:[#allocation11 + $0xc8] sm:$0xf]
    %v2918 = vld [vmem:[#allocation11 + $0xcc] sm:$0xf]
    %v2919 = vld [vmem:[#allocation11 + $0xd0] sm:$0xf]
    %v2920 = vld [vmem:[#allocation11 + $0xd4] sm:$0xf]
    %v2921 = vld [vmem:[#allocation11 + $0xd8] sm:$0xf]
    %v2922 = vld [vmem:[#allocation11 + $0xdc] sm:$0xf]
    %v2923 = vld [vmem:[#allocation11 + $0xe0] sm:$0xf]
    %v2924 = vld [vmem:[#allocation11 + $0xe4] sm:$0xf]
    %v2925 = vld [vmem:[#allocation11 + $0xe8] sm:$0xf]
    %v2926 = vld [vmem:[#allocation11 + $0xec] sm:$0xf]
    %v2927 = vld [vmem:[#allocation11 + $0xf0] sm:$0xf]
    %v2928 = vld [vmem:[#allocation11 + $0xf4] sm:$0xf]
    %v2929 = vld [vmem:[#allocation11 + $0xf8] sm:$0xf]
    %v2930 = vld [vmem:[#allocation11 + $0xfc] sm:$0xf]
    %v2931 = vld [vmem:[#allocation11 + $0x100] sm:$0xf]
    %v2932 = vld [vmem:[#allocation11 + $0x104] sm:$0xf]
    %v2933 = vld [vmem:[#allocation11 + $0x108] sm:$0xf]
    %v2934 = vld [vmem:[#allocation11 + $0x10c] sm:$0xf]
    %v2935 = vld [vmem:[#allocation11 + $0x110] sm:$0xf]
    %v2936 = vld [vmem:[#allocation11 + $0x114] sm:$0xf]
    %v2937 = vld [vmem:[#allocation11 + $0x118] sm:$0xf]
    %v2938 = vld [vmem:[#allocation11 + $0x11c] sm:$0xf]
    %v2939 = vld [vmem:[#allocation11 + $0x120] sm:$0xf]
    %v2940 = vld [vmem:[#allocation11 + $0x124] sm:$0xf]
    %v2941 = vld [vmem:[#allocation11 + $0x128] sm:$0xf]
    %v2942 = vld [vmem:[#allocation11 + $0x12c] sm:$0xf]
    %v2943 = vld [vmem:[#allocation11 + $0x130] sm:$0xf]
    %v2944 = vld [vmem:[#allocation11 + $0x134] sm:$0xf]
    %v2945 = vld [vmem:[#allocation11 + $0x138] sm:$0xf]
    %v2946 = vld [vmem:[#allocation11 + $0x13c] sm:$0xf]
    %v2947 = vld [vmem:[#allocation11 + $0x140] sm:$0xf]
    %v2948 = vld [vmem:[#allocation11 + $0x144] sm:$0xf]
    %v2949 = vld [vmem:[#allocation11 + $0x148] sm:$0xf]
    %v2950 = vld [vmem:[#allocation11 + $0x14c] sm:$0xf]
    %v2951 = vld [vmem:[#allocation11 + $0x150] sm:$0xf]
    %v2952 = vld [vmem:[#allocation11 + $0x154] sm:$0xf]
    %v2953 = vld [vmem:[#allocation11 + $0x158] sm:$0xf]
    %v2954 = vld [vmem:[#allocation11 + $0x15c] sm:$0xf]
    %v2955 = vld [vmem:[#allocation11 + $0x160] sm:$0xf]
    %v2956 = vld [vmem:[#allocation11 + $0x164] sm:$0xf]
    %v2957 = vld [vmem:[#allocation11 + $0x168] sm:$0xf]
    %v2958 = vld [vmem:[#allocation11 + $0x16c] sm:$0xf]
    %v2959 = vld [vmem:[#allocation11 + $0x170] sm:$0xf]
    %v2960 = vld [vmem:[#allocation11 + $0x174] sm:$0xf]
    %v2961 = vld [vmem:[#allocation11 + $0x178] sm:$0xf]
    %v2962 = vld [vmem:[#allocation11 + $0x17c] sm:$0xf]
    %v2963 = vld [vmem:[#allocation11 + $0x180] sm:$0xf]
    %v2964 = vld [vmem:[#allocation11 + $0x184] sm:$0xf]
    %v2965 = vld [vmem:[#allocation11 + $0x188] sm:$0xf]
    %v2966 = vld [vmem:[#allocation11 + $0x18c] sm:$0xf]
    %v2967 = vld [vmem:[#allocation11 + $0x190] sm:$0xf]
    %v2968 = vld [vmem:[#allocation11 + $0x194] sm:$0xf]
    %v2969 = vld [vmem:[#allocation11 + $0x198] sm:$0xf]
    %v2970 = vld [vmem:[#allocation11 + $0x19c] sm:$0xf]
    %v2971 = vld [vmem:[#allocation11 + $0x1a0] sm:$0xf]
    %v2972 = vld [vmem:[#allocation11 + $0x1a4] sm:$0xf]
    %v2973 = vld [vmem:[#allocation11 + $0x1a8] sm:$0xf]
    %v2974 = vld [vmem:[#allocation11 + $0x1ac] sm:$0xf]
    %v2975 = vld [vmem:[#allocation11 + $0x1b0] sm:$0xf]
    %v2976 = vld [vmem:[#allocation11 + $0x1b4] sm:$0xf]
    %v2977 = vld [vmem:[#allocation11 + $0x1b8] sm:$0xf]
    %v2978 = vld [vmem:[#allocation11 + $0x1bc] sm:$0xf]
    %v2979 = vld [vmem:[#allocation11 + $0x1c0] sm:$0xf]
    %v2980 = vld [vmem:[#allocation11 + $0x1c4] sm:$0xf]
    %v2981 = vld [vmem:[#allocation11 + $0x1c8] sm:$0xf]
    %v2982 = vld [vmem:[#allocation11 + $0x1cc] sm:$0xf]
    %v2983 = vld [vmem:[#allocation11 + $0x1d0] sm:$0xf]
    %v2984 = vld [vmem:[#allocation11 + $0x1d4] sm:$0xf]
    %v2985 = vld [vmem:[#allocation11 + $0x1d8] sm:$0xf]
    %v2986 = vld [vmem:[#allocation11 + $0x1dc] sm:$0xf]
    %v2987 = vld [vmem:[#allocation11 + $0x1e0] sm:$0xf]
    %v2988 = vld [vmem:[#allocation11 + $0x1e4] sm:$0xf]
    %v2989 = vld [vmem:[#allocation11 + $0x1e8] sm:$0xf]
    %v2990 = vld [vmem:[#allocation11 + $0x1ec] sm:$0xf]
    %v2991 = vld [vmem:[#allocation11 + $0x1f0] sm:$0xf]
    %v2992 = vld [vmem:[#allocation11 + $0x1f4] sm:$0xf]
    %v2993 = vld [vmem:[#allocation11 + $0x1f8] sm:$0xf]
    %v2994 = vld [vmem:[#allocation11 + $0x1fc] sm:$0xf]
    %v2995 = vld [vmem:[%s10] sm:$0x1]
    %v2997 = vlaneseq
    %v2998 = vshrl.u32 %v2997, 7
    %v2999 = vsub.s32 0, %v2998
    %v3000 = vrot.slane %v2995, %v2999
    %v3130 = vunpack.c.l.b16 %v2867
    %v3131 = vunpack.c.l.b16 %v2868
    %v3132 = vunpack.c.l.b16 %v2869
    %v3133 = vunpack.c.l.b16 %v2870
    %v3134 = vunpack.c.l.b16 %v2871
    %v3135 = vunpack.c.l.b16 %v2872
    %v3136 = vunpack.c.l.b16 %v2873
    %v3137 = vunpack.c.l.b16 %v2874
    %v3138 = vunpack.c.l.b16 %v2875
    %v3139 = vunpack.c.l.b16 %v2876
    %v3140 = vunpack.c.l.b16 %v2877
    %v3141 = vunpack.c.l.b16 %v2878
    %v3142 = vunpack.c.l.b16 %v2879
    %v3143 = vunpack.c.l.b16 %v2880
    %v3144 = vunpack.c.l.b16 %v2881
    %v3145 = vunpack.c.l.b16 %v2882
    %v3146 = vunpack.c.l.b16 %v2883
    %v3147 = vunpack.c.l.b16 %v2884
    %v3148 = vunpack.c.l.b16 %v2885
    %v3149 = vunpack.c.l.b16 %v2886
    %v3150 = vunpack.c.l.b16 %v2887
    %v3151 = vunpack.c.l.b16 %v2888
    %v3152 = vunpack.c.l.b16 %v2889
    %v3153 = vunpack.c.l.b16 %v2890
    %v3154 = vunpack.c.l.b16 %v2891
    %v3155 = vunpack.c.l.b16 %v2892
    %v3156 = vunpack.c.l.b16 %v2893
    %v3157 = vunpack.c.l.b16 %v2894
    %v3158 = vunpack.c.l.b16 %v2895
    %v3159 = vunpack.c.l.b16 %v2896
    %v3160 = vunpack.c.l.b16 %v2897
    %v3161 = vunpack.c.l.b16 %v2898
    %v3162 = vunpack.c.l.b16 %v2899
    %v3163 = vunpack.c.l.b16 %v2900
    %v3164 = vunpack.c.l.b16 %v2901
    %v3165 = vunpack.c.l.b16 %v2902
    %v3166 = vunpack.c.l.b16 %v2903
    %v3167 = vunpack.c.l.b16 %v2904
    %v3168 = vunpack.c.l.b16 %v2905
    %v3169 = vunpack.c.l.b16 %v2906
    %v3170 = vunpack.c.l.b16 %v2907
    %v3171 = vunpack.c.l.b16 %v2908
    %v3172 = vunpack.c.l.b16 %v2909
    %v3173 = vunpack.c.l.b16 %v2910
    %v3174 = vunpack.c.l.b16 %v2911
    %v3175 = vunpack.c.l.b16 %v2912
    %v3176 = vunpack.c.l.b16 %v2913
    %v3177 = vunpack.c.l.b16 %v2914
    %v3178 = vunpack.c.l.b16 %v2915
    %v3179 = vunpack.c.l.b16 %v2916
    %v3180 = vunpack.c.l.b16 %v2917
    %v3181 = vunpack.c.l.b16 %v2918
    %v3182 = vunpack.c.l.b16 %v2919
    %v3183 = vunpack.c.l.b16 %v2920
    %v3184 = vunpack.c.l.b16 %v2921
    %v3185 = vunpack.c.l.b16 %v2922
    %v3186 = vunpack.c.l.b16 %v2923
    %v3187 = vunpack.c.l.b16 %v2924
    %v3188 = vunpack.c.l.b16 %v2925
    %v3189 = vunpack.c.l.b16 %v2926
    %v3190 = vunpack.c.l.b16 %v2927
    %v3191 = vunpack.c.l.b16 %v2928
    %v3192 = vunpack.c.l.b16 %v2929
    %v3193 = vunpack.c.l.b16 %v2930
    %v3194 = vunpack.c.l.b16 %v2931
    %v3195 = vunpack.c.l.b16 %v2932
    %v3196 = vunpack.c.l.b16 %v2933
    %v3197 = vunpack.c.l.b16 %v2934
    %v3198 = vunpack.c.l.b16 %v2935
    %v3199 = vunpack.c.l.b16 %v2936
    %v3200 = vunpack.c.l.b16 %v2937
    %v3201 = vunpack.c.l.b16 %v2938
    %v3202 = vunpack.c.l.b16 %v2939
    %v3203 = vunpack.c.l.b16 %v2940
    %v3204 = vunpack.c.l.b16 %v2941
    %v3205 = vunpack.c.l.b16 %v2942
    %v3206 = vunpack.c.l.b16 %v2943
    %v3207 = vunpack.c.l.b16 %v2944
    %v3208 = vunpack.c.l.b16 %v2945
    %v3209 = vunpack.c.l.b16 %v2946
    %v3210 = vunpack.c.l.b16 %v2947
    %v3211 = vunpack.c.l.b16 %v2948
    %v3212 = vunpack.c.l.b16 %v2949
    %v3213 = vunpack.c.l.b16 %v2950
    %v3214 = vunpack.c.l.b16 %v2951
    %v3215 = vunpack.c.l.b16 %v2952
    %v3216 = vunpack.c.l.b16 %v2953
    %v3217 = vunpack.c.l.b16 %v2954
    %v3218 = vunpack.c.l.b16 %v2955
    %v3219 = vunpack.c.l.b16 %v2956
    %v3220 = vunpack.c.l.b16 %v2957
    %v3221 = vunpack.c.l.b16 %v2958
    %v3222 = vunpack.c.l.b16 %v2959
    %v3223 = vunpack.c.l.b16 %v2960
    %v3224 = vunpack.c.l.b16 %v2961
    %v3225 = vunpack.c.l.b16 %v2962
    %v3226 = vunpack.c.l.b16 %v2963
    %v3227 = vunpack.c.l.b16 %v2964
    %v3228 = vunpack.c.l.b16 %v2965
    %v3229 = vunpack.c.l.b16 %v2966
    %v3230 = vunpack.c.l.b16 %v2967
    %v3231 = vunpack.c.l.b16 %v2968
    %v3232 = vunpack.c.l.b16 %v2969
    %v3233 = vunpack.c.l.b16 %v2970
    %v3234 = vunpack.c.l.b16 %v2971
    %v3235 = vunpack.c.l.b16 %v2972
    %v3236 = vunpack.c.l.b16 %v2973
    %v3237 = vunpack.c.l.b16 %v2974
    %v3238 = vunpack.c.l.b16 %v2975
    %v3239 = vunpack.c.l.b16 %v2976
    %v3240 = vunpack.c.l.b16 %v2977
    %v3241 = vunpack.c.l.b16 %v2978
    %v3242 = vunpack.c.l.b16 %v2979
    %v3243 = vunpack.c.l.b16 %v2980
    %v3244 = vunpack.c.l.b16 %v2981
    %v3245 = vunpack.c.l.b16 %v2982
    %v3246 = vunpack.c.l.b16 %v2983
    %v3247 = vunpack.c.l.b16 %v2984
    %v3248 = vunpack.c.l.b16 %v2985
    %v3249 = vunpack.c.l.b16 %v2986
    %v3250 = vunpack.c.l.b16 %v2987
    %v3251 = vunpack.c.l.b16 %v2988
    %v3252 = vunpack.c.l.b16 %v2989
    %v3253 = vunpack.c.l.b16 %v2990
    %v3254 = vunpack.c.l.b16 %v2991
    %v3255 = vunpack.c.l.b16 %v2992
    %v3256 = vunpack.c.l.b16 %v2993
    %v3257 = vunpack.c.l.b16 %v2994
    %v3258 = vpack.c.b16 %v3131, %v3130
    %v3259 = vpack.c.b16 %v3133, %v3132
    %v3260 = vpack.c.b16 %v3135, %v3134
    %v3261 = vpack.c.b16 %v3137, %v3136
    %v3262 = vpack.c.b16 %v3139, %v3138
    %v3263 = vpack.c.b16 %v3141, %v3140
    %v3264 = vpack.c.b16 %v3143, %v3142
    %v3265 = vpack.c.b16 %v3145, %v3144
    %v3266 = vpack.c.b16 %v3147, %v3146
    %v3267 = vpack.c.b16 %v3149, %v3148
    %v3268 = vpack.c.b16 %v3151, %v3150
    %v3269 = vpack.c.b16 %v3153, %v3152
    %v3270 = vpack.c.b16 %v3155, %v3154
    %v3271 = vpack.c.b16 %v3157, %v3156
    %v3272 = vpack.c.b16 %v3159, %v3158
    %v3273 = vpack.c.b16 %v3161, %v3160
    %v3274 = vpack.c.b16 %v3163, %v3162
    %v3275 = vpack.c.b16 %v3165, %v3164
    %v3276 = vpack.c.b16 %v3167, %v3166
    %v3277 = vpack.c.b16 %v3169, %v3168
    %v3278 = vpack.c.b16 %v3171, %v3170
    %v3279 = vpack.c.b16 %v3173, %v3172
    %v3280 = vpack.c.b16 %v3175, %v3174
    %v3281 = vpack.c.b16 %v3177, %v3176
    %v3282 = vpack.c.b16 %v3179, %v3178
    %v3283 = vpack.c.b16 %v3181, %v3180
    %v3284 = vpack.c.b16 %v3183, %v3182
    %v3285 = vpack.c.b16 %v3185, %v3184
    %v3286 = vpack.c.b16 %v3187, %v3186
    %v3287 = vpack.c.b16 %v3189, %v3188
    %v3288 = vpack.c.b16 %v3191, %v3190
    %v3289 = vpack.c.b16 %v3193, %v3192
    %v3290 = vpack.c.b16 %v3195, %v3194
    %v3291 = vpack.c.b16 %v3197, %v3196
    %v3292 = vpack.c.b16 %v3199, %v3198
    %v3293 = vpack.c.b16 %v3201, %v3200
    %v3294 = vpack.c.b16 %v3203, %v3202
    %v3295 = vpack.c.b16 %v3205, %v3204
    %v3296 = vpack.c.b16 %v3207, %v3206
    %v3297 = vpack.c.b16 %v3209, %v3208
    %v3298 = vpack.c.b16 %v3211, %v3210
    %v3299 = vpack.c.b16 %v3213, %v3212
    %v3300 = vpack.c.b16 %v3215, %v3214
    %v3301 = vpack.c.b16 %v3217, %v3216
    %v3302 = vpack.c.b16 %v3219, %v3218
    %v3303 = vpack.c.b16 %v3221, %v3220
    %v3304 = vpack.c.b16 %v3223, %v3222
    %v3305 = vpack.c.b16 %v3225, %v3224
    %v3306 = vpack.c.b16 %v3227, %v3226
    %v3307 = vpack.c.b16 %v3229, %v3228
    %v3308 = vpack.c.b16 %v3231, %v3230
    %v3309 = vpack.c.b16 %v3233, %v3232
    %v3310 = vpack.c.b16 %v3235, %v3234
    %v3311 = vpack.c.b16 %v3237, %v3236
    %v3312 = vpack.c.b16 %v3239, %v3238
    %v3313 = vpack.c.b16 %v3241, %v3240
    %v3314 = vpack.c.b16 %v3243, %v3242
    %v3315 = vpack.c.b16 %v3245, %v3244
    %v3316 = vpack.c.b16 %v3247, %v3246
    %v3317 = vpack.c.b16 %v3249, %v3248
    %v3318 = vpack.c.b16 %v3251, %v3250
    %v3319 = vpack.c.b16 %v3253, %v3252
    %v3320 = vpack.c.b16 %v3255, %v3254
    %v3321 = vpack.c.b16 %v3257, %v3256
    %3386 = vmatprep.subr.bf16.mxu0 0
    %3387 = vmatpush1.bf16.msra.mxu0 %v3258
    %3388 = vmatprep.subr.bf16.mxu0 0
    %3389 = vmatpush1.bf16.msra.mxu0 %v3259
    %3390 = vmatprep.subr.bf16.mxu0 0
    %3391 = vmatpush1.bf16.msra.mxu0 %v3260
    %3392 = vmatprep.subr.bf16.mxu0 0
    %3393 = vmatpush1.bf16.msra.mxu0 %v3261
    %3394 = vmatprep.subr.bf16.mxu0 0
    %3395 = vmatpush1.bf16.msra.mxu0 %v3262
    %3396 = vmatprep.subr.bf16.mxu0 0
    %3397 = vmatpush1.bf16.msra.mxu0 %v3263
    %3398 = vmatprep.subr.bf16.mxu0 0
    %3399 = vmatpush1.bf16.msra.mxu0 %v3264
    %3400 = vmatprep.subr.bf16.mxu0 0
    %3401 = vmatpush1.bf16.msra.mxu0 %v3265
    %3402 = vmatprep.subr.bf16.mxu0 0
    %3403 = vmatpush1.bf16.msra.mxu0 %v3266
    %3404 = vmatprep.subr.bf16.mxu0 0
    %3405 = vmatpush1.bf16.msra.mxu0 %v3267
    %3406 = vmatprep.subr.bf16.mxu0 0
    %3407 = vmatpush1.bf16.msra.mxu0 %v3268
    %3408 = vmatprep.subr.bf16.mxu0 0
    %3409 = vmatpush1.bf16.msra.mxu0 %v3269
    %3410 = vmatprep.subr.bf16.mxu0 0
    %3411 = vmatpush1.bf16.msra.mxu0 %v3270
    %3412 = vmatprep.subr.bf16.mxu0 0
    %3413 = vmatpush1.bf16.msra.mxu0 %v3271
    %3414 = vmatprep.subr.bf16.mxu0 0
    %3415 = vmatpush1.bf16.msra.mxu0 %v3272
    %3416 = vmatprep.subr.bf16.mxu0 0
    %3417 = vmatpush1.bf16.msra.mxu0 %v3273
    %3418 = vmatprep.mubr.bf16.mxu0 %v2860
    %3419 = vmatmul.mubr.bf16.gmra.mrb[0].mxu0 %v2859
    %v3420 = vpop.f32.mrb[0].mxu0
    %v3421 = vadd.f32 %v3000, %v3420
    %v3422 = vpop.f32.mrb[0].mxu0
    %v3423 = vpop.f32.mrb[0].mxu0
    %v3424 = vadd.f32 %v3000, %v3423
    %v3425 = vpop.f32.mrb[0].mxu0
    %3426 = vdwg.mxu0
    %3427 = vmatprep.subr.bf16.mxu0 0
    %3428 = vmatpush1.bf16.msra.mxu0 %v3274
    %3429 = vmatprep.subr.bf16.mxu0 0
    %3430 = vmatpush1.bf16.msra.mxu0 %v3275
    %3431 = vmatprep.subr.bf16.mxu0 0
    %3432 = vmatpush1.bf16.msra.mxu0 %v3276
    %3433 = vmatprep.subr.bf16.mxu0 0
    %3434 = vmatpush1.bf16.msra.mxu0 %v3277
    %3435 = vmatprep.subr.bf16.mxu0 0
    %3436 = vmatpush1.bf16.msra.mxu0 %v3278
    %3437 = vmatprep.subr.bf16.mxu0 0
    %3438 = vmatpush1.bf16.msra.mxu0 %v3279
    %3439 = vmatprep.subr.bf16.mxu0 0
    %3440 = vmatpush1.bf16.msra.mxu0 %v3280
    %3441 = vmatprep.subr.bf16.mxu0 0
    %3442 = vmatpush1.bf16.msra.mxu0 %v3281
    %3443 = vmatprep.subr.bf16.mxu0 0
    %3444 = vmatpush1.bf16.msra.mxu0 %v3282
    %3445 = vmatprep.subr.bf16.mxu0 0
    %3446 = vmatpush1.bf16.msra.mxu0 %v3283
    %3447 = vmatprep.subr.bf16.mxu0 0
    %3448 = vmatpush1.bf16.msra.mxu0 %v3284
    %3449 = vmatprep.subr.bf16.mxu0 0
    %3450 = vmatpush1.bf16.msra.mxu0 %v3285
    %3451 = vmatprep.subr.bf16.mxu0 0
    %3452 = vmatpush1.bf16.msra.mxu0 %v3286
    %3453 = vmatprep.subr.bf16.mxu0 0
    %3454 = vmatpush1.bf16.msra.mxu0 %v3287
    %3455 = vmatprep.subr.bf16.mxu0 0
    %3456 = vmatpush1.bf16.msra.mxu0 %v3288
    %3457 = vmatprep.subr.bf16.mxu0 0
    %3458 = vmatpush1.bf16.msra.mxu0 %v3289
    %3459 = vmatprep.mubr.bf16.mxu0 %v2862
    %3460 = vmatmul.mubr.bf16.gmra.mrb[0].mxu0 %v2861
    %v3461 = vpop.f32.mrb[0].mxu0
    %v3462 = vadd.f32 %v3421, %v3461
    %v3463 = vpop.f32.mrb[0].mxu0
    %v3464 = vpop.f32.mrb[0].mxu0
    %v3465 = vadd.f32 %v3424, %v3464
    %v3466 = vpop.f32.mrb[0].mxu0
    %3467 = vdwg.mxu0
    %3468 = vmatprep.subr.bf16.mxu0 0
    %3469 = vmatpush1.bf16.msra.mxu0 %v3290
    %3470 = vmatprep.subr.bf16.mxu0 0
    %3471 = vmatpush1.bf16.msra.mxu0 %v3291
    %3472 = vmatprep.subr.bf16.mxu0 0
    %3473 = vmatpush1.bf16.msra.mxu0 %v3292
    %3474 = vmatprep.subr.bf16.mxu0 0
    %3475 = vmatpush1.bf16.msra.mxu0 %v3293
    %3476 = vmatprep.subr.bf16.mxu0 0
    %3477 = vmatpush1.bf16.msra.mxu0 %v3294
    %3478 = vmatprep.subr.bf16.mxu0 0
    %3479 = vmatpush1.bf16.msra.mxu0 %v3295
    %3480 = vmatprep.subr.bf16.mxu0 0
    %3481 = vmatpush1.bf16.msra.mxu0 %v3296
    %3482 = vmatprep.subr.bf16.mxu0 0
    %3483 = vmatpush1.bf16.msra.mxu0 %v3297
    %3484 = vmatprep.subr.bf16.mxu0 0
    %3485 = vmatpush1.bf16.msra.mxu0 %v3298
    %3486 = vmatprep.subr.bf16.mxu0 0
    %3487 = vmatpush1.bf16.msra.mxu0 %v3299
    %3488 = vmatprep.subr.bf16.mxu0 0
    %3489 = vmatpush1.bf16.msra.mxu0 %v3300
    %3490 = vmatprep.subr.bf16.mxu0 0
    %3491 = vmatpush1.bf16.msra.mxu0 %v3301
    %3492 = vmatprep.subr.bf16.mxu0 0
    %3493 = vmatpush1.bf16.msra.mxu0 %v3302
    %3494 = vmatprep.subr.bf16.mxu0 0
    %3495 = vmatpush1.bf16.msra.mxu0 %v3303
    %3496 = vmatprep.subr.bf16.mxu0 0
    %3497 = vmatpush1.bf16.msra.mxu0 %v3304
    %3498 = vmatprep.subr.bf16.mxu0 0
    %3499 = vmatpush1.bf16.msra.mxu0 %v3305
    %3500 = vmatprep.mubr.bf16.mxu0 %v2864
    %3501 = vmatmul.mubr.bf16.gmra.mrb[0].mxu0 %v2863
    %v3502 = vpop.f32.mrb[0].mxu0
    %v3503 = vadd.f32 %v3462, %v3502
    %v3504 = vpop.f32.mrb[0].mxu0
    %v3505 = vpop.f32.mrb[0].mxu0
    %v3506 = vadd.f32 %v3465, %v3505
    %v3507 = vpop.f32.mrb[0].mxu0
    %3508 = vdwg.mxu0
    %3509 = vmatprep.subr.bf16.mxu0 0
    %3510 = vmatpush1.bf16.msra.mxu0 %v3306
    %3511 = vmatprep.subr.bf16.mxu0 0
    %3512 = vmatpush1.bf16.msra.mxu0 %v3307
    %3513 = vmatprep.subr.bf16.mxu0 0
    %3514 = vmatpush1.bf16.msra.mxu0 %v3308
    %3515 = vmatprep.subr.bf16.mxu0 0
    %3516 = vmatpush1.bf16.msra.mxu0 %v3309
    %3517 = vmatprep.subr.bf16.mxu0 0
    %3518 = vmatpush1.bf16.msra.mxu0 %v3310
    %3519 = vmatprep.subr.bf16.mxu0 0
    %3520 = vmatpush1.bf16.msra.mxu0 %v3311
    %3521 = vmatprep.subr.bf16.mxu0 0
    %3522 = vmatpush1.bf16.msra.mxu0 %v3312
    %3523 = vmatprep.subr.bf16.mxu0 0
    %3524 = vmatpush1.bf16.msra.mxu0 %v3313
    %3525 = vmatprep.subr.bf16.mxu0 0
    %3526 = vmatpush1.bf16.msra.mxu0 %v3314
    %3527 = vmatprep.subr.bf16.mxu0 0
    %3528 = vmatpush1.bf16.msra.mxu0 %v3315
    %3529 = vmatprep.subr.bf16.mxu0 0
    %3530 = vmatpush1.bf16.msra.mxu0 %v3316
    %3531 = vmatprep.subr.bf16.mxu0 0
    %3532 = vmatpush1.bf16.msra.mxu0 %v3317
    %3533 = vmatprep.subr.bf16.mxu0 0
    %3534 = vmatpush1.bf16.msra.mxu0 %v3318
    %3535 = vmatprep.subr.bf16.mxu0 0
    %3536 = vmatpush1.bf16.msra.mxu0 %v3319
    %3537 = vmatprep.subr.bf16.mxu0 0
    %3538 = vmatpush1.bf16.msra.mxu0 %v3320
    %3539 = vmatprep.subr.bf16.mxu0 0
    %3540 = vmatpush1.bf16.msra.mxu0 %v3321
    %3541 = vmatprep.mubr.bf16.mxu0 %v2866
    %3542 = vmatmul.mubr.bf16.gmra.mrb[0].mxu0 %v2865
    %v3543 = vpop.f32.mrb[0].mxu0
    %v3544 = vadd.f32 %v3503, %v3543
    %v3545 = vpop.f32.mrb[0].mxu0
    %v3546 = vpop.f32.mrb[0].mxu0
    %v3547 = vadd.f32 %v3506, %v3546
    %v3548 = vpop.f32.mrb[0].mxu0
    %3549 = vdwg.mxu0
    %v3550 = vmax.f32 %v3544, -1.0
    %v3551 = vmax.f32 %v3547, -1.0
    %v3552 = vmin.f32 %v3550, 1.0
    %v3553 = vmin.f32 %v3551, 1.0
    %3554 = vst [vmem:[#allocation13] sm:$0xff] %v3552
    %3555 = vst [vmem:[#allocation13 + $0x8] sm:$0xff] %v3553
    // Predicated region
    $region70: #{tpu_custom_call.1} parent=1 // pred_check
      _
    $region71: #{tpu_custom_call.1} parent=1 // pred_check_branch
      %3557 = sbr.rel (0) target = $region73
    $region72: #{tpu_custom_call.1} parent=1 // pred_region
      %s3559 = ssub.s32 256, 256
      %3560 = vsyncadd [#allocation4], %s3559
      %s3561 = sshll.u32 [#allocation13], 4
      %s3562 = int_to_ptr.vmem [resolvable:$true] %s3561
      %3567 = dma.vmem_to_hbm [thread:$0]  %s3562, 256, %s11, [#allocation4], 128, 128, 8
    $region73: #{tpu_custom_call.1} parent=1 // pred_fallthru
      _
    // Predicated region
    $region74: #{tpu_custom_call.1} parent=1 // pred_check
      _
    $region75: #{tpu_custom_call.1} parent=1 // pred_check_branch
      %3569 = sbr.rel (0) target = $region77
    $region76: #{tpu_custom_call.1} parent=1 // pred_region
      %3570 = dma.done [#allocation4], 256
    $region77: #{tpu_custom_call.1} parent=1 // pred_fallthru
      _
    %3571 = vsyncpa [#allocation3], 1
    %3572 = vsyncpa [#allocation6], 1
    %3573 = vsyncpa [#allocation9], 1
    %3574 = vsyncpa [#allocation12], 1
    %3575 = vsyncpa [#allocation4], 1

// kernel: tpu_custom_call.1
$region0: #{tpu_custom_call.1}
  #allocation0 [shape = 'u32[]', space=smem, size = 0x4, offset = 0x4, fixed_abs, tag = 'smem constant byte address 0x4 - core index']
  #allocation1 [shape = 'u32[144,128]{1,0:T(1,128)}', space=vmem, size = 0x12000, scoped, tag = 'internal scratch']
  %s0 = inlined_call_operand.hbm [shape: bf16[16,32], index: 0, kind: input, shape index: {}]
  %s1 = inlined_call_operand.hbm [shape: bf16[32,128], index: 1, kind: input, shape index: {}]
  %s2 = inlined_call_operand.vmem [shape: f32[1,128], index: 2, kind: input, shape index: {}]
  %s3 = inlined_call_operand.hbm [shape: bf16[128,256], index: 3, kind: input, shape index: {}]
  %s4 = inlined_call_operand.vmem [shape: f32[1,256], index: 4, kind: input, shape index: {}]
  %s5 = inlined_call_operand.hbm [shape: bf16[256,512], index: 5, kind: input, shape index: {}]
  %s6 = inlined_call_operand.vmem [shape: f32[1,512], index: 6, kind: input, shape index: {}]
  %s7 = inlined_call_operand.hbm [shape: bf16[512,1024], index: 7, kind: input, shape index: {}]
  %s8 = inlined_call_operand.vmem [shape: f32[1,1024], index: 8, kind: input, shape index: {}]
  %s9 = inlined_call_operand.hbm [shape: bf16[1024,128], index: 9, kind: input, shape index: {}]
  %s10 = inlined_call_operand.vmem [shape: f32[1,128], index: 10, kind: input, shape index: {}]
  %s11 = inlined_call_operand.hbm [shape: f32[16,128], index: 11, kind: output, shape index: {}]
  %s12 = sld [smem:[#allocation0]]
  $region78: #{tpu_custom_call.1} parent=0
    _
  %s14 = ssub.s32 1, %s12
  %s15 = scalar_select 0, %s14, %s12
  $region1: #{tpu_custom_call.1} parent=0
    #allocation2 [shape = 'u8[4096]{0}', space=vmem, size = 0x1000, scoped, tag = 'input window, operand 0, single buffered']
    #allocation3 [shape = 's32[1]{0}', space=sflag, size = 0x4, scoped, tag = 'scoped memory for tpu_custom_call.1']
    #allocation4 [shape = 's32[1]{0}', space=sflag, size = 0x4, scoped, tag = 'scoped memory for tpu_custom_call.1']
    #allocation5 [shape = 'u8[8192]{0}', space=vmem, size = 0x2000, scoped, tag = 'input window, operand 1, single buffered']
    #allocation6 [shape = 's32[1]{0}', space=sflag, size = 0x4, scoped, tag = 'scoped memory for tpu_custom_call.1']
    #allocation7 [shape = 'u8[65536]{0}', space=vmem, size = 0x10000, scoped, tag = 'input window, operand 3, single buffered']
    #allocation8 [shape = 'u8[262144]{0}', space=vmem, size = 0x40000, scoped, tag = 'input window, operand 5, single buffered']
    #allocation9 [shape = 's32[1]{0}', space=sflag, size = 0x4, scoped, tag = 'scoped memory for tpu_custom_call.1']
    #allocation10 [shape = 'u8[1048576]{0}', space=vmem, size = 0x100000, scoped, tag = 'input window, operand 7, single buffered']
    #allocation11 [shape = 'u8[262144]{0}', space=vmem, size = 0x40000, scoped, tag = 'input window, operand 9, single buffered']
    #allocation12 [shape = 's32[1]{0}', space=sflag, size = 0x4, scoped, tag = 'scoped memory for tpu_custom_call.1']
    #allocation13 [shape = 'u8[8192]{0}', space=vmem, size = 0x2000, scoped, tag = 'output window, operand 0, single buffered']
    %16 = vsyncpa [#allocation3], 0
    %17 = vsyncpa [#allocation6], 0
    %18 = vsyncpa [#allocation9], 0
    %19 = vsyncpa [#allocation12], 0
    %20 = vsyncpa [#allocation4], 0
    // Predicated region
    $region2: #{tpu_custom_call.1} parent=1 // pred_check
      _
    $region3: #{tpu_custom_call.1} parent=1 // pred_check_branch
      %22 = sbr.rel (0) target = $region5
    $region4: #{tpu_custom_call.1} parent=1 // pred_region
      %s24 = ssub.s32 128, 128
      %25 = vsyncadd [#allocation3], %s24
      %s26 = sshll.u32 [#allocation2], 4
      %s27 = int_to_ptr.vmem [resolvable:$true] %s26
      %32 = dma.hbm_to_vmem [thread:$0]  %s0, 128, %s27, [#allocation3], 64, 64, 4
    $region5: #{tpu_custom_call.1} parent=1 // pred_fallthru
      _
    // Predicated region
    $region6: #{tpu_custom_call.1} parent=1 // pred_check
      _
    $region7: #{tpu_custom_call.1} parent=1 // pred_check_branch
      %34 = sbr.rel (0) target = $region9
    $region8: #{tpu_custom_call.1} parent=1 // pred_region
      %s36 = ssub.s32 256, 256
      %37 = vsyncadd [#allocation6], %s36
      %s38 = sshll.u32 [#allocation5], 4
      %s39 = int_to_ptr.vmem [resolvable:$true] %s38
      %44 = dma.hbm_to_vmem [thread:$0]  %s1, 256, %s39, [#allocation6], 64, 64, 4
    $region9: #{tpu_custom_call.1} parent=1 // pred_fallthru
      _
    // Predicated region
    $region10: #{tpu_custom_call.1} parent=1 // pred_check
      _
    $region11: #{tpu_custom_call.1} parent=1 // pred_check_branch
      %46 = sbr.rel (0) target = $region13
    $region12: #{tpu_custom_call.1} parent=1 // pred_region
      _
    $region13: #{tpu_custom_call.1} parent=1 // pred_fallthru
      _
    // Predicated region
    $region14: #{tpu_custom_call.1} parent=1 // pred_check
      _
    $region15: #{tpu_custom_call.1} parent=1 // pred_check_branch
      %48 = sbr.rel (0) target = $region17
    $region16: #{tpu_custom_call.1} parent=1 // pred_region
      %s50 = ssub.s32 2048, 2048
      %51 = vsyncadd [#allocation6], %s50
      %s52 = sshll.u32 [#allocation7], 4
      %s53 = int_to_ptr.vmem [resolvable:$true] %s52
      %58 = dma.hbm_to_vmem [thread:$0]  %s3, 2048, %s53, [#allocation6], 128, 128, 8
    $region17: #{tpu_custom_call.1} parent=1 // pred_fallthru
      _
    // Predicated region
    $region18: #{tpu_custom_call.1} parent=1 // pred_check
      _
    $region19: #{tpu_custom_call.1} parent=1 // pred_check_branch
      %60 = sbr.rel (0) target = $region21
    $region20: #{tpu_custom_call.1} parent=1 // pred_region
      _
    $region21: #{tpu_custom_call.1} parent=1 // pred_fallthru
      _
    // Predicated region
    $region22: #{tpu_custom_call.1} parent=1 // pred_check
      _
    $region23: #{tpu_custom_call.1} parent=1 // pred_check_branch
      %62 = sbr.rel (0) target = $region25
    $region24: #{tpu_custom_call.1} parent=1 // pred_region
      %s64 = ssub.s32 8192, 8192
      %65 = vsyncadd [#allocation9], %s64
      %s66 = sshll.u32 [#allocation8], 4
      %s67 = int_to_ptr.vmem [resolvable:$true] %s66
      %72 = dma.hbm_to_vmem [thread:$0]  %s5, 8192, %s67, [#allocation9], 256, 256, 16
    $region25: #{tpu_custom_call.1} parent=1 // pred_fallthru
      _
    // Predicated region
    $region26: #{tpu_custom_call.1} parent=1 // pred_check
      _
    $region27: #{tpu_custom_call.1} parent=1 // pred_check_branch
      %74 = sbr.rel (0) target = $region29
    $region28: #{tpu_custom_call.1} parent=1 // pred_region
      _
    $region29: #{tpu_custom_call.1} parent=1 // pred_fallthru
      _
    // Predicated region
    $region30: #{tpu_custom_call.1} parent=1 // pred_check
      _
    $region31: #{tpu_custom_call.1} parent=1 // pred_check_branch
      %76 = sbr.rel (0) target = $region33
    $region32: #{tpu_custom_call.1} parent=1 // pred_region
      %s78 = ssub.s32 32768, 32768
      %79 = vsyncadd [#allocation9], %s78
      %s80 = sshll.u32 [#allocation10], 4
      %s81 = int_to_ptr.vmem [resolvable:$true] %s80
      %86 = dma.hbm_to_vmem [thread:$0]  %s7, 32768, %s81, [#allocation9], 512, 512, 32
    $region33: #{tpu_custom_call.1} parent=1 // pred_fallthru
      _
    // Predicated region
    $region34: #{tpu_custom_call.1} parent=1 // pred_check
      _
    $region35: #{tpu_custom_call.1} parent=1 // pred_check_branch
      %88 = sbr.rel (0) target = $region37
    $region36: #{tpu_custom_call.1} parent=1 // pred_region
      _
    $region37: #{tpu_custom_call.1} parent=1 // pred_fallthru
      _
    // Predicated region
    $region38: #{tpu_custom_call.1} parent=1 // pred_check
      _
    $region39: #{tpu_custom_call.1} parent=1 // pred_check_branch
      %90 = sbr.rel (0) target = $region41
    $region40: #{tpu_custom_call.1} parent=1 // pred_region
      %s92 = ssub.s32 8192, 8192
      %93 = vsyncadd [#allocation12], %s92
      %s94 = sshll.u32 [#allocation11], 4
      %s95 = int_to_ptr.vmem [resolvable:$true] %s94
      %100 = dma.hbm_to_vmem [thread:$0]  %s9, 8192, %s95, [#allocation12], 64, 64, 4
    $region41: #{tpu_custom_call.1} parent=1 // pred_fallthru
      _
    // Predicated region
    $region42: #{tpu_custom_call.1} parent=1 // pred_check
      _
    $region43: #{tpu_custom_call.1} parent=1 // pred_check_branch
      %102 = sbr.rel (0) target = $region45
    $region44: #{tpu_custom_call.1} parent=1 // pred_region
      _
    $region45: #{tpu_custom_call.1} parent=1 // pred_fallthru
      _
    // Predicated region
    $region46: #{tpu_custom_call.1} parent=1 // pred_check
      _
    $region47: #{tpu_custom_call.1} parent=1 // pred_check_branch
      %104 = sbr.rel (0) target = $region49
    $region48: #{tpu_custom_call.1} parent=1 // pred_region
      %105 = dma.done [#allocation3], 128
    $region49: #{tpu_custom_call.1} parent=1 // pred_fallthru
      _
    // Predicated region
    $region50: #{tpu_custom_call.1} parent=1 // pred_check
      _
    $region51: #{tpu_custom_call.1} parent=1 // pred_check_branch
      %107 = sbr.rel (0) target = $region53
    $region52: #{tpu_custom_call.1} parent=1 // pred_region
      %108 = dma.done [#allocation6], 256
    $region53: #{tpu_custom_call.1} parent=1 // pred_fallthru
      _
    // Predicated region
    $region54: #{tpu_custom_call.1} parent=1 // pred_check
      _
    $region55: #{tpu_custom_call.1} parent=1 // pred_check_branch
      %110 = sbr.rel (0) target = $region57
    $region56: #{tpu_custom_call.1} parent=1 // pred_region
      %111 = dma.done [#allocation6], 2048
    $region57: #{tpu_custom_call.1} parent=1 // pred_fallthru
      _
    // Predicated region
    $region58: #{tpu_custom_call.1} parent=1 // pred_check
      _
    $region59: #{tpu_custom_call.1} parent=1 // pred_check_branch
      %113 = sbr.rel (0) target = $region61
    $region60: #{tpu_custom_call.1} parent=1 // pred_region
      %114 = dma.done [#allocation9], 8192
    $region61: #{tpu_custom_call.1} parent=1 // pred_fallthru
      _
    // Predicated region
    $region62: #{tpu_custom_call.1} parent=1 // pred_check
      _
    $region63: #{tpu_custom_call.1} parent=1 // pred_check_branch
      %116 = sbr.rel (0) target = $region65
    $region64: #{tpu_custom_call.1} parent=1 // pred_region
      %117 = dma.done [#allocation9], 32768
    $region65: #{tpu_custom_call.1} parent=1 // pred_fallthru
      _
    // Predicated region
    $region66: #{tpu_custom_call.1} parent=1 // pred_check
      _
    $region67: #{tpu_custom_call.1} parent=1 // pred_check_branch
      %119 = sbr.rel (0) target = $region69
    $region68: #{tpu_custom_call.1} parent=1 // pred_region
      %120 = dma.done [#allocation12], 8192
    $region69: #{tpu_custom_call.1} parent=1 // pred_fallthru
      _
    %v122 = vld [vmem:[#allocation2] sm:$0xf]
    %v123 = vld [vmem:[#allocation2 + $0x4] sm:$0xf]
    %v124 = vld [vmem:[#allocation5] sm:$0xf]
    %v125 = vld [vmem:[#allocation5 + $0x4] sm:$0xf]
    %v126 = vld [vmem:[#allocation5 + $0x8] sm:$0xf]
    %v127 = vld [vmem:[#allocation5 + $0xc] sm:$0xf]
    %v128 = vld [vmem:[%s2] sm:$0x1]
    %v130 = vlaneseq
    %v131 = vshrl.u32 %v130, 7
    %v132 = vsub.s32 0, %v131
    %v133 = vrot.slane %v128, %v132
    %v137 = vunpack.c.l.b16 %v122
    %v138 = vunpack.c.l.b16 %v123
    %v139 = vpack.c.b16 %v138, %v137
    %v144 = vunpack.c.l.b16 %v124
    %v145 = vunpack.c.l.b16 %v125
    %v146 = vunpack.c.l.b16 %v126
    %v147 = vunpack.c.l.b16 %v127
    %v148 = vpack.c.b16 %v145, %v144
    %v149 = vpack.c.b16 %v147, %v146
    %vm152 = vcmask 261120
    %v154 = vsel %vm152, %v139, 0
    %156 = vmatprep.subr.bf16.mxu0 0
    %157 = vmatpush1.bf16.msra.mxu0 %v148
    %158 = vmatprep.subr.bf16.mxu0 0
    %159 = vmatpush1.bf16.msra.mxu0 %v149
    %160 = vmatprep.subr.bf16.mxu0 0
    %161 = vmatpush1.bf16.msra.mxu0 0
    %162 = vmatprep.subr.bf16.mxu0 0
    %163 = vmatpush1.bf16.msra.mxu0 0
    %164 = vmatprep.subr.bf16.mxu0 0
    %165 = vmatpush1.bf16.msra.mxu0 0
    %166 = vmatprep.subr.bf16.mxu0 0
    %167 = vmatpush1.bf16.msra.mxu0 0
    %168 = vmatprep.subr.bf16.mxu0 0
    %169 = vmatpush1.bf16.msra.mxu0 0
    %170 = vmatprep.subr.bf16.mxu0 0
    %171 = vmatpush1.bf16.msra.mxu0 0
    %172 = vmatprep.subr.bf16.mxu0 0
    %173 = vmatpush1.bf16.msra.mxu0 0
    %174 = vmatprep.subr.bf16.mxu0 0
    %175 = vmatpush1.bf16.msra.mxu0 0
    %176 = vmatprep.subr.bf16.mxu0 0
    %177 = vmatpush1.bf16.msra.mxu0 0
    %178 = vmatprep.subr.bf16.mxu0 0
    %179 = vmatpush1.bf16.msra.mxu0 0
    %180 = vmatprep.subr.bf16.mxu0 0
    %181 = vmatpush1.bf16.msra.mxu0 0
    %182 = vmatprep.subr.bf16.mxu0 0
    %183 = vmatpush1.bf16.msra.mxu0 0
    %184 = vmatprep.subr.bf16.mxu0 0
    %185 = vmatpush1.bf16.msra.mxu0 0
    %186 = vmatprep.subr.bf16.mxu0 0
    %187 = vmatpush1.bf16.msra.mxu0 0
    %188 = vmatprep.mubr.bf16.mxu0 0
    %189 = vmatmul.mubr.bf16.gmra.mrb[0].mxu0 %v154
    %v190 = vpop.f32.mrb[0].mxu0
    %v191 = vadd.f32 %v133, %v190
    %v192 = vpop.f32.mrb[0].mxu0
    %v193 = vpop.f32.mrb[0].mxu0
    %v194 = vadd.f32 %v133, %v193
    %v195 = vpop.f32.mrb[0].mxu0
    %196 = vdwg.mxu0
    %vm197 = vcmp.gt.f32.partialorder %v191, 0.0
    %vm198 = vcmp.gt.f32.partialorder %v194, 0.0
    %v199 = vmul.f32 %v191, 0.2
    %v200 = vmul.f32 %v194, 0.2
    %v201 = vsel %vm197, %v191, %v199
    %v202 = vsel %vm198, %v194, %v200
    %v203 = vpack.c.bf16 %v202, %v201
    %v204 = vld [vmem:[#allocation7] sm:$0xff]
    %v205 = vld [vmem:[#allocation7 + $0x8] sm:$0xff]
    %v206 = vld [vmem:[#allocation7 + $0x10] sm:$0xff]
    %v207 = vld [vmem:[#allocation7 + $0x18] sm:$0xff]
    %v208 = vld [vmem:[#allocation7 + $0x20] sm:$0xff]
    %v209 = vld [vmem:[#allocation7 + $0x28] sm:$0xff]
    %v210 = vld [vmem:[#allocation7 + $0x30] sm:$0xff]
    %v211 = vld [vmem:[#allocation7 + $0x38] sm:$0xff]
    %v212 = vld [vmem:[#allocation7 + $0x40] sm:$0xff]
    %v213 = vld [vmem:[#allocation7 + $0x48] sm:$0xff]
    %v214 = vld [vmem:[#allocation7 + $0x50] sm:$0xff]
    %v215 = vld [vmem:[#allocation7 + $0x58] sm:$0xff]
    %v216 = vld [vmem:[#allocation7 + $0x60] sm:$0xff]
    %v217 = vld [vmem:[#allocation7 + $0x68] sm:$0xff]
    %v218 = vld [vmem:[#allocation7 + $0x70] sm:$0xff]
    %v219 = vld [vmem:[#allocation7 + $0x78] sm:$0xff]
    %v220 = vld [vmem:[%s4] sm:$0x3]
    %v222 = vlaneseq
    %v223 = vshrl.u32 %v222, 7
    %v224 = vsub.s32 0, %v223
    %v225 = vrot.slane %v220, %v224
    %v226 = vlaneseq
    %v227 = vshrl.u32 %v226, 7
    %v228 = vsub.s32 1, %v227
    %v229 = vrot.slane %v220, %v228
    %v248 = vunpack.c.l.b16 %v204
    %v249 = vunpack.c.h.b16 %v204
    %v250 = vunpack.c.l.b16 %v205
    %v251 = vunpack.c.h.b16 %v205
    %v252 = vunpack.c.l.b16 %v206
    %v253 = vunpack.c.h.b16 %v206
    %v254 = vunpack.c.l.b16 %v207
    %v255 = vunpack.c.h.b16 %v207
    %v256 = vunpack.c.l.b16 %v208
    %v257 = vunpack.c.h.b16 %v208
    %v258 = vunpack.c.l.b16 %v209
    %v259 = vunpack.c.h.b16 %v209
    %v260 = vunpack.c.l.b16 %v210
    %v261 = vunpack.c.h.b16 %v210
    %v262 = vunpack.c.l.b16 %v211
    %v263 = vunpack.c.h.b16 %v211
    %v264 = vunpack.c.l.b16 %v212
    %v265 = vunpack.c.h.b16 %v212
    %v266 = vunpack.c.l.b16 %v213
    %v267 = vunpack.c.h.b16 %v213
    %v268 = vunpack.c.l.b16 %v214
    %v269 = vunpack.c.h.b16 %v214
    %v270 = vunpack.c.l.b16 %v215
    %v271 = vunpack.c.h.b16 %v215
    %v272 = vunpack.c.l.b16 %v216
    %v273 = vunpack.c.h.b16 %v216
    %v274 = vunpack.c.l.b16 %v217
    %v275 = vunpack.c.h.b16 %v217
    %v276 = vunpack.c.l.b16 %v218
    %v277 = vunpack.c.h.b16 %v218
    %v278 = vunpack.c.l.b16 %v219
    %v279 = vunpack.c.h.b16 %v219
    %v280 = vpack.c.b16 %v250, %v248
    %v281 = vpack.c.b16 %v251, %v249
    %v282 = vpack.c.b16 %v254, %v252
    %v283 = vpack.c.b16 %v255, %v253
    %v284 = vpack.c.b16 %v258, %v256
    %v285 = vpack.c.b16 %v259, %v257
    %v286 = vpack.c.b16 %v262, %v260
    %v287 = vpack.c.b16 %v263, %v261
    %v288 = vpack.c.b16 %v266, %v264
    %v289 = vpack.c.b16 %v267, %v265
    %v290 = vpack.c.b16 %v270, %v268
    %v291 = vpack.c.b16 %v271, %v269
    %v292 = vpack.c.b16 %v274, %v272
    %v293 = vpack.c.b16 %v275, %v273
    %v294 = vpack.c.b16 %v278, %v276
    %v295 = vpack.c.b16 %v279, %v277
    %312 = vmatprep.subr.bf16.mxu0 %v281
    %313 = vmatpush1.bf16.msra.mxu0 %v280
    %314 = vmatprep.subr.bf16.mxu0 %v283
    %315 = vmatpush1.bf16.msra.mxu0 %v282
    %316 = vmatprep.subr.bf16.mxu0 %v285
    %317 = vmatpush1.bf16.msra.mxu0 %v284
    %318 = vmatprep.subr.bf16.mxu0 %v287
    %319 = vmatpush1.bf16.msra.mxu0 %v286
    %320 = vmatprep.subr.bf16.mxu0 %v289
    %321 = vmatpush1.bf16.msra.mxu0 %v288
    %322 = vmatprep.subr.bf16.mxu0 %v291
    %323 = vmatpush1.bf16.msra.mxu0 %v290
    %324 = vmatprep.subr.bf16.mxu0 %v293
    %325 = vmatpush1.bf16.msra.mxu0 %v292
    %326 = vmatprep.subr.bf16.mxu0 %v295
    %327 = vmatpush1.bf16.msra.mxu0 %v294
    %328 = vmatprep.subr.bf16.mxu0 0
    %329 = vmatpush1.bf16.msra.mxu0 0
    %330 = vmatprep.subr.bf16.mxu0 0
    %331 = vmatpush1.bf16.msra.mxu0 0
    %332 = vmatprep.subr.bf16.mxu0 0
    %333 = vmatpush1.bf16.msra.mxu0 0
    %334 = vmatprep.subr.bf16.mxu0 0
    %335 = vmatpush1.bf16.msra.mxu0 0
    %336 = vmatprep.subr.bf16.mxu0 0
    %337 = vmatpush1.bf16.msra.mxu0 0
    %338 = vmatprep.subr.bf16.mxu0 0
    %339 = vmatpush1.bf16.msra.mxu0 0
    %340 = vmatprep.subr.bf16.mxu0 0
    %341 = vmatpush1.bf16.msra.mxu0 0
    %342 = vmatprep.subr.bf16.mxu0 0
    %343 = vmatpush1.bf16.msra.mxu0 0
    %344 = vmatprep.mubr.bf16.mxu0 0
    %345 = vmatmul.mubr.bf16.gmra.mrb[0].mxu0 %v203
    %v346 = vpop.f32.mrb[0].mxu0
    %v347 = vadd.f32 %v225, %v346
    %v348 = vpop.f32.mrb[0].mxu0
    %v349 = vadd.f32 %v229, %v348
    %v350 = vpop.f32.mrb[0].mxu0
    %v351 = vadd.f32 %v225, %v350
    %v352 = vpop.f32.mrb[0].mxu0
    %v353 = vadd.f32 %v229, %v352
    %354 = vdwg.mxu0
    %vm355 = vcmp.gt.f32.partialorder %v347, 0.0
    %vm356 = vcmp.gt.f32.partialorder %v349, 0.0
    %vm357 = vcmp.gt.f32.partialorder %v351, 0.0
    %vm358 = vcmp.gt.f32.partialorder %v353, 0.0
    %v359 = vmul.f32 %v347, 0.2
    %v360 = vmul.f32 %v349, 0.2
    %v361 = vmul.f32 %v351, 0.2
    %v362 = vmul.f32 %v353, 0.2
    %v363 = vsel %vm355, %v347, %v359
    %v364 = vsel %vm356, %v349, %v360
    %v365 = vsel %vm357, %v351, %v361
    %v366 = vsel %vm358, %v353, %v362
    %v367 = vpack.c.bf16 %v365, %v363
    %v368 = vpack.c.bf16 %v366, %v364
    %v369 = vld [vmem:[#allocation8] sm:$0xff]
    %v370 = vld [vmem:[#allocation8 + $0x8] sm:$0xff]
    %v371 = vld [vmem:[#allocation8 + $0x10] sm:$0xff]
    %v372 = vld [vmem:[#allocation8 + $0x18] sm:$0xff]
    %v373 = vld [vmem:[#allocation8 + $0x20] sm:$0xff]
    %v374 = vld [vmem:[#allocation8 + $0x28] sm:$0xff]
    %v375 = vld [vmem:[#allocation8 + $0x30] sm:$0xff]
    %v376 = vld [vmem:[#allocation8 + $0x38] sm:$0xff]
    %v377 = vld [vmem:[#allocation8 + $0x40] sm:$0xff]
    %v378 = vld [vmem:[#allocation8 + $0x48] sm:$0xff]
    %v379 = vld [vmem:[#allocation8 + $0x50] sm:$0xff]
    %v380 = vld [vmem:[#allocation8 + $0x58] sm:$0xff]
    %v381 = vld [vmem:[#allocation8 + $0x60] sm:$0xff]
    %v382 = vld [vmem:[#allocation8 + $0x68] sm:$0xff]
    %v383 = vld [vmem:[#allocation8 + $0x70] sm:$0xff]
    %v384 = vld [vmem:[#allocation8 + $0x78] sm:$0xff]
    %v385 = vld [vmem:[#allocation8 + $0x80] sm:$0xff]
    %v386 = vld [vmem:[#allocation8 + $0x88] sm:$0xff]
    %v387 = vld [vmem:[#allocation8 + $0x90] sm:$0xff]
    %v388 = vld [vmem:[#allocation8 + $0x98] sm:$0xff]
    %v389 = vld [vmem:[#allocation8 + $0xa0] sm:$0xff]
    %v390 = vld [vmem:[#allocation8 + $0xa8] sm:$0xff]
    %v391 = vld [vmem:[#allocation8 + $0xb0] sm:$0xff]
    %v392 = vld [vmem:[#allocation8 + $0xb8] sm:$0xff]
    %v393 = vld [vmem:[#allocation8 + $0xc0] sm:$0xff]
    %v394 = vld [vmem:[#allocation8 + $0xc8] sm:$0xff]
    %v395 = vld [vmem:[#allocation8 + $0xd0] sm:$0xff]
    %v396 = vld [vmem:[#allocation8 + $0xd8] sm:$0xff]
    %v397 = vld [vmem:[#allocation8 + $0xe0] sm:$0xff]
    %v398 = vld [vmem:[#allocation8 + $0xe8] sm:$0xff]
    %v399 = vld [vmem:[#allocation8 + $0xf0] sm:$0xff]
    %v400 = vld [vmem:[#allocation8 + $0xf8] sm:$0xff]
    %v401 = vld [vmem:[#allocation8 + $0x100] sm:$0xff]
    %v402 = vld [vmem:[#allocation8 + $0x108] sm:$0xff]
    %v403 = vld [vmem:[#allocation8 + $0x110] sm:$0xff]
    %v404 = vld [vmem:[#allocation8 + $0x118] sm:$0xff]
    %v405 = vld [vmem:[#allocation8 + $0x120] sm:$0xff]
    %v406 = vld [vmem:[#allocation8 + $0x128] sm:$0xff]
    %v407 = vld [vmem:[#allocation8 + $0x130] sm:$0xff]
    %v408 = vld [vmem:[#allocation8 + $0x138] sm:$0xff]
    %v409 = vld [vmem:[#allocation8 + $0x140] sm:$0xff]
    %v410 = vld [vmem:[#allocation8 + $0x148] sm:$0xff]
    %v411 = vld [vmem:[#allocation8 + $0x150] sm:$0xff]
    %v412 = vld [vmem:[#allocation8 + $0x158] sm:$0xff]
    %v413 = vld [vmem:[#allocation8 + $0x160] sm:$0xff]
    %v414 = vld [vmem:[#allocation8 + $0x168] sm:$0xff]
    %v415 = vld [vmem:[#allocation8 + $0x170] sm:$0xff]
    %v416 = vld [vmem:[#allocation8 + $0x178] sm:$0xff]
    %v417 = vld [vmem:[#allocation8 + $0x180] sm:$0xff]
    %v418 = vld [vmem:[#allocation8 + $0x188] sm:$0xff]
    %v419 = vld [vmem:[#allocation8 + $0x190] sm:$0xff]
    %v420 = vld [vmem:[#allocation8 + $0x198] sm:$0xff]
    %v421 = vld [vmem:[#allocation8 + $0x1a0] sm:$0xff]
    %v422 = vld [vmem:[#allocation8 + $0x1a8] sm:$0xff]
    %v423 = vld [vmem:[#allocation8 + $0x1b0] sm:$0xff]
    %v424 = vld [vmem:[#allocation8 + $0x1b8] sm:$0xff]
    %v425 = vld [vmem:[#allocation8 + $0x1c0] sm:$0xff]
    %v426 = vld [vmem:[#allocation8 + $0x1c8] sm:$0xff]
    %v427 = vld [vmem:[#allocation8 + $0x1d0] sm:$0xff]
    %v428 = vld [vmem:[#allocation8 + $0x1d8] sm:$0xff]
    %v429 = vld [vmem:[#allocation8 + $0x1e0] sm:$0xff]
    %v430 = vld [vmem:[#allocation8 + $0x1e8] sm:$0xff]
    %v431 = vld [vmem:[#allocation8 + $0x1f0] sm:$0xff]
    %v432 = vld [vmem:[#allocation8 + $0x1f8] sm:$0xff]
    %v433 = vld [vmem:[%s6] sm:$0xf]
    %v435 = vlaneseq
    %v436 = vshrl.u32 %v435, 7
    %v437 = vsub.s32 0, %v436
    %v438 = vrot.slane %v433, %v437
    %v439 = vlaneseq
    %v440 = vshrl.u32 %v439, 7
    %v441 = vsub.s32 1, %v440
    %v442 = vrot.slane %v433, %v441
    %v443 = vlaneseq
    %v444 = vshrl.u32 %v443, 7
    %v445 = vsub.s32 2, %v444
    %v446 = vrot.slane %v433, %v445
    %v447 = vlaneseq
    %v448 = vshrl.u32 %v447, 7
    %v449 = vsub.s32 3, %v448
    %v450 = vrot.slane %v433, %v449
    %v519 = vunpack.c.l.b16 %v369
    %v520 = vunpack.c.h.b16 %v369
    %v521 = vunpack.c.l.b16 %v370
    %v522 = vunpack.c.h.b16 %v370
    %v523 = vunpack.c.l.b16 %v371
    %v524 = vunpack.c.h.b16 %v371
    %v525 = vunpack.c.l.b16 %v372
    %v526 = vunpack.c.h.b16 %v372
    %v527 = vunpack.c.l.b16 %v373
    %v528 = vunpack.c.h.b16 %v373
    %v529 = vunpack.c.l.b16 %v374
    %v530 = vunpack.c.h.b16 %v374
    %v531 = vunpack.c.l.b16 %v375
    %v532 = vunpack.c.h.b16 %v375
    %v533 = vunpack.c.l.b16 %v376
    %v534 = vunpack.c.h.b16 %v376
    %v535 = vunpack.c.l.b16 %v377
    %v536 = vunpack.c.h.b16 %v377
    %v537 = vunpack.c.l.b16 %v378
    %v538 = vunpack.c.h.b16 %v378
    %v539 = vunpack.c.l.b16 %v379
    %v540 = vunpack.c.h.b16 %v379
    %v541 = vunpack.c.l.b16 %v380
    %v542 = vunpack.c.h.b16 %v380
    %v543 = vunpack.c.l.b16 %v381
    %v544 = vunpack.c.h.b16 %v381
    %v545 = vunpack.c.l.b16 %v382
    %v546 = vunpack.c.h.b16 %v382
    %v547 = vunpack.c.l.b16 %v383
    %v548 = vunpack.c.h.b16 %v383
    %v549 = vunpack.c.l.b16 %v384
    %v550 = vunpack.c.h.b16 %v384
    %v551 = vunpack.c.l.b16 %v385
    %v552 = vunpack.c.h.b16 %v385
    %v553 = vunpack.c.l.b16 %v386
    %v554 = vunpack.c.h.b16 %v386
    %v555 = vunpack.c.l.b16 %v387
    %v556 = vunpack.c.h.b16 %v387
    %v557 = vunpack.c.l.b16 %v388
    %v558 = vunpack.c.h.b16 %v388
    %v559 = vunpack.c.l.b16 %v389
    %v560 = vunpack.c.h.b16 %v389
    %v561 = vunpack.c.l.b16 %v390
    %v562 = vunpack.c.h.b16 %v390
    %v563 = vunpack.c.l.b16 %v391
    %v564 = vunpack.c.h.b16 %v391
    %v565 = vunpack.c.l.b16 %v392
    %v566 = vunpack.c.h.b16 %v392
    %v567 = vunpack.c.l.b16 %v393
    %v568 = vunpack.c.h.b16 %v393
    %v569 = vunpack.c.l.b16 %v394
    %v570 = vunpack.c.h.b16 %v394
    %v571 = vunpack.c.l.b16 %v395
    %v572 = vunpack.c.h.b16 %v395
    %v573 = vunpack.c.l.b16 %v396
    %v574 = vunpack.c.h.b16 %v396
    %v575 = vunpack.c.l.b16 %v397
    %v576 = vunpack.c.h.b16 %v397
    %v577 = vunpack.c.l.b16 %v398
    %v578 = vunpack.c.h.b16 %v398
    %v579 = vunpack.c.l.b16 %v399
    %v580 = vunpack.c.h.b16 %v399
    %v581 = vunpack.c.l.b16 %v400
    %v582 = vunpack.c.h.b16 %v400
    %v583 = vunpack.c.l.b16 %v401
    %v584 = vunpack.c.h.b16 %v401
    %v585 = vunpack.c.l.b16 %v402
    %v586 = vunpack.c.h.b16 %v402
    %v587 = vunpack.c.l.b16 %v403
    %v588 = vunpack.c.h.b16 %v403
    %v589 = vunpack.c.l.b16 %v404
    %v590 = vunpack.c.h.b16 %v404
    %v591 = vunpack.c.l.b16 %v405
    %v592 = vunpack.c.h.b16 %v405
    %v593 = vunpack.c.l.b16 %v406
    %v594 = vunpack.c.h.b16 %v406
    %v595 = vunpack.c.l.b16 %v407
    %v596 = vunpack.c.h.b16 %v407
    %v597 = vunpack.c.l.b16 %v408
    %v598 = vunpack.c.h.b16 %v408
    %v599 = vunpack.c.l.b16 %v409
    %v600 = vunpack.c.h.b16 %v409
    %v601 = vunpack.c.l.b16 %v410
    %v602 = vunpack.c.h.b16 %v410
    %v603 = vunpack.c.l.b16 %v411
    %v604 = vunpack.c.h.b16 %v411
    %v605 = vunpack.c.l.b16 %v412
    %v606 = vunpack.c.h.b16 %v412
    %v607 = vunpack.c.l.b16 %v413
    %v608 = vunpack.c.h.b16 %v413
    %v609 = vunpack.c.l.b16 %v414
    %v610 = vunpack.c.h.b16 %v414
    %v611 = vunpack.c.l.b16 %v415
    %v612 = vunpack.c.h.b16 %v415
    %v613 = vunpack.c.l.b16 %v416
    %v614 = vunpack.c.h.b16 %v416
    %v615 = vunpack.c.l.b16 %v417
    %v616 = vunpack.c.h.b16 %v417
    %v617 = vunpack.c.l.b16 %v418
    %v618 = vunpack.c.h.b16 %v418
    %v619 = vunpack.c.l.b16 %v419
    %v620 = vunpack.c.h.b16 %v419
    %v621 = vunpack.c.l.b16 %v420
    %v622 = vunpack.c.h.b16 %v420
    %v623 = vunpack.c.l.b16 %v421
    %v624 = vunpack.c.h.b16 %v421
    %v625 = vunpack.c.l.b16 %v422
    %v626 = vunpack.c.h.b16 %v422
    %v627 = vunpack.c.l.b16 %v423
    %v628 = vunpack.c.h.b16 %v423
    %v629 = vunpack.c.l.b16 %v424
    %v630 = vunpack.c.h.b16 %v424
    %v631 = vunpack.c.l.b16 %v425
    %v632 = vunpack.c.h.b16 %v425
    %v633 = vunpack.c.l.b16 %v426
    %v634 = vunpack.c.h.b16 %v426
    %v635 = vunpack.c.l.b16 %v427
    %v636 = vunpack.c.h.b16 %v427
    %v637 = vunpack.c.l.b16 %v428
    %v638 = vunpack.c.h.b16 %v428
    %v639 = vunpack.c.l.b16 %v429
    %v640 = vunpack.c.h.b16 %v429
    %v641 = vunpack.c.l.b16 %v430
    %v642 = vunpack.c.h.b16 %v430
    %v643 = vunpack.c.l.b16 %v431
    %v644 = vunpack.c.h.b16 %v431
    %v645 = vunpack.c.l.b16 %v432
    %v646 = vunpack.c.h.b16 %v432
    %v647 = vpack.c.b16 %v523, %v519
    %v648 = vpack.c.b16 %v524, %v520
    %v649 = vpack.c.b16 %v525, %v521
    %v650 = vpack.c.b16 %v526, %v522
    %v651 = vpack.c.b16 %v531, %v527
    %v652 = vpack.c.b16 %v532, %v528
    %v653 = vpack.c.b16 %v533, %v529
    %v654 = vpack.c.b16 %v534, %v530
    %v655 = vpack.c.b16 %v539, %v535
    %v656 = vpack.c.b16 %v540, %v536
    %v657 = vpack.c.b16 %v541, %v537
    %v658 = vpack.c.b16 %v542, %v538
    %v659 = vpack.c.b16 %v547, %v543
    %v660 = vpack.c.b16 %v548, %v544
    %v661 = vpack.c.b16 %v549, %v545
    %v662 = vpack.c.b16 %v550, %v546
    %v663 = vpack.c.b16 %v555, %v551
    %v664 = vpack.c.b16 %v556, %v552
    %v665 = vpack.c.b16 %v557, %v553
    %v666 = vpack.c.b16 %v558, %v554
    %v667 = vpack.c.b16 %v563, %v559
    %v668 = vpack.c.b16 %v564, %v560
    %v669 = vpack.c.b16 %v565, %v561
    %v670 = vpack.c.b16 %v566, %v562
    %v671 = vpack.c.b16 %v571, %v567
    %v672 = vpack.c.b16 %v572, %v568
    %v673 = vpack.c.b16 %v573, %v569
    %v674 = vpack.c.b16 %v574, %v570
    %v675 = vpack.c.b16 %v579, %v575
    %v676 = vpack.c.b16 %v580, %v576
    %v677 = vpack.c.b16 %v581, %v577
    %v678 = vpack.c.b16 %v582, %v578
    %v679 = vpack.c.b16 %v587, %v583
    %v680 = vpack.c.b16 %v588, %v584
    %v681 = vpack.c.b16 %v589, %v585
    %v682 = vpack.c.b16 %v590, %v586
    %v683 = vpack.c.b16 %v595, %v591
    %v684 = vpack.c.b16 %v596, %v592
    %v685 = vpack.c.b16 %v597, %v593
    %v686 = vpack.c.b16 %v598, %v594
    %v687 = vpack.c.b16 %v603, %v599
    %v688 = vpack.c.b16 %v604, %v600
    %v689 = vpack.c.b16 %v605, %v601
    %v690 = vpack.c.b16 %v606, %v602
    %v691 = vpack.c.b16 %v611, %v607
    %v692 = vpack.c.b16 %v612, %v608
    %v693 = vpack.c.b16 %v613, %v609
    %v694 = vpack.c.b16 %v614, %v610
    %v695 = vpack.c.b16 %v619, %v615
    %v696 = vpack.c.b16 %v620, %v616
    %v697 = vpack.c.b16 %v621, %v617
    %v698 = vpack.c.b16 %v622, %v618
    %v699 = vpack.c.b16 %v627, %v623
    %v700 = vpack.c.b16 %v628, %v624
    %v701 = vpack.c.b16 %v629, %v625
    %v702 = vpack.c.b16 %v630, %v626
    %v703 = vpack.c.b16 %v635, %v631
    %v704 = vpack.c.b16 %v636, %v632
    %v705 = vpack.c.b16 %v637, %v633
    %v706 = vpack.c.b16 %v638, %v634
    %v707 = vpack.c.b16 %v643, %v639
    %v708 = vpack.c.b16 %v644, %v640
    %v709 = vpack.c.b16 %v645, %v641
    %v710 = vpack.c.b16 %v646, %v642
    %775 = vmatprep.subr.bf16.mxu0 %v648
    %776 = vmatpush1.bf16.msra.mxu0 %v647
    %777 = vmatprep.subr.bf16.mxu0 %v652
    %778 = vmatpush1.bf16.msra.mxu0 %v651
    %779 = vmatprep.subr.bf16.mxu0 %v656
    %780 = vmatpush1.bf16.msra.mxu0 %v655
    %781 = vmatprep.subr.bf16.mxu0 %v660
    %782 = vmatpush1.bf16.msra.mxu0 %v659
    %783 = vmatprep.subr.bf16.mxu0 %v664
    %784 = vmatpush1.bf16.msra.mxu0 %v663
    %785 = vmatprep.subr.bf16.mxu0 %v668
    %786 = vmatpush1.bf16.msra.mxu0 %v667
    %787 = vmatprep.subr.bf16.mxu0 %v672
    %788 = vmatpush1.bf16.msra.mxu0 %v671
    %789 = vmatprep.subr.bf16.mxu0 %v676
    %790 = vmatpush1.bf16.msra.mxu0 %v675
    %791 = vmatprep.subr.bf16.mxu0 %v680
    %792 = vmatpush1.bf16.msra.mxu0 %v679
    %793 = vmatprep.subr.bf16.mxu0 %v684
    %794 = vmatpush1.bf16.msra.mxu0 %v683
    %795 = vmatprep.subr.bf16.mxu0 %v688
    %796 = vmatpush1.bf16.msra.mxu0 %v687
    %797 = vmatprep.subr.bf16.mxu0 %v692
    %798 = vmatpush1.bf16.msra.mxu0 %v691
    %799 = vmatprep.subr.bf16.mxu0 %v696
    %800 = vmatpush1.bf16.msra.mxu0 %v695
    %801 = vmatprep.subr.bf16.mxu0 %v700
    %802 = vmatpush1.bf16.msra.mxu0 %v699
    %803 = vmatprep.subr.bf16.mxu0 %v704
    %804 = vmatpush1.bf16.msra.mxu0 %v703
    %805 = vmatprep.subr.bf16.mxu0 %v708
    %806 = vmatpush1.bf16.msra.mxu0 %v707
    %807 = vmatprep.mubr.bf16.mxu0 %v368
    %808 = vmatmul.mubr.bf16.gmra.mrb[0].mxu0 %v367
    %v809 = vpop.f32.mrb[0].mxu0
    %v810 = vadd.f32 %v438, %v809
    %v811 = vpop.f32.mrb[0].mxu0
    %v812 = vadd.f32 %v442, %v811
    %v813 = vpop.f32.mrb[0].mxu0
    %v814 = vadd.f32 %v438, %v813
    %v815 = vpop.f32.mrb[0].mxu0
    %v816 = vadd.f32 %v442, %v815
    %817 = vdwg.mxu0
    %818 = vmatprep.subr.bf16.mxu0 %v650
    %819 = vmatpush1.bf16.msra.mxu0 %v649
    %820 = vmatprep.subr.bf16.mxu0 %v654
    %821 = vmatpush1.bf16.msra.mxu0 %v653
    %822 = vmatprep.subr.bf16.mxu0 %v658
    %823 = vmatpush1.bf16.msra.mxu0 %v657
    %824 = vmatprep.subr.bf16.mxu0 %v662
    %825 = vmatpush1.bf16.msra.mxu0 %v661
    %826 = vmatprep.subr.bf16.mxu0 %v666
    %827 = vmatpush1.bf16.msra.mxu0 %v665
    %828 = vmatprep.subr.bf16.mxu0 %v670
    %829 = vmatpush1.bf16.msra.mxu0 %v669
    %830 = vmatprep.subr.bf16.mxu0 %v674
    %831 = vmatpush1.bf16.msra.mxu0 %v673
    %832 = vmatprep.subr.bf16.mxu0 %v678
    %833 = vmatpush1.bf16.msra.mxu0 %v677
    %834 = vmatprep.subr.bf16.mxu0 %v682
    %835 = vmatpush1.bf16.msra.mxu0 %v681
    %836 = vmatprep.subr.bf16.mxu0 %v686
    %837 = vmatpush1.bf16.msra.mxu0 %v685
    %838 = vmatprep.subr.bf16.mxu0 %v690
    %839 = vmatpush1.bf16.msra.mxu0 %v689
    %840 = vmatprep.subr.bf16.mxu0 %v694
    %841 = vmatpush1.bf16.msra.mxu0 %v693
    %842 = vmatprep.subr.bf16.mxu0 %v698
    %843 = vmatpush1.bf16.msra.mxu0 %v697
    %844 = vmatprep.subr.bf16.mxu0 %v702
    %845 = vmatpush1.bf16.msra.mxu0 %v701
    %846 = vmatprep.subr.bf16.mxu0 %v706
    %847 = vmatpush1.bf16.msra.mxu0 %v705
    %848 = vmatprep.subr.bf16.mxu0 %v710
    %849 = vmatpush1.bf16.msra.mxu0 %v709
    %850 = vmatprep.mubr.bf16.mxu0 %v368
    %851 = vmatmul.mubr.bf16.gmra.mrb[0].mxu0 %v367
    %v852 = vpop.f32.mrb[0].mxu0
    %v853 = vadd.f32 %v446, %v852
    %v854 = vpop.f32.mrb[0].mxu0
    %v855 = vadd.f32 %v450, %v854
    %v856 = vpop.f32.mrb[0].mxu0
    %v857 = vadd.f32 %v446, %v856
    %v858 = vpop.f32.mrb[0].mxu0
    %v859 = vadd.f32 %v450, %v858
    %860 = vdwg.mxu0
    %vm861 = vcmp.gt.f32.partialorder %v810, 0.0
    %vm862 = vcmp.gt.f32.partialorder %v812, 0.0
    %vm863 = vcmp.gt.f32.partialorder %v853, 0.0
    %vm864 = vcmp.gt.f32.partialorder %v855, 0.0
    %vm865 = vcmp.gt.f32.partialorder %v814, 0.0
    %vm866 = vcmp.gt.f32.partialorder %v816, 0.0
    %vm867 = vcmp.gt.f32.partialorder %v857, 0.0
    %vm868 = vcmp.gt.f32.partialorder %v859, 0.0
    %v869 = vmul.f32 %v810, 0.2
    %v870 = vmul.f32 %v812, 0.2
    %v871 = vmul.f32 %v853, 0.2
    %v872 = vmul.f32 %v855, 0.2
    %v873 = vmul.f32 %v814, 0.2
    %v874 = vmul.f32 %v816, 0.2
    %v875 = vmul.f32 %v857, 0.2
    %v876 = vmul.f32 %v859, 0.2
    %v877 = vsel %vm861, %v810, %v869
    %v878 = vsel %vm862, %v812, %v870
    %v879 = vsel %vm863, %v853, %v871
    %v880 = vsel %vm864, %v855, %v872
    %v881 = vsel %vm865, %v814, %v873
    %v882 = vsel %vm866, %v816, %v874
    %v883 = vsel %vm867, %v857, %v875
    %v884 = vsel %vm868, %v859, %v876
    %v885 = vpack.c.bf16 %v881, %v877
    %v886 = vpack.c.bf16 %v882, %v878
    %v887 = vpack.c.bf16 %v883, %v879
    %v888 = vpack.c.bf16 %v884, %v880
    %v889 = vld [vmem:[#allocation10] sm:$0xff]
    %v890 = vld [vmem:[#allocation10 + $0x8] sm:$0xff]
    %v891 = vld [vmem:[#allocation10 + $0x10] sm:$0xff]
    %v892 = vld [vmem:[#allocation10 + $0x18] sm:$0xff]
    %v893 = vld [vmem:[#allocation10 + $0x20] sm:$0xff]
    %v894 = vld [vmem:[#allocation10 + $0x28] sm:$0xff]
    %v895 = vld [vmem:[#allocation10 + $0x30] sm:$0xff]
    %v896 = vld [vmem:[#allocation10 + $0x38] sm:$0xff]
    %v897 = vld [vmem:[#allocation10 + $0x40] sm:$0xff]
    %v898 = vld [vmem:[#allocation10 + $0x48] sm:$0xff]
    %v899 = vld [vmem:[#allocation10 + $0x50] sm:$0xff]
    %v900 = vld [vmem:[#allocation10 + $0x58] sm:$0xff]
    %v901 = vld [vmem:[#allocation10 + $0x60] sm:$0xff]
    %v902 = vld [vmem:[#allocation10 + $0x68] sm:$0xff]
    %v903 = vld [vmem:[#allocation10 + $0x70] sm:$0xff]
    %v904 = vld [vmem:[#allocation10 + $0x78] sm:$0xff]
    %v905 = vld [vmem:[#allocation10 + $0x80] sm:$0xff]
    %v906 = vld [vmem:[#allocation10 + $0x88] sm:$0xff]
    %v907 = vld [vmem:[#allocation10 + $0x90] sm:$0xff]
    %v908 = vld [vmem:[#allocation10 + $0x98] sm:$0xff]
    %v909 = vld [vmem:[#allocation10 + $0xa0] sm:$0xff]
    %v910 = vld [vmem:[#allocation10 + $0xa8] sm:$0xff]
    %v911 = vld [vmem:[#allocation10 + $0xb0] sm:$0xff]
    %v912 = vld [vmem:[#allocation10 + $0xb8] sm:$0xff]
    %v913 = vld [vmem:[#allocation10 + $0xc0] sm:$0xff]
    %v914 = vld [vmem:[#allocation10 + $0xc8] sm:$0xff]
    %v915 = vld [vmem:[#allocation10 + $0xd0] sm:$0xff]
    %v916 = vld [vmem:[#allocation10 + $0xd8] sm:$0xff]
    %v917 = vld [vmem:[#allocation10 + $0xe0] sm:$0xff]
    %v918 = vld [vmem:[#allocation10 + $0xe8] sm:$0xff]
    %v919 = vld [vmem:[#allocation10 + $0xf0] sm:$0xff]
    %v920 = vld [vmem:[#allocation10 + $0xf8] sm:$0xff]
    %v921 = vld [vmem:[#allocation10 + $0x100] sm:$0xff]
    %v922 = vld [vmem:[#allocation10 + $0x108] sm:$0xff]
    %v923 = vld [vmem:[#allocation10 + $0x110] sm:$0xff]
    %v924 = vld [vmem:[#allocation10 + $0x118] sm:$0xff]
    %v925 = vld [vmem:[#allocation10 + $0x120] sm:$0xff]
    %v926 = vld [vmem:[#allocation10 + $0x128] sm:$0xff]
    %v927 = vld [vmem:[#allocation10 + $0x130] sm:$0xff]
    %v928 = vld [vmem:[#allocation10 + $0x138] sm:$0xff]
    %v929 = vld [vmem:[#allocation10 + $0x140] sm:$0xff]
    %v930 = vld [vmem:[#allocation10 + $0x148] sm:$0xff]
    %v931 = vld [vmem:[#allocation10 + $0x150] sm:$0xff]
    %v932 = vld [vmem:[#allocation10 + $0x158] sm:$0xff]
    %v933 = vld [vmem:[#allocation10 + $0x160] sm:$0xff]
    %v934 = vld [vmem:[#allocation10 + $0x168] sm:$0xff]
    %v935 = vld [vmem:[#allocation10 + $0x170] sm:$0xff]
    %v936 = vld [vmem:[#allocation10 + $0x178] sm:$0xff]
    %v937 = vld [vmem:[#allocation10 + $0x180] sm:$0xff]
    %v938 = vld [vmem:[#allocation10 + $0x188] sm:$0xff]
    %v939 = vld [vmem:[#allocation10 + $0x190] sm:$0xff]
    %v940 = vld [vmem:[#allocation10 + $0x198] sm:$0xff]
    %v941 = vld [vmem:[#allocation10 + $0x1a0] sm:$0xff]
    %v942 = vld [vmem:[#allocation10 + $0x1a8] sm:$0xff]
    %v943 = vld [vmem:[#allocation10 + $0x1b0] sm:$0xff]
    %v944 = vld [vmem:[#allocation10 + $0x1b8] sm:$0xff]
    %v945 = vld [vmem:[#allocation10 + $0x1c0] sm:$0xff]
    %v946 = vld [vmem:[#allocation10 + $0x1c8] sm:$0xff]
    %v947 = vld [vmem:[#allocation10 + $0x1d0] sm:$0xff]
    %v948 = vld [vmem:[#allocation10 + $0x1d8] sm:$0xff]
    %v949 = vld [vmem:[#allocation10 + $0x1e0] sm:$0xff]
    %v950 = vld [vmem:[#allocation10 + $0x1e8] sm:$0xff]
    %v951 = vld [vmem:[#allocation10 + $0x1f0] sm:$0xff]
    %v952 = vld [vmem:[#allocation10 + $0x1f8] sm:$0xff]
    %v953 = vld [vmem:[#allocation10 + $0x200] sm:$0xff]
    %v954 = vld [vmem:[#allocation10 + $0x208] sm:$0xff]
    %v955 = vld [vmem:[#allocation10 + $0x210] sm:$0xff]
    %v956 = vld [vmem:[#allocation10 + $0x218] sm:$0xff]
    %v957 = vld [vmem:[#allocation10 + $0x220] sm:$0xff]
    %v958 = vld [vmem:[#allocation10 + $0x228] sm:$0xff]
    %v959 = vld [vmem:[#allocation10 + $0x230] sm:$0xff]
    %v960 = vld [vmem:[#allocation10 + $0x238] sm:$0xff]
    %v961 = vld [vmem:[#allocation10 + $0x240] sm:$0xff]
    %v962 = vld [vmem:[#allocation10 + $0x248] sm:$0xff]
    %v963 = vld [vmem:[#allocation10 + $0x250] sm:$0xff]
    %v964 = vld [vmem:[#allocation10 + $0x258] sm:$0xff]
    %v965 = vld [vmem:[#allocation10 + $0x260] sm:$0xff]
    %v966 = vld [vmem:[#allocation10 + $0x268] sm:$0xff]
    %v967 = vld [vmem:[#allocation10 + $0x270] sm:$0xff]
    %v968 = vld [vmem:[#allocation10 + $0x278] sm:$0xff]
    %v969 = vld [vmem:[#allocation10 + $0x280] sm:$0xff]
    %v970 = vld [vmem:[#allocation10 + $0x288] sm:$0xff]
    %v971 = vld [vmem:[#allocation10 + $0x290] sm:$0xff]
    %v972 = vld [vmem:[#allocation10 + $0x298] sm:$0xff]
    %v973 = vld [vmem:[#allocation10 + $0x2a0] sm:$0xff]
    %v974 = vld [vmem:[#allocation10 + $0x2a8] sm:$0xff]
    %v975 = vld [vmem:[#allocation10 + $0x2b0] sm:$0xff]
    %v976 = vld [vmem:[#allocation10 + $0x2b8] sm:$0xff]
    %v977 = vld [vmem:[#allocation10 + $0x2c0] sm:$0xff]
    %v978 = vld [vmem:[#allocation10 + $0x2c8] sm:$0xff]
    %v979 = vld [vmem:[#allocation10 + $0x2d0] sm:$0xff]
    %v980 = vld [vmem:[#allocation10 + $0x2d8] sm:$0xff]
    %v981 = vld [vmem:[#allocation10 + $0x2e0] sm:$0xff]
    %v982 = vld [vmem:[#allocation10 + $0x2e8] sm:$0xff]
    %v983 = vld [vmem:[#allocation10 + $0x2f0] sm:$0xff]
    %v984 = vld [vmem:[#allocation10 + $0x2f8] sm:$0xff]
    %v985 = vld [vmem:[#allocation10 + $0x300] sm:$0xff]
    %v986 = vld [vmem:[#allocation10 + $0x308] sm:$0xff]
    %v987 = vld [vmem:[#allocation10 + $0x310] sm:$0xff]
    %v988 = vld [vmem:[#allocation10 + $0x318] sm:$0xff]
    %v989 = vld [vmem:[#allocation10 + $0x320] sm:$0xff]
    %v990 = vld [vmem:[#allocation10 + $0x328] sm:$0xff]
    %v991 = vld [vmem:[#allocation10 + $0x330] sm:$0xff]
    %v992 = vld [vmem:[#allocation10 + $0x338] sm:$0xff]
    %v993 = vld [vmem:[#allocation10 + $0x340] sm:$0xff]
    %v994 = vld [vmem:[#allocation10 + $0x348] sm:$0xff]
    %v995 = vld [vmem:[#allocation10 + $0x350] sm:$0xff]
    %v996 = vld [vmem:[#allocation10 + $0x358] sm:$0xff]
    %v997 = vld [vmem:[#allocation10 + $0x360] sm:$0xff]
    %v998 = vld [vmem:[#allocation10 + $0x368] sm:$0xff]
    %v999 = vld [vmem:[#allocation10 + $0x370] sm:$0xff]
    %v1000 = vld [vmem:[#allocation10 + $0x378] sm:$0xff]
    %v1001 = vld [vmem:[#allocation10 + $0x380] sm:$0xff]
    %v1002 = vld [vmem:[#allocation10 + $0x388] sm:$0xff]
    %v1003 = vld [vmem:[#allocation10 + $0x390] sm:$0xff]
    %v1004 = vld [vmem:[#allocation10 + $0x398] sm:$0xff]
    %v1005 = vld [vmem:[#allocation10 + $0x3a0] sm:$0xff]
    %v1006 = vld [vmem:[#allocation10 + $0x3a8] sm:$0xff]
    %v1007 = vld [vmem:[#allocation10 + $0x3b0] sm:$0xff]
    %v1008 = vld [vmem:[#allocation10 + $0x3b8] sm:$0xff]
    %v1009 = vld [vmem:[#allocation10 + $0x3c0] sm:$0xff]
    %v1010 = vld [vmem:[#allocation10 + $0x3c8] sm:$0xff]
    %v1011 = vld [vmem:[#allocation10 + $0x3d0] sm:$0xff]
    %v1012 = vld [vmem:[#allocation10 + $0x3d8] sm:$0xff]
    %v1013 = vld [vmem:[#allocation10 + $0x3e0] sm:$0xff]
    %v1014 = vld [vmem:[#allocation10 + $0x3e8] sm:$0xff]
    %v1015 = vld [vmem:[#allocation10 + $0x3f0] sm:$0xff]
    %v1016 = vld [vmem:[#allocation10 + $0x3f8] sm:$0xff]
    %v1017 = vld [vmem:[#allocation10 + $0x400] sm:$0xff]
    %v1018 = vld [vmem:[#allocation10 + $0x408] sm:$0xff]
    %v1019 = vld [vmem:[#allocation10 + $0x410] sm:$0xff]
    %v1020 = vld [vmem:[#allocation10 + $0x418] sm:$0xff]
    %v1021 = vld [vmem:[#allocation10 + $0x420] sm:$0xff]
    %v1022 = vld [vmem:[#allocation10 + $0x428] sm:$0xff]
    %v1023 = vld [vmem:[#allocation10 + $0x430] sm:$0xff]
    %v1024 = vld [vmem:[#allocation10 + $0x438] sm:$0xff]
    %v1025 = vld [vmem:[#allocation10 + $0x440] sm:$0xff]
    %v1026 = vld [vmem:[#allocation10 + $0x448] sm:$0xff]
    %v1027 = vld [vmem:[#allocation10 + $0x450] sm:$0xff]
    %v1028 = vld [vmem:[#allocation10 + $0x458] sm:$0xff]
    %v1029 = vld [vmem:[#allocation10 + $0x460] sm:$0xff]
    %v1030 = vld [vmem:[#allocation10 + $0x468] sm:$0xff]
    %v1031 = vld [vmem:[#allocation10 + $0x470] sm:$0xff]
    %v1032 = vld [vmem:[#allocation10 + $0x478] sm:$0xff]
    %v1033 = vld [vmem:[#allocation10 + $0x480] sm:$0xff]
    %v1034 = vld [vmem:[#allocation10 + $0x488] sm:$0xff]
    %v1035 = vld [vmem:[#allocation10 + $0x490] sm:$0xff]
    %v1036 = vld [vmem:[#allocation10 + $0x498] sm:$0xff]
    %v1037 = vld [vmem:[#allocation10 + $0x4a0] sm:$0xff]
    %v1038 = vld [vmem:[#allocation10 + $0x4a8] sm:$0xff]
    %v1039 = vld [vmem:[#allocation10 + $0x4b0] sm:$0xff]
    %v1040 = vld [vmem:[#allocation10 + $0x4b8] sm:$0xff]
    %v1041 = vld [vmem:[#allocation10 + $0x4c0] sm:$0xff]
    %v1042 = vld [vmem:[#allocation10 + $0x4c8] sm:$0xff]
    %v1043 = vld [vmem:[#allocation10 + $0x4d0] sm:$0xff]
    %v1044 = vld [vmem:[#allocation10 + $0x4d8] sm:$0xff]
    %v1045 = vld [vmem:[#allocation10 + $0x4e0] sm:$0xff]
    %v1046 = vld [vmem:[#allocation10 + $0x4e8] sm:$0xff]
    %v1047 = vld [vmem:[#allocation10 + $0x4f0] sm:$0xff]
    %v1048 = vld [vmem:[#allocation10 + $0x4f8] sm:$0xff]
    %v1049 = vld [vmem:[#allocation10 + $0x500] sm:$0xff]
    %v1050 = vld [vmem:[#allocation10 + $0x508] sm:$0xff]
    %v1051 = vld [vmem:[#allocation10 + $0x510] sm:$0xff]
    %v1052 = vld [vmem:[#allocation10 + $0x518] sm:$0xff]
    %v1053 = vld [vmem:[#allocation10 + $0x520] sm:$0xff]
    %v1054 = vld [vmem:[#allocation10 + $0x528] sm:$0xff]
    %v1055 = vld [vmem:[#allocation10 + $0x530] sm:$0xff]
    %v1056 = vld [vmem:[#allocation10 + $0x538] sm:$0xff]
    %v1057 = vld [vmem:[#allocation10 + $0x540] sm:$0xff]
    %v1058 = vld [vmem:[#allocation10 + $0x548] sm:$0xff]
    %v1059 = vld [vmem:[#allocation10 + $0x550] sm:$0xff]
    %v1060 = vld [vmem:[#allocation10 + $0x558] sm:$0xff]
    %v1061 = vld [vmem:[#allocation10 + $0x560] sm:$0xff]
    %v1062 = vld [vmem:[#allocation10 + $0x568] sm:$0xff]
    %v1063 = vld [vmem:[#allocation10 + $0x570] sm:$0xff]
    %v1064 = vld [vmem:[#allocation10 + $0x578] sm:$0xff]
    %v1065 = vld [vmem:[#allocation10 + $0x580] sm:$0xff]
    %v1066 = vld [vmem:[#allocation10 + $0x588] sm:$0xff]
    %v1067 = vld [vmem:[#allocation10 + $0x590] sm:$0xff]
    %v1068 = vld [vmem:[#allocation10 + $0x598] sm:$0xff]
    %v1069 = vld [vmem:[#allocation10 + $0x5a0] sm:$0xff]
    %v1070 = vld [vmem:[#allocation10 + $0x5a8] sm:$0xff]
    %v1071 = vld [vmem:[#allocation10 + $0x5b0] sm:$0xff]
    %v1072 = vld [vmem:[#allocation10 + $0x5b8] sm:$0xff]
    %v1073 = vld [vmem:[#allocation10 + $0x5c0] sm:$0xff]
    %v1074 = vld [vmem:[#allocation10 + $0x5c8] sm:$0xff]
    %v1075 = vld [vmem:[#allocation10 + $0x5d0] sm:$0xff]
    %v1076 = vld [vmem:[#allocation10 + $0x5d8] sm:$0xff]
    %v1077 = vld [vmem:[#allocation10 + $0x5e0] sm:$0xff]
    %v1078 = vld [vmem:[#allocation10 + $0x5e8] sm:$0xff]
    %v1079 = vld [vmem:[#allocation10 + $0x5f0] sm:$0xff]
    %v1080 = vld [vmem:[#allocation10 + $0x5f8] sm:$0xff]
    %v1081 = vld [vmem:[#allocation10 + $0x600] sm:$0xff]
    %v1082 = vld [vmem:[#allocation10 + $0x608] sm:$0xff]
    %v1083 = vld [vmem:[#allocation10 + $0x610] sm:$0xff]
    %v1084 = vld [vmem:[#allocation10 + $0x618] sm:$0xff]
    %v1085 = vld [vmem:[#allocation10 + $0x620] sm:$0xff]
    %v1086 = vld [vmem:[#allocation10 + $0x628] sm:$0xff]
    %v1087 = vld [vmem:[#allocation10 + $0x630] sm:$0xff]
    %v1088 = vld [vmem:[#allocation10 + $0x638] sm:$0xff]
    %v1089 = vld [vmem:[#allocation10 + $0x640] sm:$0xff]
    %v1090 = vld [vmem:[#allocation10 + $0x648] sm:$0xff]
    %v1091 = vld [vmem:[#allocation10 + $0x650] sm:$0xff]
    %v1092 = vld [vmem:[#allocation10 + $0x658] sm:$0xff]
    %v1093 = vld [vmem:[#allocation10 + $0x660] sm:$0xff]
    %v1094 = vld [vmem:[#allocation10 + $0x668] sm:$0xff]
    %v1095 = vld [vmem:[#allocation10 + $0x670] sm:$0xff]
    %v1096 = vld [vmem:[#allocation10 + $0x678] sm:$0xff]
    %v1097 = vld [vmem:[#allocation10 + $0x680] sm:$0xff]
    %v1098 = vld [vmem:[#allocation10 + $0x688] sm:$0xff]
    %v1099 = vld [vmem:[#allocation10 + $0x690] sm:$0xff]
    %v1100 = vld [vmem:[#allocation10 + $0x698] sm:$0xff]
    %v1101 = vld [vmem:[#allocation10 + $0x6a0] sm:$0xff]
    %v1102 = vld [vmem:[#allocation10 + $0x6a8] sm:$0xff]
    %v1103 = vld [vmem:[#allocation10 + $0x6b0] sm:$0xff]
    %v1104 = vld [vmem:[#allocation10 + $0x6b8] sm:$0xff]
    %v1105 = vld [vmem:[#allocation10 + $0x6c0] sm:$0xff]
    %v1106 = vld [vmem:[#allocation10 + $0x6c8] sm:$0xff]
    %v1107 = vld [vmem:[#allocation10 + $0x6d0] sm:$0xff]
    %v1108 = vld [vmem:[#allocation10 + $0x6d8] sm:$0xff]
    %v1109 = vld [vmem:[#allocation10 + $0x6e0] sm:$0xff]
    %v1110 = vld [vmem:[#allocation10 + $0x6e8] sm:$0xff]
    %v1111 = vld [vmem:[#allocation10 + $0x6f0] sm:$0xff]
    %v1112 = vld [vmem:[#allocation10 + $0x6f8] sm:$0xff]
    %v1113 = vld [vmem:[#allocation10 + $0x700] sm:$0xff]
    %v1114 = vld [vmem:[#allocation10 + $0x708] sm:$0xff]
    %v1115 = vld [vmem:[#allocation10 + $0x710] sm:$0xff]
    %v1116 = vld [vmem:[#allocation10 + $0x718] sm:$0xff]
    %v1117 = vld [vmem:[#allocation10 + $0x720] sm:$0xff]
    %v1118 = vld [vmem:[#allocation10 + $0x728] sm:$0xff]
    %v1119 = vld [vmem:[#allocation10 + $0x730] sm:$0xff]
    %v1120 = vld [vmem:[#allocation10 + $0x738] sm:$0xff]
    %v1121 = vld [vmem:[#allocation10 + $0x740] sm:$0xff]
    %v1122 = vld [vmem:[#allocation10 + $0x748] sm:$0xff]
    %v1123 = vld [vmem:[#allocation10 + $0x750] sm:$0xff]
    %v1124 = vld [vmem:[#allocation10 + $0x758] sm:$0xff]
    %v1125 = vld [vmem:[#allocation10 + $0x760] sm:$0xff]
    %v1126 = vld [vmem:[#allocation10 + $0x768] sm:$0xff]
    %v1127 = vld [vmem:[#allocation10 + $0x770] sm:$0xff]
    %v1128 = vld [vmem:[#allocation10 + $0x778] sm:$0xff]
    %v1129 = vld [vmem:[#allocation10 + $0x780] sm:$0xff]
    %v1130 = vld [vmem:[#allocation10 + $0x788] sm:$0xff]
    %v1131 = vld [vmem:[#allocation10 + $0x790] sm:$0xff]
    %v1132 = vld [vmem:[#allocation10 + $0x798] sm:$0xff]
    %v1133 = vld [vmem:[#allocation10 + $0x7a0] sm:$0xff]
    %v1134 = vld [vmem:[#allocation10 + $0x7a8] sm:$0xff]
    %v1135 = vld [vmem:[#allocation10 + $0x7b0] sm:$0xff]
    %v1136 = vld [vmem:[#allocation10 + $0x7b8] sm:$0xff]
    %v1137 = vld [vmem:[#allocation10 + $0x7c0] sm:$0xff]
    %v1138 = vld [vmem:[#allocation10 + $0x7c8] sm:$0xff]
    %v1139 = vld [vmem:[#allocation10 + $0x7d0] sm:$0xff]
    %v1140 = vld [vmem:[#allocation10 + $0x7d8] sm:$0xff]
    %v1141 = vld [vmem:[#allocation10 + $0x7e0] sm:$0xff]
    %v1142 = vld [vmem:[#allocation10 + $0x7e8] sm:$0xff]
    %v1143 = vld [vmem:[#allocation10 + $0x7f0] sm:$0xff]
    %v1144 = vld [vmem:[#allocation10 + $0x7f8] sm:$0xff]
    %v1145 = vld [vmem:[%s8] sm:$0xff]
    %v1147 = vlaneseq
    %v1148 = vshrl.u32 %v1147, 7
    %v1149 = vsub.s32 0, %v1148
    %v1150 = vrot.slane %v1145, %v1149
    %v1151 = vlaneseq
    %v1152 = vshrl.u32 %v1151, 7
    %v1153 = vsub.s32 1, %v1152
    %v1154 = vrot.slane %v1145, %v1153
    %v1155 = vlaneseq
    %v1156 = vshrl.u32 %v1155, 7
    %v1157 = vsub.s32 2, %v1156
    %v1158 = vrot.slane %v1145, %v1157
    %v1159 = vlaneseq
    %v1160 = vshrl.u32 %v1159, 7
    %v1161 = vsub.s32 3, %v1160
    %v1162 = vrot.slane %v1145, %v1161
    %v1163 = vlaneseq
    %v1164 = vshrl.u32 %v1163, 7
    %v1165 = vsub.s32 4, %v1164
    %v1166 = vrot.slane %v1145, %v1165
    %v1167 = vlaneseq
    %v1168 = vshrl.u32 %v1167, 7
    %v1169 = vsub.s32 5, %v1168
    %v1170 = vrot.slane %v1145, %v1169
    %v1171 = vlaneseq
    %v1172 = vshrl.u32 %v1171, 7
    %v1173 = vsub.s32 6, %v1172
    %v1174 = vrot.slane %v1145, %v1173
    %v1175 = vlaneseq
    %v1176 = vshrl.u32 %v1175, 7
    %v1177 = vsub.s32 7, %v1176
    %v1178 = vrot.slane %v1145, %v1177
    %v1443 = vunpack.c.l.b16 %v889
    %v1444 = vunpack.c.h.b16 %v889
    %v1445 = vunpack.c.l.b16 %v890
    %v1446 = vunpack.c.h.b16 %v890
    %v1447 = vunpack.c.l.b16 %v891
    %v1448 = vunpack.c.h.b16 %v891
    %v1449 = vunpack.c.l.b16 %v892
    %v1450 = vunpack.c.h.b16 %v892
    %v1451 = vunpack.c.l.b16 %v893
    %v1452 = vunpack.c.h.b16 %v893
    %v1453 = vunpack.c.l.b16 %v894
    %v1454 = vunpack.c.h.b16 %v894
    %v1455 = vunpack.c.l.b16 %v895
    %v1456 = vunpack.c.h.b16 %v895
    %v1457 = vunpack.c.l.b16 %v896
    %v1458 = vunpack.c.h.b16 %v896
    %v1459 = vunpack.c.l.b16 %v897
    %v1460 = vunpack.c.h.b16 %v897
    %v1461 = vunpack.c.l.b16 %v898
    %v1462 = vunpack.c.h.b16 %v898
    %v1463 = vunpack.c.l.b16 %v899
    %v1464 = vunpack.c.h.b16 %v899
    %v1465 = vunpack.c.l.b16 %v900
    %v1466 = vunpack.c.h.b16 %v900
    %v1467 = vunpack.c.l.b16 %v901
    %v1468 = vunpack.c.h.b16 %v901
    %v1469 = vunpack.c.l.b16 %v902
    %v1470 = vunpack.c.h.b16 %v902
    %v1471 = vunpack.c.l.b16 %v903
    %v1472 = vunpack.c.h.b16 %v903
    %v1473 = vunpack.c.l.b16 %v904
    %v1474 = vunpack.c.h.b16 %v904
    %v1475 = vunpack.c.l.b16 %v905
    %v1476 = vunpack.c.h.b16 %v905
    %v1477 = vunpack.c.l.b16 %v906
    %v1478 = vunpack.c.h.b16 %v906
    %v1479 = vunpack.c.l.b16 %v907
    %v1480 = vunpack.c.h.b16 %v907
    %v1481 = vunpack.c.l.b16 %v908
    %v1482 = vunpack.c.h.b16 %v908
    %v1483 = vunpack.c.l.b16 %v909
    %v1484 = vunpack.c.h.b16 %v909
    %v1485 = vunpack.c.l.b16 %v910
    %v1486 = vunpack.c.h.b16 %v910
    %v1487 = vunpack.c.l.b16 %v911
    %v1488 = vunpack.c.h.b16 %v911
    %v1489 = vunpack.c.l.b16 %v912
    %v1490 = vunpack.c.h.b16 %v912
    %v1491 = vunpack.c.l.b16 %v913
    %v1492 = vunpack.c.h.b16 %v913
    %v1493 = vunpack.c.l.b16 %v914
    %v1494 = vunpack.c.h.b16 %v914
    %v1495 = vunpack.c.l.b16 %v915
    %v1496 = vunpack.c.h.b16 %v915
    %v1497 = vunpack.c.l.b16 %v916
    %v1498 = vunpack.c.h.b16 %v916
    %v1499 = vunpack.c.l.b16 %v917
    %v1500 = vunpack.c.h.b16 %v917
    %v1501 = vunpack.c.l.b16 %v918
    %v1502 = vunpack.c.h.b16 %v918
    %v1503 = vunpack.c.l.b16 %v919
    %v1504 = vunpack.c.h.b16 %v919
    %v1505 = vunpack.c.l.b16 %v920
    %v1506 = vunpack.c.h.b16 %v920
    %v1507 = vunpack.c.l.b16 %v921
    %v1508 = vunpack.c.h.b16 %v921
    %v1509 = vunpack.c.l.b16 %v922
    %v1510 = vunpack.c.h.b16 %v922
    %v1511 = vunpack.c.l.b16 %v923
    %v1512 = vunpack.c.h.b16 %v923
    %v1513 = vunpack.c.l.b16 %v924
    %v1514 = vunpack.c.h.b16 %v924
    %v1515 = vunpack.c.l.b16 %v925
    %v1516 = vunpack.c.h.b16 %v925
    %v1517 = vunpack.c.l.b16 %v926
    %v1518 = vunpack.c.h.b16 %v926
    %v1519 = vunpack.c.l.b16 %v927
    %v1520 = vunpack.c.h.b16 %v927
    %v1521 = vunpack.c.l.b16 %v928
    %v1522 = vunpack.c.h.b16 %v928
    %v1523 = vunpack.c.l.b16 %v929
    %v1524 = vunpack.c.h.b16 %v929
    %v1525 = vunpack.c.l.b16 %v930
    %v1526 = vunpack.c.h.b16 %v930
    %v1527 = vunpack.c.l.b16 %v931
    %v1528 = vunpack.c.h.b16 %v931
    %v1529 = vunpack.c.l.b16 %v932
    %v1530 = vunpack.c.h.b16 %v932
    %v1531 = vunpack.c.l.b16 %v933
    %v1532 = vunpack.c.h.b16 %v933
    %v1533 = vunpack.c.l.b16 %v934
    %v1534 = vunpack.c.h.b16 %v934
    %v1535 = vunpack.c.l.b16 %v935
    %v1536 = vunpack.c.h.b16 %v935
    %v1537 = vunpack.c.l.b16 %v936
    %v1538 = vunpack.c.h.b16 %v936
    %v1539 = vunpack.c.l.b16 %v937
    %v1540 = vunpack.c.h.b16 %v937
    %v1541 = vunpack.c.l.b16 %v938
    %v1542 = vunpack.c.h.b16 %v938
    %v1543 = vunpack.c.l.b16 %v939
    %v1544 = vunpack.c.h.b16 %v939
    %v1545 = vunpack.c.l.b16 %v940
    %v1546 = vunpack.c.h.b16 %v940
    %v1547 = vunpack.c.l.b16 %v941
    %v1548 = vunpack.c.h.b16 %v941
    %v1549 = vunpack.c.l.b16 %v942
    %v1550 = vunpack.c.h.b16 %v942
    %v1551 = vunpack.c.l.b16 %v943
    %v1552 = vunpack.c.h.b16 %v943
    %v1553 = vunpack.c.l.b16 %v944
    %v1554 = vunpack.c.h.b16 %v944
    %v1555 = vunpack.c.l.b16 %v945
    %v1556 = vunpack.c.h.b16 %v945
    %v1557 = vunpack.c.l.b16 %v946
    %v1558 = vunpack.c.h.b16 %v946
    %v1559 = vunpack.c.l.b16 %v947
    %v1560 = vunpack.c.h.b16 %v947
    %v1561 = vunpack.c.l.b16 %v948
    %v1562 = vunpack.c.h.b16 %v948
    %v1563 = vunpack.c.l.b16 %v949
    %v1564 = vunpack.c.h.b16 %v949
    %v1565 = vunpack.c.l.b16 %v950
    %v1566 = vunpack.c.h.b16 %v950
    %v1567 = vunpack.c.l.b16 %v951
    %v1568 = vunpack.c.h.b16 %v951
    %v1569 = vunpack.c.l.b16 %v952
    %v1570 = vunpack.c.h.b16 %v952
    %v1571 = vunpack.c.l.b16 %v953
    %v1572 = vunpack.c.h.b16 %v953
    %v1573 = vunpack.c.l.b16 %v954
    %v1574 = vunpack.c.h.b16 %v954
    %v1575 = vunpack.c.l.b16 %v955
    %v1576 = vunpack.c.h.b16 %v955
    %v1577 = vunpack.c.l.b16 %v956
    %v1578 = vunpack.c.h.b16 %v956
    %v1579 = vunpack.c.l.b16 %v957
    %v1580 = vunpack.c.h.b16 %v957
    %v1581 = vunpack.c.l.b16 %v958
    %v1582 = vunpack.c.h.b16 %v958
    %v1583 = vunpack.c.l.b16 %v959
    %v1584 = vunpack.c.h.b16 %v959
    %v1585 = vunpack.c.l.b16 %v960
    %v1586 = vunpack.c.h.b16 %v960
    %v1587 = vunpack.c.l.b16 %v961
    %v1588 = vunpack.c.h.b16 %v961
    %v1589 = vunpack.c.l.b16 %v962
    %v1590 = vunpack.c.h.b16 %v962
    %v1591 = vunpack.c.l.b16 %v963
    %v1592 = vunpack.c.h.b16 %v963
    %v1593 = vunpack.c.l.b16 %v964
    %v1594 = vunpack.c.h.b16 %v964
    %v1595 = vunpack.c.l.b16 %v965
    %v1596 = vunpack.c.h.b16 %v965
    %v1597 = vunpack.c.l.b16 %v966
    %v1598 = vunpack.c.h.b16 %v966
    %v1599 = vunpack.c.l.b16 %v967
    %v1600 = vunpack.c.h.b16 %v967
    %v1601 = vunpack.c.l.b16 %v968
    %v1602 = vunpack.c.h.b16 %v968
    %v1603 = vunpack.c.l.b16 %v969
    %v1604 = vunpack.c.h.b16 %v969
    %v1605 = vunpack.c.l.b16 %v970
    %v1606 = vunpack.c.h.b16 %v970
    %v1607 = vunpack.c.l.b16 %v971
    %v1608 = vunpack.c.h.b16 %v971
    %v1609 = vunpack.c.l.b16 %v972
    %v1610 = vunpack.c.h.b16 %v972
    %v1611 = vunpack.c.l.b16 %v973
    %v1612 = vunpack.c.h.b16 %v973
    %v1613 = vunpack.c.l.b16 %v974
    %v1614 = vunpack.c.h.b16 %v974
    %v1615 = vunpack.c.l.b16 %v975
    %v1616 = vunpack.c.h.b16 %v975
    %v1617 = vunpack.c.l.b16 %v976
    %v1618 = vunpack.c.h.b16 %v976
    %v1619 = vunpack.c.l.b16 %v977
    %v1620 = vunpack.c.h.b16 %v977
    %v1621 = vunpack.c.l.b16 %v978
    %v1622 = vunpack.c.h.b16 %v978
    %v1623 = vunpack.c.l.b16 %v979
    %v1624 = vunpack.c.h.b16 %v979
    %v1625 = vunpack.c.l.b16 %v980
    %v1626 = vunpack.c.h.b16 %v980
    %v1627 = vunpack.c.l.b16 %v981
    %v1628 = vunpack.c.h.b16 %v981
    %v1629 = vunpack.c.l.b16 %v982
    %v1630 = vunpack.c.h.b16 %v982
    %v1631 = vunpack.c.l.b16 %v983
    %v1632 = vunpack.c.h.b16 %v983
    %v1633 = vunpack.c.l.b16 %v984
    %v1634 = vunpack.c.h.b16 %v984
    %v1635 = vunpack.c.l.b16 %v985
    %v1636 = vunpack.c.h.b16 %v985
    %v1637 = vunpack.c.l.b16 %v986
    %v1638 = vunpack.c.h.b16 %v986
    %v1639 = vunpack.c.l.b16 %v987
    %v1640 = vunpack.c.h.b16 %v987
    %v1641 = vunpack.c.l.b16 %v988
    %v1642 = vunpack.c.h.b16 %v988
    %v1643 = vunpack.c.l.b16 %v989
    %v1644 = vunpack.c.h.b16 %v989
    %v1645 = vunpack.c.l.b16 %v990
    %v1646 = vunpack.c.h.b16 %v990
    %v1647 = vunpack.c.l.b16 %v991
    %v1648 = vunpack.c.h.b16 %v991
    %v1649 = vunpack.c.l.b16 %v992
    %v1650 = vunpack.c.h.b16 %v992
    %v1651 = vunpack.c.l.b16 %v993
    %v1652 = vunpack.c.h.b16 %v993
    %v1653 = vunpack.c.l.b16 %v994
    %v1654 = vunpack.c.h.b16 %v994
    %v1655 = vunpack.c.l.b16 %v995
    %v1656 = vunpack.c.h.b16 %v995
    %v1657 = vunpack.c.l.b16 %v996
    %v1658 = vunpack.c.h.b16 %v996
    %v1659 = vunpack.c.l.b16 %v997
    %v1660 = vunpack.c.h.b16 %v997
    %v1661 = vunpack.c.l.b16 %v998
    %v1662 = vunpack.c.h.b16 %v998
    %v1663 = vunpack.c.l.b16 %v999
    %v1664 = vunpack.c.h.b16 %v999
    %v1665 = vunpack.c.l.b16 %v1000
    %v1666 = vunpack.c.h.b16 %v1000
    %v1667 = vunpack.c.l.b16 %v1001
    %v1668 = vunpack.c.h.b16 %v1001
    %v1669 = vunpack.c.l.b16 %v1002
    %v1670 = vunpack.c.h.b16 %v1002
    %v1671 = vunpack.c.l.b16 %v1003
    %v1672 = vunpack.c.h.b16 %v1003
    %v1673 = vunpack.c.l.b16 %v1004
    %v1674 = vunpack.c.h.b16 %v1004
    %v1675 = vunpack.c.l.b16 %v1005
    %v1676 = vunpack.c.h.b16 %v1005
    %v1677 = vunpack.c.l.b16 %v1006
    %v1678 = vunpack.c.h.b16 %v1006
    %v1679 = vunpack.c.l.b16 %v1007
    %v1680 = vunpack.c.h.b16 %v1007
    %v1681 = vunpack.c.l.b16 %v1008
    %v1682 = vunpack.c.h.b16 %v1008
    %v1683 = vunpack.c.l.b16 %v1009
    %v1684 = vunpack.c.h.b16 %v1009
    %v1685 = vunpack.c.l.b16 %v1010
    %v1686 = vunpack.c.h.b16 %v1010
    %v1687 = vunpack.c.l.b16 %v1011
    %v1688 = vunpack.c.h.b16 %v1011
    %v1689 = vunpack.c.l.b16 %v1012
    %v1690 = vunpack.c.h.b16 %v1012
    %v1691 = vunpack.c.l.b16 %v1013
    %v1692 = vunpack.c.h.b16 %v1013
    %v1693 = vunpack.c.l.b16 %v1014
    %v1694 = vunpack.c.h.b16 %v1014
    %v1695 = vunpack.c.l.b16 %v1015
    %v1696 = vunpack.c.h.b16 %v1015
    %v1697 = vunpack.c.l.b16 %v1016
    %v1698 = vunpack.c.h.b16 %v1016
    %v1699 = vunpack.c.l.b16 %v1017
    %v1700 = vunpack.c.h.b16 %v1017
    %v1701 = vunpack.c.l.b16 %v1018
    %v1702 = vunpack.c.h.b16 %v1018
    %v1703 = vunpack.c.l.b16 %v1019
    %v1704 = vunpack.c.h.b16 %v1019
    %v1705 = vunpack.c.l.b16 %v1020
    %v1706 = vunpack.c.h.b16 %v1020
    %v1707 = vunpack.c.l.b16 %v1021
    %v1708 = vunpack.c.h.b16 %v1021
    %v1709 = vunpack.c.l.b16 %v1022
    %v1710 = vunpack.c.h.b16 %v1022
    %v1711 = vunpack.c.l.b16 %v1023
    %v1712 = vunpack.c.h.b16 %v1023
    %v1713 = vunpack.c.l.b16 %v1024
    %v1714 = vunpack.c.h.b16 %v1024
    %v1715 = vunpack.c.l.b16 %v1025
    %v1716 = vunpack.c.h.b16 %v1025
    %v1717 = vunpack.c.l.b16 %v1026
    %v1718 = vunpack.c.h.b16 %v1026
    %v1719 = vunpack.c.l.b16 %v1027
    %v1720 = vunpack.c.h.b16 %v1027
    %v1721 = vunpack.c.l.b16 %v1028
    %v1722 = vunpack.c.h.b16 %v1028
    %v1723 = vunpack.c.l.b16 %v1029
    %v1724 = vunpack.c.h.b16 %v1029
    %v1725 = vunpack.c.l.b16 %v1030
    %v1726 = vunpack.c.h.b16 %v1030
    %v1727 = vunpack.c.l.b16 %v1031
    %v1728 = vunpack.c.h.b16 %v1031
    %v1729 = vunpack.c.l.b16 %v1032
    %v1730 = vunpack.c.h.b16 %v1032
    %v1731 = vunpack.c.l.b16 %v1033
    %v1732 = vunpack.c.h.b16 %v1033
    %v1733 = vunpack.c.l.b16 %v1034
    %v1734 = vunpack.c.h.b16 %v1034
    %v1735 = vunpack.c.l.b16 %v1035
    %v1736 = vunpack.c.h.b16 %v1035
    %v1737 = vunpack.c.l.b16 %v1036
    %v1738 = vunpack.c.h.b16 %v1036
    %v1739 = vunpack.c.l.b16 %v1037
    %v1740 = vunpack.c.h.b16 %v1037
    %v1741 = vunpack.c.l.b16 %v1038
    %v1742 = vunpack.c.h.b16 %v1038
    %v1743 = vunpack.c.l.b16 %v1039
    %v1744 = vunpack.c.h.b16 %v1039
    %v1745 = vunpack.c.l.b16 %v1040
    %v1746 = vunpack.c.h.b16 %v1040
    %v1747 = vunpack.c.l.b16 %v1041
    %v1748 = vunpack.c.h.b16 %v1041
    %v1749 = vunpack.c.l.b16 %v1042
    %v1750 = vunpack.c.h.b16 %v1042
    %v1751 = vunpack.c.l.b16 %v1043
    %v1752 = vunpack.c.h.b16 %v1043
    %v1753 = vunpack.c.l.b16 %v1044
    %v1754 = vunpack.c.h.b16 %v1044
    %v1755 = vunpack.c.l.b16 %v1045
    %v1756 = vunpack.c.h.b16 %v1045
    %v1757 = vunpack.c.l.b16 %v1046
    %v1758 = vunpack.c.h.b16 %v1046
    %v1759 = vunpack.c.l.b16 %v1047
    %v1760 = vunpack.c.h.b16 %v1047
    %v1761 = vunpack.c.l.b16 %v1048
    %v1762 = vunpack.c.h.b16 %v1048
    %v1763 = vunpack.c.l.b16 %v1049
    %v1764 = vunpack.c.h.b16 %v1049
    %v1765 = vunpack.c.l.b16 %v1050
    %v1766 = vunpack.c.h.b16 %v1050
    %v1767 = vunpack.c.l.b16 %v1051
    %v1768 = vunpack.c.h.b16 %v1051
    %v1769 = vunpack.c.l.b16 %v1052
    %v1770 = vunpack.c.h.b16 %v1052
    %v1771 = vunpack.c.l.b16 %v1053
    %v1772 = vunpack.c.h.b16 %v1053
    %v1773 = vunpack.c.l.b16 %v1054
    %v1774 = vunpack.c.h.b16 %v1054
    %v1775 = vunpack.c.l.b16 %v1055
    %v1776 = vunpack.c.h.b16 %v1055
    %v1777 = vunpack.c.l.b16 %v1056
    %v1778 = vunpack.c.h.b16 %v1056
    %v1779 = vunpack.c.l.b16 %v1057
    %v1780 = vunpack.c.h.b16 %v1057
    %v1781 = vunpack.c.l.b16 %v1058
    %v1782 = vunpack.c.h.b16 %v1058
    %v1783 = vunpack.c.l.b16 %v1059
    %v1784 = vunpack.c.h.b16 %v1059
    %v1785 = vunpack.c.l.b16 %v1060
    %v1786 = vunpack.c.h.b16 %v1060
    %v1787 = vunpack.c.l.b16 %v1061
    %v1788 = vunpack.c.h.b16 %v1061
    %v1789 = vunpack.c.l.b16 %v1062
    %v1790 = vunpack.c.h.b16 %v1062
    %v1791 = vunpack.c.l.b16 %v1063
    %v1792 = vunpack.c.h.b16 %v1063
    %v1793 = vunpack.c.l.b16 %v1064
    %v1794 = vunpack.c.h.b16 %v1064
    %v1795 = vunpack.c.l.b16 %v1065
    %v1796 = vunpack.c.h.b16 %v1065
    %v1797 = vunpack.c.l.b16 %v1066
    %v1798 = vunpack.c.h.b16 %v1066
    %v1799 = vunpack.c.l.b16 %v1067
    %v1800 = vunpack.c.h.b16 %v1067
    %v1801 = vunpack.c.l.b16 %v1068
    %v1802 = vunpack.c.h.b16 %v1068
    %v1803 = vunpack.c.l.b16 %v1069
    %v1804 = vunpack.c.h.b16 %v1069
    %v1805 = vunpack.c.l.b16 %v1070
    %v1806 = vunpack.c.h.b16 %v1070
    %v1807 = vunpack.c.l.b16 %v1071
    %v1808 = vunpack.c.h.b16 %v1071
    %v1809 = vunpack.c.l.b16 %v1072
    %v1810 = vunpack.c.h.b16 %v1072
    %v1811 = vunpack.c.l.b16 %v1073
    %v1812 = vunpack.c.h.b16 %v1073
    %v1813 = vunpack.c.l.b16 %v1074
    %v1814 = vunpack.c.h.b16 %v1074
    %v1815 = vunpack.c.l.b16 %v1075
    %v1816 = vunpack.c.h.b16 %v1075
    %v1817 = vunpack.c.l.b16 %v1076
    %v1818 = vunpack.c.h.b16 %v1076
    %v1819 = vunpack.c.l.b16 %v1077
    %v1820 = vunpack.c.h.b16 %v1077
    %v1821 = vunpack.c.l.b16 %v1078
    %v1822 = vunpack.c.h.b16 %v1078
    %v1823 = vunpack.c.l.b16 %v1079
    %v1824 = vunpack.c.h.b16 %v1079
    %v1825 = vunpack.c.l.b16 %v1080
    %v1826 = vunpack.c.h.b16 %v1080
    %v1827 = vunpack.c.l.b16 %v1081
    %v1828 = vunpack.c.h.b16 %v1081
    %v1829 = vunpack.c.l.b16 %v1082
    %v1830 = vunpack.c.h.b16 %v1082
    %v1831 = vunpack.c.l.b16 %v1083
    %v1832 = vunpack.c.h.b16 %v1083
    %v1833 = vunpack.c.l.b16 %v1084
    %v1834 = vunpack.c.h.b16 %v1084
    %v1835 = vunpack.c.l.b16 %v1085
    %v1836 = vunpack.c.h.b16 %v1085
    %v1837 = vunpack.c.l.b16 %v1086
    %v1838 = vunpack.c.h.b16 %v1086
    %v1839 = vunpack.c.l.b16 %v1087
    %v1840 = vunpack.c.h.b16 %v1087
    %v1841 = vunpack.c.l.b16 %v1088
    %v1842 = vunpack.c.h.b16 %v1088
    %v1843 = vunpack.c.l.b16 %v1089
    %v1844 = vunpack.c.h.b16 %v1089
    %v1845 = vunpack.c.l.b16 %v1090
    %v1846 = vunpack.c.h.b16 %v1090
    %v1847 = vunpack.c.l.b16 %v1091
    %v1848 = vunpack.c.h.b16 %v1091
    %v1849 = vunpack.c.l.b16 %v1092
    %v1850 = vunpack.c.h.b16 %v1092
    %v1851 = vunpack.c.l.b16 %v1093
    %v1852 = vunpack.c.h.b16 %v1093
    %v1853 = vunpack.c.l.b16 %v1094
    %v1854 = vunpack.c.h.b16 %v1094
    %v1855 = vunpack.c.l.b16 %v1095
    %v1856 = vunpack.c.h.b16 %v1095
    %v1857 = vunpack.c.l.b16 %v1096
    %v1858 = vunpack.c.h.b16 %v1096
    %v1859 = vunpack.c.l.b16 %v1097
    %v1860 = vunpack.c.h.b16 %v1097
    %v1861 = vunpack.c.l.b16 %v1098
    %v1862 = vunpack.c.h.b16 %v1098
    %v1863 = vunpack.c.l.b16 %v1099
    %v1864 = vunpack.c.h.b16 %v1099
    %v1865 = vunpack.c.l.b16 %v1100
    %v1866 = vunpack.c.h.b16 %v1100
    %v1867 = vunpack.c.l.b16 %v1101
    %v1868 = vunpack.c.h.b16 %v1101
    %v1869 = vunpack.c.l.b16 %v1102
    %v1870 = vunpack.c.h.b16 %v1102
    %v1871 = vunpack.c.l.b16 %v1103
    %v1872 = vunpack.c.h.b16 %v1103
    %v1873 = vunpack.c.l.b16 %v1104
    %v1874 = vunpack.c.h.b16 %v1104
    %v1875 = vunpack.c.l.b16 %v1105
    %v1876 = vunpack.c.h.b16 %v1105
    %v1877 = vunpack.c.l.b16 %v1106
    %v1878 = vunpack.c.h.b16 %v1106
    %v1879 = vunpack.c.l.b16 %v1107
    %v1880 = vunpack.c.h.b16 %v1107
    %v1881 = vunpack.c.l.b16 %v1108
    %v1882 = vunpack.c.h.b16 %v1108
    %v1883 = vunpack.c.l.b16 %v1109
    %v1884 = vunpack.c.h.b16 %v1109
    %v1885 = vunpack.c.l.b16 %v1110
    %v1886 = vunpack.c.h.b16 %v1110
    %v1887 = vunpack.c.l.b16 %v1111
    %v1888 = vunpack.c.h.b16 %v1111
    %v1889 = vunpack.c.l.b16 %v1112
    %v1890 = vunpack.c.h.b16 %v1112
    %v1891 = vunpack.c.l.b16 %v1113
    %v1892 = vunpack.c.h.b16 %v1113
    %v1893 = vunpack.c.l.b16 %v1114
    %v1894 = vunpack.c.h.b16 %v1114
    %v1895 = vunpack.c.l.b16 %v1115
    %v1896 = vunpack.c.h.b16 %v1115
    %v1897 = vunpack.c.l.b16 %v1116
    %v1898 = vunpack.c.h.b16 %v1116
    %v1899 = vunpack.c.l.b16 %v1117
    %v1900 = vunpack.c.h.b16 %v1117
    %v1901 = vunpack.c.l.b16 %v1118
    %v1902 = vunpack.c.h.b16 %v1118
    %v1903 = vunpack.c.l.b16 %v1119
    %v1904 = vunpack.c.h.b16 %v1119
    %v1905 = vunpack.c.l.b16 %v1120
    %v1906 = vunpack.c.h.b16 %v1120
    %v1907 = vunpack.c.l.b16 %v1121
    %v1908 = vunpack.c.h.b16 %v1121
    %v1909 = vunpack.c.l.b16 %v1122
    %v1910 = vunpack.c.h.b16 %v1122
    %v1911 = vunpack.c.l.b16 %v1123
    %v1912 = vunpack.c.h.b16 %v1123
    %v1913 = vunpack.c.l.b16 %v1124
    %v1914 = vunpack.c.h.b16 %v1124
    %v1915 = vunpack.c.l.b16 %v1125
    %v1916 = vunpack.c.h.b16 %v1125
    %v1917 = vunpack.c.l.b16 %v1126
    %v1918 = vunpack.c.h.b16 %v1126
    %v1919 = vunpack.c.l.b16 %v1127
    %v1920 = vunpack.c.h.b16 %v1127
    %v1921 = vunpack.c.l.b16 %v1128
    %v1922 = vunpack.c.h.b16 %v1128
    %v1923 = vunpack.c.l.b16 %v1129
    %v1924 = vunpack.c.h.b16 %v1129
    %v1925 = vunpack.c.l.b16 %v1130
    %v1926 = vunpack.c.h.b16 %v1130
    %v1927 = vunpack.c.l.b16 %v1131
    %v1928 = vunpack.c.h.b16 %v1131
    %v1929 = vunpack.c.l.b16 %v1132
    %v1930 = vunpack.c.h.b16 %v1132
    %v1931 = vunpack.c.l.b16 %v1133
    %v1932 = vunpack.c.h.b16 %v1133
    %v1933 = vunpack.c.l.b16 %v1134
    %v1934 = vunpack.c.h.b16 %v1134
    %v1935 = vunpack.c.l.b16 %v1135
    %v1936 = vunpack.c.h.b16 %v1135
    %v1937 = vunpack.c.l.b16 %v1136
    %v1938 = vunpack.c.h.b16 %v1136
    %v1939 = vunpack.c.l.b16 %v1137
    %v1940 = vunpack.c.h.b16 %v1137
    %v1941 = vunpack.c.l.b16 %v1138
    %v1942 = vunpack.c.h.b16 %v1138
    %v1943 = vunpack.c.l.b16 %v1139
    %v1944 = vunpack.c.h.b16 %v1139
    %v1945 = vunpack.c.l.b16 %v1140
    %v1946 = vunpack.c.h.b16 %v1140
    %v1947 = vunpack.c.l.b16 %v1141
    %v1948 = vunpack.c.h.b16 %v1141
    %v1949 = vunpack.c.l.b16 %v1142
    %v1950 = vunpack.c.h.b16 %v1142
    %v1951 = vunpack.c.l.b16 %v1143
    %v1952 = vunpack.c.h.b16 %v1143
    %v1953 = vunpack.c.l.b16 %v1144
    %v1954 = vunpack.c.h.b16 %v1144
    %v1955 = vpack.c.b16 %v1451, %v1443
    %v1956 = vpack.c.b16 %v1452, %v1444
    %v1957 = vpack.c.b16 %v1453, %v1445
    %v1958 = vpack.c.b16 %v1454, %v1446
    %v1959 = vpack.c.b16 %v1455, %v1447
    %v1960 = vpack.c.b16 %v1456, %v1448
    %v1961 = vpack.c.b16 %v1457, %v1449
    %v1962 = vpack.c.b16 %v1458, %v1450
    %v1963 = vpack.c.b16 %v1467, %v1459
    %v1964 = vpack.c.b16 %v1468, %v1460
    %v1965 = vpack.c.b16 %v1469, %v1461
    %v1966 = vpack.c.b16 %v1470, %v1462
    %v1967 = vpack.c.b16 %v1471, %v1463
    %v1968 = vpack.c.b16 %v1472, %v1464
    %v1969 = vpack.c.b16 %v1473, %v1465
    %v1970 = vpack.c.b16 %v1474, %v1466
    %v1971 = vpack.c.b16 %v1483, %v1475
    %v1972 = vpack.c.b16 %v1484, %v1476
    %v1973 = vpack.c.b16 %v1485, %v1477
    %v1974 = vpack.c.b16 %v1486, %v1478
    %v1975 = vpack.c.b16 %v1487, %v1479
    %v1976 = vpack.c.b16 %v1488, %v1480
    %v1977 = vpack.c.b16 %v1489, %v1481
    %v1978 = vpack.c.b16 %v1490, %v1482
    %v1979 = vpack.c.b16 %v1499, %v1491
    %v1980 = vpack.c.b16 %v1500, %v1492
    %v1981 = vpack.c.b16 %v1501, %v1493
    %v1982 = vpack.c.b16 %v1502, %v1494
    %v1983 = vpack.c.b16 %v1503, %v1495
    %v1984 = vpack.c.b16 %v1504, %v1496
    %v1985 = vpack.c.b16 %v1505, %v1497
    %v1986 = vpack.c.b16 %v1506, %v1498
    %v1987 = vpack.c.b16 %v1515, %v1507
    %v1988 = vpack.c.b16 %v1516, %v1508
    %v1989 = vpack.c.b16 %v1517, %v1509
    %v1990 = vpack.c.b16 %v1518, %v1510
    %v1991 = vpack.c.b16 %v1519, %v1511
    %v1992 = vpack.c.b16 %v1520, %v1512
    %v1993 = vpack.c.b16 %v1521, %v1513
    %v1994 = vpack.c.b16 %v1522, %v1514
    %v1995 = vpack.c.b16 %v1531, %v1523
    %v1996 = vpack.c.b16 %v1532, %v1524
    %v1997 = vpack.c.b16 %v1533, %v1525
    %v1998 = vpack.c.b16 %v1534, %v1526
    %v1999 = vpack.c.b16 %v1535, %v1527
    %v2000 = vpack.c.b16 %v1536, %v1528
    %v2001 = vpack.c.b16 %v1537, %v1529
    %v2002 = vpack.c.b16 %v1538, %v1530
    %v2003 = vpack.c.b16 %v1547, %v1539
    %v2004 = vpack.c.b16 %v1548, %v1540
    %v2005 = vpack.c.b16 %v1549, %v1541
    %v2006 = vpack.c.b16 %v1550, %v1542
    %v2007 = vpack.c.b16 %v1551, %v1543
    %v2008 = vpack.c.b16 %v1552, %v1544
    %v2009 = vpack.c.b16 %v1553, %v1545
    %v2010 = vpack.c.b16 %v1554, %v1546
    %v2011 = vpack.c.b16 %v1563, %v1555
    %v2012 = vpack.c.b16 %v1564, %v1556
    %v2013 = vpack.c.b16 %v1565, %v1557
    %v2014 = vpack.c.b16 %v1566, %v1558
    %v2015 = vpack.c.b16 %v1567, %v1559
    %v2016 = vpack.c.b16 %v1568, %v1560
    %v2017 = vpack.c.b16 %v1569, %v1561
    %v2018 = vpack.c.b16 %v1570, %v1562
    %v2019 = vpack.c.b16 %v1579, %v1571
    %v2020 = vpack.c.b16 %v1580, %v1572
    %v2021 = vpack.c.b16 %v1581, %v1573
    %v2022 = vpack.c.b16 %v1582, %v1574
    %v2023 = vpack.c.b16 %v1583, %v1575
    %v2024 = vpack.c.b16 %v1584, %v1576
    %v2025 = vpack.c.b16 %v1585, %v1577
    %v2026 = vpack.c.b16 %v1586, %v1578
    %v2027 = vpack.c.b16 %v1595, %v1587
    %v2028 = vpack.c.b16 %v1596, %v1588
    %v2029 = vpack.c.b16 %v1597, %v1589
    %v2030 = vpack.c.b16 %v1598, %v1590
    %v2031 = vpack.c.b16 %v1599, %v1591
    %v2032 = vpack.c.b16 %v1600, %v1592
    %v2033 = vpack.c.b16 %v1601, %v1593
    %v2034 = vpack.c.b16 %v1602, %v1594
    %v2035 = vpack.c.b16 %v1611, %v1603
    %v2036 = vpack.c.b16 %v1612, %v1604
    %v2037 = vpack.c.b16 %v1613, %v1605
    %v2038 = vpack.c.b16 %v1614, %v1606
    %v2039 = vpack.c.b16 %v1615, %v1607
    %v2040 = vpack.c.b16 %v1616, %v1608
    %v2041 = vpack.c.b16 %v1617, %v1609
    %v2042 = vpack.c.b16 %v1618, %v1610
    %v2043 = vpack.c.b16 %v1627, %v1619
    %v2044 = vpack.c.b16 %v1628, %v1620
    %v2045 = vpack.c.b16 %v1629, %v1621
    %v2046 = vpack.c.b16 %v1630, %v1622
    %v2047 = vpack.c.b16 %v1631, %v1623
    %v2048 = vpack.c.b16 %v1632, %v1624
    %v2049 = vpack.c.b16 %v1633, %v1625
    %v2050 = vpack.c.b16 %v1634, %v1626
    %v2051 = vpack.c.b16 %v1643, %v1635
    %v2052 = vpack.c.b16 %v1644, %v1636
    %v2053 = vpack.c.b16 %v1645, %v1637
    %v2054 = vpack.c.b16 %v1646, %v1638
    %v2055 = vpack.c.b16 %v1647, %v1639
    %v2056 = vpack.c.b16 %v1648, %v1640
    %v2057 = vpack.c.b16 %v1649, %v1641
    %v2058 = vpack.c.b16 %v1650, %v1642
    %v2059 = vpack.c.b16 %v1659, %v1651
    %v2060 = vpack.c.b16 %v1660, %v1652
    %v2061 = vpack.c.b16 %v1661, %v1653
    %v2062 = vpack.c.b16 %v1662, %v1654
    %v2063 = vpack.c.b16 %v1663, %v1655
    %v2064 = vpack.c.b16 %v1664, %v1656
    %v2065 = vpack.c.b16 %v1665, %v1657
    %v2066 = vpack.c.b16 %v1666, %v1658
    %v2067 = vpack.c.b16 %v1675, %v1667
    %v2068 = vpack.c.b16 %v1676, %v1668
    %v2069 = vpack.c.b16 %v1677, %v1669
    %v2070 = vpack.c.b16 %v1678, %v1670
    %v2071 = vpack.c.b16 %v1679, %v1671
    %v2072 = vpack.c.b16 %v1680, %v1672
    %v2073 = vpack.c.b16 %v1681, %v1673
    %v2074 = vpack.c.b16 %v1682, %v1674
    %v2075 = vpack.c.b16 %v1691, %v1683
    %v2076 = vpack.c.b16 %v1692, %v1684
    %v2077 = vpack.c.b16 %v1693, %v1685
    %v2078 = vpack.c.b16 %v1694, %v1686
    %v2079 = vpack.c.b16 %v1695, %v1687
    %v2080 = vpack.c.b16 %v1696, %v1688
    %v2081 = vpack.c.b16 %v1697, %v1689
    %v2082 = vpack.c.b16 %v1698, %v1690
    %v2083 = vpack.c.b16 %v1707, %v1699
    %v2084 = vpack.c.b16 %v1708, %v1700
    %v2085 = vpack.c.b16 %v1709, %v1701
    %v2086 = vpack.c.b16 %v1710, %v1702
    %v2087 = vpack.c.b16 %v1711, %v1703
    %v2088 = vpack.c.b16 %v1712, %v1704
    %v2089 = vpack.c.b16 %v1713, %v1705
    %v2090 = vpack.c.b16 %v1714, %v1706
    %v2091 = vpack.c.b16 %v1723, %v1715
    %v2092 = vpack.c.b16 %v1724, %v1716
    %v2093 = vpack.c.b16 %v1725, %v1717
    %v2094 = vpack.c.b16 %v1726, %v1718
    %v2095 = vpack.c.b16 %v1727, %v1719
    %v2096 = vpack.c.b16 %v1728, %v1720
    %v2097 = vpack.c.b16 %v1729, %v1721
    %v2098 = vpack.c.b16 %v1730, %v1722
    %v2099 = vpack.c.b16 %v1739, %v1731
    %v2100 = vpack.c.b16 %v1740, %v1732
    %v2101 = vpack.c.b16 %v1741, %v1733
    %v2102 = vpack.c.b16 %v1742, %v1734
    %v2103 = vpack.c.b16 %v1743, %v1735
    %v2104 = vpack.c.b16 %v1744, %v1736
    %v2105 = vpack.c.b16 %v1745, %v1737
    %v2106 = vpack.c.b16 %v1746, %v1738
    %v2107 = vpack.c.b16 %v1755, %v1747
    %v2108 = vpack.c.b16 %v1756, %v1748
    %v2109 = vpack.c.b16 %v1757, %v1749
    %v2110 = vpack.c.b16 %v1758, %v1750
    %v2111 = vpack.c.b16 %v1759, %v1751
    %v2112 = vpack.c.b16 %v1760, %v1752
    %v2113 = vpack.c.b16 %v1761, %v1753
    %v2114 = vpack.c.b16 %v1762, %v1754
    %v2115 = vpack.c.b16 %v1771, %v1763
    %v2116 = vpack.c.b16 %v1772, %v1764
    %v2117 = vpack.c.b16 %v1773, %v1765
    %v2118 = vpack.c.b16 %v1774, %v1766
    %v2119 = vpack.c.b16 %v1775, %v1767
    %v2120 = vpack.c.b16 %v1776, %v1768
    %v2121 = vpack.c.b16 %v1777, %v1769
    %v2122 = vpack.c.b16 %v1778, %v1770
    %v2123 = vpack.c.b16 %v1787, %v1779
    %v2124 = vpack.c.b16 %v1788, %v1780
    %v2125 = vpack.c.b16 %v1789, %v1781
    %v2126 = vpack.c.b16 %v1790, %v1782
    %v2127 = vpack.c.b16 %v1791, %v1783
    %v2128 = vpack.c.b16 %v1792, %v1784
    %v2129 = vpack.c.b16 %v1793, %v1785
    %v2130 = vpack.c.b16 %v1794, %v1786
    %v2131 = vpack.c.b16 %v1803, %v1795
    %v2132 = vpack.c.b16 %v1804, %v1796
    %v2133 = vpack.c.b16 %v1805, %v1797
    %v2134 = vpack.c.b16 %v1806, %v1798
    %v2135 = vpack.c.b16 %v1807, %v1799
    %v2136 = vpack.c.b16 %v1808, %v1800
    %v2137 = vpack.c.b16 %v1809, %v1801
    %v2138 = vpack.c.b16 %v1810, %v1802
    %v2139 = vpack.c.b16 %v1819, %v1811
    %v2140 = vpack.c.b16 %v1820, %v1812
    %v2141 = vpack.c.b16 %v1821, %v1813
    %v2142 = vpack.c.b16 %v1822, %v1814
    %v2143 = vpack.c.b16 %v1823, %v1815
    %v2144 = vpack.c.b16 %v1824, %v1816
    %v2145 = vpack.c.b16 %v1825, %v1817
    %v2146 = vpack.c.b16 %v1826, %v1818
    %v2147 = vpack.c.b16 %v1835, %v1827
    %v2148 = vpack.c.b16 %v1836, %v1828
    %v2149 = vpack.c.b16 %v1837, %v1829
    %v2150 = vpack.c.b16 %v1838, %v1830
    %v2151 = vpack.c.b16 %v1839, %v1831
    %v2152 = vpack.c.b16 %v1840, %v1832
    %v2153 = vpack.c.b16 %v1841, %v1833
    %v2154 = vpack.c.b16 %v1842, %v1834
    %v2155 = vpack.c.b16 %v1851, %v1843
    %v2156 = vpack.c.b16 %v1852, %v1844
    %v2157 = vpack.c.b16 %v1853, %v1845
    %v2158 = vpack.c.b16 %v1854, %v1846
    %v2159 = vpack.c.b16 %v1855, %v1847
    %v2160 = vpack.c.b16 %v1856, %v1848
    %v2161 = vpack.c.b16 %v1857, %v1849
    %v2162 = vpack.c.b16 %v1858, %v1850
    %v2163 = vpack.c.b16 %v1867, %v1859
    %v2164 = vpack.c.b16 %v1868, %v1860
    %v2165 = vpack.c.b16 %v1869, %v1861
    %v2166 = vpack.c.b16 %v1870, %v1862
    %v2167 = vpack.c.b16 %v1871, %v1863
    %v2168 = vpack.c.b16 %v1872, %v1864
    %v2169 = vpack.c.b16 %v1873, %v1865
    %v2170 = vpack.c.b16 %v1874, %v1866
    %v2171 = vpack.c.b16 %v1883, %v1875
    %v2172 = vpack.c.b16 %v1884, %v1876
    %v2173 = vpack.c.b16 %v1885, %v1877
    %v2174 = vpack.c.b16 %v1886, %v1878
    %v2175 = vpack.c.b16 %v1887, %v1879
    %v2176 = vpack.c.b16 %v1888, %v1880
    %v2177 = vpack.c.b16 %v1889, %v1881
    %v2178 = vpack.c.b16 %v1890, %v1882
    %v2179 = vpack.c.b16 %v1899, %v1891
    %v2180 = vpack.c.b16 %v1900, %v1892
    %v2181 = vpack.c.b16 %v1901, %v1893
    %v2182 = vpack.c.b16 %v1902, %v1894
    %v2183 = vpack.c.b16 %v1903, %v1895
    %v2184 = vpack.c.b16 %v1904, %v1896
    %v2185 = vpack.c.b16 %v1905, %v1897
    %v2186 = vpack.c.b16 %v1906, %v1898
    %v2187 = vpack.c.b16 %v1915, %v1907
    %v2188 = vpack.c.b16 %v1916, %v1908
    %v2189 = vpack.c.b16 %v1917, %v1909
    %v2190 = vpack.c.b16 %v1918, %v1910
    %v2191 = vpack.c.b16 %v1919, %v1911
    %v2192 = vpack.c.b16 %v1920, %v1912
    %v2193 = vpack.c.b16 %v1921, %v1913
    %v2194 = vpack.c.b16 %v1922, %v1914
    %v2195 = vpack.c.b16 %v1931, %v1923
    %v2196 = vpack.c.b16 %v1932, %v1924
    %v2197 = vpack.c.b16 %v1933, %v1925
    %v2198 = vpack.c.b16 %v1934, %v1926
    %v2199 = vpack.c.b16 %v1935, %v1927
    %v2200 = vpack.c.b16 %v1936, %v1928
    %v2201 = vpack.c.b16 %v1937, %v1929
    %v2202 = vpack.c.b16 %v1938, %v1930
    %v2203 = vpack.c.b16 %v1947, %v1939
    %v2204 = vpack.c.b16 %v1948, %v1940
    %v2205 = vpack.c.b16 %v1949, %v1941
    %v2206 = vpack.c.b16 %v1950, %v1942
    %v2207 = vpack.c.b16 %v1951, %v1943
    %v2208 = vpack.c.b16 %v1952, %v1944
    %v2209 = vpack.c.b16 %v1953, %v1945
    %v2210 = vpack.c.b16 %v1954, %v1946
    %2467 = vmatprep.subr.bf16.mxu0 %v1956
    %2468 = vmatpush1.bf16.msra.mxu0 %v1955
    %2469 = vmatprep.subr.bf16.mxu0 %v1964
    %2470 = vmatpush1.bf16.msra.mxu0 %v1963
    %2471 = vmatprep.subr.bf16.mxu0 %v1972
    %2472 = vmatpush1.bf16.msra.mxu0 %v1971
    %2473 = vmatprep.subr.bf16.mxu0 %v1980
    %2474 = vmatpush1.bf16.msra.mxu0 %v1979
    %2475 = vmatprep.subr.bf16.mxu0 %v1988
    %2476 = vmatpush1.bf16.msra.mxu0 %v1987
    %2477 = vmatprep.subr.bf16.mxu0 %v1996
    %2478 = vmatpush1.bf16.msra.mxu0 %v1995
    %2479 = vmatprep.subr.bf16.mxu0 %v2004
    %2480 = vmatpush1.bf16.msra.mxu0 %v2003
    %2481 = vmatprep.subr.bf16.mxu0 %v2012
    %2482 = vmatpush1.bf16.msra.mxu0 %v2011
    %2483 = vmatprep.subr.bf16.mxu0 %v2020
    %2484 = vmatpush1.bf16.msra.mxu0 %v2019
    %2485 = vmatprep.subr.bf16.mxu0 %v2028
    %2486 = vmatpush1.bf16.msra.mxu0 %v2027
    %2487 = vmatprep.subr.bf16.mxu0 %v2036
    %2488 = vmatpush1.bf16.msra.mxu0 %v2035
    %2489 = vmatprep.subr.bf16.mxu0 %v2044
    %2490 = vmatpush1.bf16.msra.mxu0 %v2043
    %2491 = vmatprep.subr.bf16.mxu0 %v2052
    %2492 = vmatpush1.bf16.msra.mxu0 %v2051
    %2493 = vmatprep.subr.bf16.mxu0 %v2060
    %2494 = vmatpush1.bf16.msra.mxu0 %v2059
    %2495 = vmatprep.subr.bf16.mxu0 %v2068
    %2496 = vmatpush1.bf16.msra.mxu0 %v2067
    %2497 = vmatprep.subr.bf16.mxu0 %v2076
    %2498 = vmatpush1.bf16.msra.mxu0 %v2075
    %2499 = vmatprep.mubr.bf16.mxu0 %v886
    %2500 = vmatmul.mubr.bf16.gmra.mrb[0].mxu0 %v885
    %v2501 = vpop.f32.mrb[0].mxu0
    %v2502 = vadd.f32 %v1150, %v2501
    %v2503 = vpop.f32.mrb[0].mxu0
    %v2504 = vadd.f32 %v1154, %v2503
    %v2505 = vpop.f32.mrb[0].mxu0
    %v2506 = vadd.f32 %v1150, %v2505
    %v2507 = vpop.f32.mrb[0].mxu0
    %v2508 = vadd.f32 %v1154, %v2507
    %2509 = vdwg.mxu0
    %2510 = vmatprep.subr.bf16.mxu0 %v2084
    %2511 = vmatpush1.bf16.msra.mxu0 %v2083
    %2512 = vmatprep.subr.bf16.mxu0 %v2092
    %2513 = vmatpush1.bf16.msra.mxu0 %v2091
    %2514 = vmatprep.subr.bf16.mxu0 %v2100
    %2515 = vmatpush1.bf16.msra.mxu0 %v2099
    %2516 = vmatprep.subr.bf16.mxu0 %v2108
    %2517 = vmatpush1.bf16.msra.mxu0 %v2107
    %2518 = vmatprep.subr.bf16.mxu0 %v2116
    %2519 = vmatpush1.bf16.msra.mxu0 %v2115
    %2520 = vmatprep.subr.bf16.mxu0 %v2124
    %2521 = vmatpush1.bf16.msra.mxu0 %v2123
    %2522 = vmatprep.subr.bf16.mxu0 %v2132
    %2523 = vmatpush1.bf16.msra.mxu0 %v2131
    %2524 = vmatprep.subr.bf16.mxu0 %v2140
    %2525 = vmatpush1.bf16.msra.mxu0 %v2139
    %2526 = vmatprep.subr.bf16.mxu0 %v2148
    %2527 = vmatpush1.bf16.msra.mxu0 %v2147
    %2528 = vmatprep.subr.bf16.mxu0 %v2156
    %2529 = vmatpush1.bf16.msra.mxu0 %v2155
    %2530 = vmatprep.subr.bf16.mxu0 %v2164
    %2531 = vmatpush1.bf16.msra.mxu0 %v2163
    %2532 = vmatprep.subr.bf16.mxu0 %v2172
    %2533 = vmatpush1.bf16.msra.mxu0 %v2171
    %2534 = vmatprep.subr.bf16.mxu0 %v2180
    %2535 = vmatpush1.bf16.msra.mxu0 %v2179
    %2536 = vmatprep.subr.bf16.mxu0 %v2188
    %2537 = vmatpush1.bf16.msra.mxu0 %v2187
    %2538 = vmatprep.subr.bf16.mxu0 %v2196
    %2539 = vmatpush1.bf16.msra.mxu0 %v2195
    %2540 = vmatprep.subr.bf16.mxu0 %v2204
    %2541 = vmatpush1.bf16.msra.mxu0 %v2203
    %2542 = vmatprep.mubr.bf16.mxu0 %v888
    %2543 = vmatmul.mubr.bf16.gmra.mrb[0].mxu0 %v887
    %v2544 = vpop.f32.mrb[0].mxu0
    %v2545 = vadd.f32 %v2502, %v2544
    %v2546 = vpop.f32.mrb[0].mxu0
    %v2547 = vadd.f32 %v2504, %v2546
    %v2548 = vpop.f32.mrb[0].mxu0
    %v2549 = vadd.f32 %v2506, %v2548
    %v2550 = vpop.f32.mrb[0].mxu0
    %v2551 = vadd.f32 %v2508, %v2550
    %2552 = vdwg.mxu0
    %2553 = vmatprep.subr.bf16.mxu0 %v1958
    %2554 = vmatpush1.bf16.msra.mxu0 %v1957
    %2555 = vmatprep.subr.bf16.mxu0 %v1966
    %2556 = vmatpush1.bf16.msra.mxu0 %v1965
    %2557 = vmatprep.subr.bf16.mxu0 %v1974
    %2558 = vmatpush1.bf16.msra.mxu0 %v1973
    %2559 = vmatprep.subr.bf16.mxu0 %v1982
    %2560 = vmatpush1.bf16.msra.mxu0 %v1981
    %2561 = vmatprep.subr.bf16.mxu0 %v1990
    %2562 = vmatpush1.bf16.msra.mxu0 %v1989
    %2563 = vmatprep.subr.bf16.mxu0 %v1998
    %2564 = vmatpush1.bf16.msra.mxu0 %v1997
    %2565 = vmatprep.subr.bf16.mxu0 %v2006
    %2566 = vmatpush1.bf16.msra.mxu0 %v2005
    %2567 = vmatprep.subr.bf16.mxu0 %v2014
    %2568 = vmatpush1.bf16.msra.mxu0 %v2013
    %2569 = vmatprep.subr.bf16.mxu0 %v2022
    %2570 = vmatpush1.bf16.msra.mxu0 %v2021
    %2571 = vmatprep.subr.bf16.mxu0 %v2030
    %2572 = vmatpush1.bf16.msra.mxu0 %v2029
    %2573 = vmatprep.subr.bf16.mxu0 %v2038
    %2574 = vmatpush1.bf16.msra.mxu0 %v2037
    %2575 = vmatprep.subr.bf16.mxu0 %v2046
    %2576 = vmatpush1.bf16.msra.mxu0 %v2045
    %2577 = vmatprep.subr.bf16.mxu0 %v2054
    %2578 = vmatpush1.bf16.msra.mxu0 %v2053
    %2579 = vmatprep.subr.bf16.mxu0 %v2062
    %2580 = vmatpush1.bf16.msra.mxu0 %v2061
    %2581 = vmatprep.subr.bf16.mxu0 %v2070
    %2582 = vmatpush1.bf16.msra.mxu0 %v2069
    %2583 = vmatprep.subr.bf16.mxu0 %v2078
    %2584 = vmatpush1.bf16.msra.mxu0 %v2077
    %2585 = vmatprep.mubr.bf16.mxu0 %v886
    %2586 = vmatmul.mubr.bf16.gmra.mrb[0].mxu0 %v885
    %v2587 = vpop.f32.mrb[0].mxu0
    %v2588 = vadd.f32 %v1158, %v2587
    %v2589 = vpop.f32.mrb[0].mxu0
    %v2590 = vadd.f32 %v1162, %v2589
    %v2591 = vpop.f32.mrb[0].mxu0
    %v2592 = vadd.f32 %v1158, %v2591
    %v2593 = vpop.f32.mrb[0].mxu0
    %v2594 = vadd.f32 %v1162, %v2593
    %2595 = vdwg.mxu0
    %2596 = vmatprep.subr.bf16.mxu0 %v2086
    %2597 = vmatpush1.bf16.msra.mxu0 %v2085
    %2598 = vmatprep.subr.bf16.mxu0 %v2094
    %2599 = vmatpush1.bf16.msra.mxu0 %v2093
    %2600 = vmatprep.subr.bf16.mxu0 %v2102
    %2601 = vmatpush1.bf16.msra.mxu0 %v2101
    %2602 = vmatprep.subr.bf16.mxu0 %v2110
    %2603 = vmatpush1.bf16.msra.mxu0 %v2109
    %2604 = vmatprep.subr.bf16.mxu0 %v2118
    %2605 = vmatpush1.bf16.msra.mxu0 %v2117
    %2606 = vmatprep.subr.bf16.mxu0 %v2126
    %2607 = vmatpush1.bf16.msra.mxu0 %v2125
    %2608 = vmatprep.subr.bf16.mxu0 %v2134
    %2609 = vmatpush1.bf16.msra.mxu0 %v2133
    %2610 = vmatprep.subr.bf16.mxu0 %v2142
    %2611 = vmatpush1.bf16.msra.mxu0 %v2141
    %2612 = vmatprep.subr.bf16.mxu0 %v2150
    %2613 = vmatpush1.bf16.msra.mxu0 %v2149
    %2614 = vmatprep.subr.bf16.mxu0 %v2158
    %2615 = vmatpush1.bf16.msra.mxu0 %v2157
    %2616 = vmatprep.subr.bf16.mxu0 %v2166
    %2617 = vmatpush1.bf16.msra.mxu0 %v2165
    %2618 = vmatprep.subr.bf16.mxu0 %v2174
    %2619 = vmatpush1.bf16.msra.mxu0 %v2173
    %2620 = vmatprep.subr.bf16.mxu0 %v2182
    %2621 = vmatpush1.bf16.msra.mxu0 %v2181
    %2622 = vmatprep.subr.bf16.mxu0 %v2190
    %2623 = vmatpush1.bf16.msra.mxu0 %v2189
    %2624 = vmatprep.subr.bf16.mxu0 %v2198
    %2625 = vmatpush1.bf16.msra.mxu0 %v2197
    %2626 = vmatprep.subr.bf16.mxu0 %v2206
    %2627 = vmatpush1.bf16.msra.mxu0 %v2205
    %2628 = vmatprep.mubr.bf16.mxu0 %v888
    %2629 = vmatmul.mubr.bf16.gmra.mrb[0].mxu0 %v887
    %v2630 = vpop.f32.mrb[0].mxu0
    %v2631 = vadd.f32 %v2588, %v2630
    %v2632 = vpop.f32.mrb[0].mxu0
    %v2633 = vadd.f32 %v2590, %v2632
    %v2634 = vpop.f32.mrb[0].mxu0
    %v2635 = vadd.f32 %v2592, %v2634
    %v2636 = vpop.f32.mrb[0].mxu0
    %v2637 = vadd.f32 %v2594, %v2636
    %2638 = vdwg.mxu0
    %2639 = vmatprep.subr.bf16.mxu0 %v1960
    %2640 = vmatpush1.bf16.msra.mxu0 %v1959
    %2641 = vmatprep.subr.bf16.mxu0 %v1968
    %2642 = vmatpush1.bf16.msra.mxu0 %v1967
    %2643 = vmatprep.subr.bf16.mxu0 %v1976
    %2644 = vmatpush1.bf16.msra.mxu0 %v1975
    %2645 = vmatprep.subr.bf16.mxu0 %v1984
    %2646 = vmatpush1.bf16.msra.mxu0 %v1983
    %2647 = vmatprep.subr.bf16.mxu0 %v1992
    %2648 = vmatpush1.bf16.msra.mxu0 %v1991
    %2649 = vmatprep.subr.bf16.mxu0 %v2000
    %2650 = vmatpush1.bf16.msra.mxu0 %v1999
    %2651 = vmatprep.subr.bf16.mxu0 %v2008
    %2652 = vmatpush1.bf16.msra.mxu0 %v2007
    %2653 = vmatprep.subr.bf16.mxu0 %v2016
    %2654 = vmatpush1.bf16.msra.mxu0 %v2015
    %2655 = vmatprep.subr.bf16.mxu0 %v2024
    %2656 = vmatpush1.bf16.msra.mxu0 %v2023
    %2657 = vmatprep.subr.bf16.mxu0 %v2032
    %2658 = vmatpush1.bf16.msra.mxu0 %v2031
    %2659 = vmatprep.subr.bf16.mxu0 %v2040
    %2660 = vmatpush1.bf16.msra.mxu0 %v2039
    %2661 = vmatprep.subr.bf16.mxu0 %v2048
    %2662 = vmatpush1.bf16.msra.mxu0 %v2047
    %2663 = vmatprep.subr.bf16.mxu0 %v2056
    %2664 = vmatpush1.bf16.msra.mxu0 %v2055
    %2665 = vmatprep.subr.bf16.mxu0 %v2064
    %2666 = vmatpush1.bf16.msra.mxu0 %v2063
    %2667 = vmatprep.subr.bf16.mxu0 %v2072
    %2668 = vmatpush1.bf16.msra.mxu0 %v2071
    %2669 = vmatprep.subr.bf16.mxu0 %v2080
    %2670 = vmatpush1.bf16.msra.mxu0 %v2079
    %2671 = vmatprep.mubr.bf16.mxu0 %v886
    %2672 = vmatmul.mubr.bf16.gmra.mrb[0].mxu0 %v885
    %v2673 = vpop.f32.mrb[0].mxu0
    %v2674 = vadd.f32 %v1166, %v2673
    %v2675 = vpop.f32.mrb[0].mxu0
    %v2676 = vadd.f32 %v1170, %v2675
    %v2677 = vpop.f32.mrb[0].mxu0
    %v2678 = vadd.f32 %v1166, %v2677
    %v2679 = vpop.f32.mrb[0].mxu0
    %v2680 = vadd.f32 %v1170, %v2679
    %2681 = vdwg.mxu0
    %2682 = vmatprep.subr.bf16.mxu0 %v2088
    %2683 = vmatpush1.bf16.msra.mxu0 %v2087
    %2684 = vmatprep.subr.bf16.mxu0 %v2096
    %2685 = vmatpush1.bf16.msra.mxu0 %v2095
    %2686 = vmatprep.subr.bf16.mxu0 %v2104
    %2687 = vmatpush1.bf16.msra.mxu0 %v2103
    %2688 = vmatprep.subr.bf16.mxu0 %v2112
    %2689 = vmatpush1.bf16.msra.mxu0 %v2111
    %2690 = vmatprep.subr.bf16.mxu0 %v2120
    %2691 = vmatpush1.bf16.msra.mxu0 %v2119
    %2692 = vmatprep.subr.bf16.mxu0 %v2128
    %2693 = vmatpush1.bf16.msra.mxu0 %v2127
    %2694 = vmatprep.subr.bf16.mxu0 %v2136
    %2695 = vmatpush1.bf16.msra.mxu0 %v2135
    %2696 = vmatprep.subr.bf16.mxu0 %v2144
    %2697 = vmatpush1.bf16.msra.mxu0 %v2143
    %2698 = vmatprep.subr.bf16.mxu0 %v2152
    %2699 = vmatpush1.bf16.msra.mxu0 %v2151
    %2700 = vmatprep.subr.bf16.mxu0 %v2160
    %2701 = vmatpush1.bf16.msra.mxu0 %v2159
    %2702 = vmatprep.subr.bf16.mxu0 %v2168
    %2703 = vmatpush1.bf16.msra.mxu0 %v2167
    %2704 = vmatprep.subr.bf16.mxu0 %v2176
    %2705 = vmatpush1.bf16.msra.mxu0 %v2175
    %2706 = vmatprep.subr.bf16.mxu0 %v2184
    %2707 = vmatpush1.bf16.msra.mxu0 %v2183
    %2708 = vmatprep.subr.bf16.mxu0 %v2192
    %2709 = vmatpush1.bf16.msra.mxu0 %v2191
    %2710 = vmatprep.subr.bf16.mxu0 %v2200
    %2711 = vmatpush1.bf16.msra.mxu0 %v2199
    %2712 = vmatprep.subr.bf16.mxu0 %v2208
    %2713 = vmatpush1.bf16.msra.mxu0 %v2207
    %2714 = vmatprep.mubr.bf16.mxu0 %v888
    %2715 = vmatmul.mubr.bf16.gmra.mrb[0].mxu0 %v887
    %v2716 = vpop.f32.mrb[0].mxu0
    %v2717 = vadd.f32 %v2674, %v2716
    %v2718 = vpop.f32.mrb[0].mxu0
    %v2719 = vadd.f32 %v2676, %v2718
    %v2720 = vpop.f32.mrb[0].mxu0
    %v2721 = vadd.f32 %v2678, %v2720
    %v2722 = vpop.f32.mrb[0].mxu0
    %v2723 = vadd.f32 %v2680, %v2722
    %2724 = vdwg.mxu0
    %2725 = vmatprep.subr.bf16.mxu0 %v1962
    %2726 = vmatpush1.bf16.msra.mxu0 %v1961
    %2727 = vmatprep.subr.bf16.mxu0 %v1970
    %2728 = vmatpush1.bf16.msra.mxu0 %v1969
    %2729 = vmatprep.subr.bf16.mxu0 %v1978
    %2730 = vmatpush1.bf16.msra.mxu0 %v1977
    %2731 = vmatprep.subr.bf16.mxu0 %v1986
    %2732 = vmatpush1.bf16.msra.mxu0 %v1985
    %2733 = vmatprep.subr.bf16.mxu0 %v1994
    %2734 = vmatpush1.bf16.msra.mxu0 %v1993
    %2735 = vmatprep.subr.bf16.mxu0 %v2002
    %2736 = vmatpush1.bf16.msra.mxu0 %v2001
    %2737 = vmatprep.subr.bf16.mxu0 %v2010
    %2738 = vmatpush1.bf16.msra.mxu0 %v2009
    %2739 = vmatprep.subr.bf16.mxu0 %v2018
    %2740 = vmatpush1.bf16.msra.mxu0 %v2017
    %2741 = vmatprep.subr.bf16.mxu0 %v2026
    %2742 = vmatpush1.bf16.msra.mxu0 %v2025
    %2743 = vmatprep.subr.bf16.mxu0 %v2034
    %2744 = vmatpush1.bf16.msra.mxu0 %v2033
    %2745 = vmatprep.subr.bf16.mxu0 %v2042
    %2746 = vmatpush1.bf16.msra.mxu0 %v2041
    %2747 = vmatprep.subr.bf16.mxu0 %v2050
    %2748 = vmatpush1.bf16.msra.mxu0 %v2049
    %2749 = vmatprep.subr.bf16.mxu0 %v2058
    %2750 = vmatpush1.bf16.msra.mxu0 %v2057
    %2751 = vmatprep.subr.bf16.mxu0 %v2066
    %2752 = vmatpush1.bf16.msra.mxu0 %v2065
    %2753 = vmatprep.subr.bf16.mxu0 %v2074
    %2754 = vmatpush1.bf16.msra.mxu0 %v2073
    %2755 = vmatprep.subr.bf16.mxu0 %v2082
    %2756 = vmatpush1.bf16.msra.mxu0 %v2081
    %2757 = vmatprep.mubr.bf16.mxu0 %v886
    %2758 = vmatmul.mubr.bf16.gmra.mrb[0].mxu0 %v885
    %v2759 = vpop.f32.mrb[0].mxu0
    %v2760 = vadd.f32 %v1174, %v2759
    %v2761 = vpop.f32.mrb[0].mxu0
    %v2762 = vadd.f32 %v1178, %v2761
    %v2763 = vpop.f32.mrb[0].mxu0
    %v2764 = vadd.f32 %v1174, %v2763
    %v2765 = vpop.f32.mrb[0].mxu0
    %v2766 = vadd.f32 %v1178, %v2765
    %2767 = vdwg.mxu0
    %2768 = vmatprep.subr.bf16.mxu0 %v2090
    %2769 = vmatpush1.bf16.msra.mxu0 %v2089
    %2770 = vmatprep.subr.bf16.mxu0 %v2098
    %2771 = vmatpush1.bf16.msra.mxu0 %v2097
    %2772 = vmatprep.subr.bf16.mxu0 %v2106
    %2773 = vmatpush1.bf16.msra.mxu0 %v2105
    %2774 = vmatprep.subr.bf16.mxu0 %v2114
    %2775 = vmatpush1.bf16.msra.mxu0 %v2113
    %2776 = vmatprep.subr.bf16.mxu0 %v2122
    %2777 = vmatpush1.bf16.msra.mxu0 %v2121
    %2778 = vmatprep.subr.bf16.mxu0 %v2130
    %2779 = vmatpush1.bf16.msra.mxu0 %v2129
    %2780 = vmatprep.subr.bf16.mxu0 %v2138
    %2781 = vmatpush1.bf16.msra.mxu0 %v2137
    %2782 = vmatprep.subr.bf16.mxu0 %v2146
    %2783 = vmatpush1.bf16.msra.mxu0 %v2145
    %2784 = vmatprep.subr.bf16.mxu0 %v2154
    %2785 = vmatpush1.bf16.msra.mxu0 %v2153
    %2786 = vmatprep.subr.bf16.mxu0 %v2162
    %2787 = vmatpush1.bf16.msra.mxu0 %v2161
    %2788 = vmatprep.subr.bf16.mxu0 %v2170
    %2789 = vmatpush1.bf16.msra.mxu0 %v2169
    %2790 = vmatprep.subr.bf16.mxu0 %v2178
    %2791 = vmatpush1.bf16.msra.mxu0 %v2177
    %2792 = vmatprep.subr.bf16.mxu0 %v2186
    %2793 = vmatpush1.bf16.msra.mxu0 %v2185
    %2794 = vmatprep.subr.bf16.mxu0 %v2194
    %2795 = vmatpush1.bf16.msra.mxu0 %v2193
    %2796 = vmatprep.subr.bf16.mxu0 %v2202
    %2797 = vmatpush1.bf16.msra.mxu0 %v2201
    %2798 = vmatprep.subr.bf16.mxu0 %v2210
    %2799 = vmatpush1.bf16.msra.mxu0 %v2209
    %2800 = vmatprep.mubr.bf16.mxu0 %v888
    %2801 = vmatmul.mubr.bf16.gmra.mrb[0].mxu0 %v887
    %v2802 = vpop.f32.mrb[0].mxu0
    %v2803 = vadd.f32 %v2760, %v2802
    %v2804 = vpop.f32.mrb[0].mxu0
    %v2805 = vadd.f32 %v2762, %v2804
    %v2806 = vpop.f32.mrb[0].mxu0
    %v2807 = vadd.f32 %v2764, %v2806
    %v2808 = vpop.f32.mrb[0].mxu0
    %v2809 = vadd.f32 %v2766, %v2808
    %2810 = vdwg.mxu0
    %vm2811 = vcmp.gt.f32.partialorder %v2545, 0.0
    %vm2812 = vcmp.gt.f32.partialorder %v2547, 0.0
    %vm2813 = vcmp.gt.f32.partialorder %v2631, 0.0
    %vm2814 = vcmp.gt.f32.partialorder %v2633, 0.0
    %vm2815 = vcmp.gt.f32.partialorder %v2717, 0.0
    %vm2816 = vcmp.gt.f32.partialorder %v2719, 0.0
    %vm2817 = vcmp.gt.f32.partialorder %v2803, 0.0
    %vm2818 = vcmp.gt.f32.partialorder %v2805, 0.0
    %vm2819 = vcmp.gt.f32.partialorder %v2549, 0.0
    %vm2820 = vcmp.gt.f32.partialorder %v2551, 0.0
    %vm2821 = vcmp.gt.f32.partialorder %v2635, 0.0
    %vm2822 = vcmp.gt.f32.partialorder %v2637, 0.0
    %vm2823 = vcmp.gt.f32.partialorder %v2721, 0.0
    %vm2824 = vcmp.gt.f32.partialorder %v2723, 0.0
    %vm2825 = vcmp.gt.f32.partialorder %v2807, 0.0
    %vm2826 = vcmp.gt.f32.partialorder %v2809, 0.0
    %v2827 = vmul.f32 %v2545, 0.2
    %v2828 = vmul.f32 %v2547, 0.2
    %v2829 = vmul.f32 %v2631, 0.2
    %v2830 = vmul.f32 %v2633, 0.2
    %v2831 = vmul.f32 %v2717, 0.2
    %v2832 = vmul.f32 %v2719, 0.2
    %v2833 = vmul.f32 %v2803, 0.2
    %v2834 = vmul.f32 %v2805, 0.2
    %v2835 = vmul.f32 %v2549, 0.2
    %v2836 = vmul.f32 %v2551, 0.2
    %v2837 = vmul.f32 %v2635, 0.2
    %v2838 = vmul.f32 %v2637, 0.2
    %v2839 = vmul.f32 %v2721, 0.2
    %v2840 = vmul.f32 %v2723, 0.2
    %v2841 = vmul.f32 %v2807, 0.2
    %v2842 = vmul.f32 %v2809, 0.2
    %v2843 = vsel %vm2811, %v2545, %v2827
    %v2844 = vsel %vm2812, %v2547, %v2828
    %v2845 = vsel %vm2813, %v2631, %v2829
    %v2846 = vsel %vm2814, %v2633, %v2830
    %v2847 = vsel %vm2815, %v2717, %v2831
    %v2848 = vsel %vm2816, %v2719, %v2832
    %v2849 = vsel %vm2817, %v2803, %v2833
    %v2850 = vsel %vm2818, %v2805, %v2834
    %v2851 = vsel %vm2819, %v2549, %v2835
    %v2852 = vsel %vm2820, %v2551, %v2836
    %v2853 = vsel %vm2821, %v2635, %v2837
    %v2854 = vsel %vm2822, %v2637, %v2838
    %v2855 = vsel %vm2823, %v2721, %v2839
    %v2856 = vsel %vm2824, %v2723, %v2840
    %v2857 = vsel %vm2825, %v2807, %v2841
    %v2858 = vsel %vm2826, %v2809, %v2842
    %v2859 = vpack.c.bf16 %v2851, %v2843
    %v2860 = vpack.c.bf16 %v2852, %v2844
    %v2861 = vpack.c.bf16 %v2853, %v2845
    %v2862 = vpack.c.bf16 %v2854, %v2846
    %v2863 = vpack.c.bf16 %v2855, %v2847
    %v2864 = vpack.c.bf16 %v2856, %v2848
    %v2865 = vpack.c.bf16 %v2857, %v2849
    %v2866 = vpack.c.bf16 %v2858, %v2850
    %v2867 = vld [vmem:[#allocation11] sm:$0xf]
    %v2868 = vld [vmem:[#allocation11 + $0x4] sm:$0xf]
    %v2869 = vld [vmem:[#allocation11 + $0x8] sm:$0xf]
    %v2870 = vld [vmem:[#allocation11 + $0xc] sm:$0xf]
    %v2871 = vld [vmem:[#allocation11 + $0x10] sm:$0xf]
    %v2872 = vld [vmem:[#allocation11 + $0x14] sm:$0xf]
    %v2873 = vld [vmem:[#allocation11 + $0x18] sm:$0xf]
    %v2874 = vld [vmem:[#allocation11 + $0x1c] sm:$0xf]
    %v2875 = vld [vmem:[#allocation11 + $0x20] sm:$0xf]
    %v2876 = vld [vmem:[#allocation11 + $0x24] sm:$0xf]
    %v2877 = vld [vmem:[#allocation11 + $0x28] sm:$0xf]
    %v2878 = vld [vmem:[#allocation11 + $0x2c] sm:$0xf]
    %v2879 = vld [vmem:[#allocation11 + $0x30] sm:$0xf]
    %v2880 = vld [vmem:[#allocation11 + $0x34] sm:$0xf]
    %v2881 = vld [vmem:[#allocation11 + $0x38] sm:$0xf]
    %v2882 = vld [vmem:[#allocation11 + $0x3c] sm:$0xf]
    %v2883 = vld [vmem:[#allocation11 + $0x40] sm:$0xf]
    %v2884 = vld [vmem:[#allocation11 + $0x44] sm:$0xf]
    %v2885 = vld [vmem:[#allocation11 + $0x48] sm:$0xf]
    %v2886 = vld [vmem:[#allocation11 + $0x4c] sm:$0xf]
    %v2887 = vld [vmem:[#allocation11 + $0x50] sm:$0xf]
    %v2888 = vld [vmem:[#allocation11 + $0x54] sm:$0xf]
    %v2889 = vld [vmem:[#allocation11 + $0x58] sm:$0xf]
    %v2890 = vld [vmem:[#allocation11 + $0x5c] sm:$0xf]
    %v2891 = vld [vmem:[#allocation11 + $0x60] sm:$0xf]
    %v2892 = vld [vmem:[#allocation11 + $0x64] sm:$0xf]
    %v2893 = vld [vmem:[#allocation11 + $0x68] sm:$0xf]
    %v2894 = vld [vmem:[#allocation11 + $0x6c] sm:$0xf]
    %v2895 = vld [vmem:[#allocation11 + $0x70] sm:$0xf]
    %v2896 = vld [vmem:[#allocation11 + $0x74] sm:$0xf]
    %v2897 = vld [vmem:[#allocation11 + $0x78] sm:$0xf]
    %v2898 = vld [vmem:[#allocation11 + $0x7c] sm:$0xf]
    %v2899 = vld [vmem:[#allocation11 + $0x80] sm:$0xf]
    %v2900 = vld [vmem:[#allocation11 + $0x84] sm:$0xf]
    %v2901 = vld [vmem:[#allocation11 + $0x88] sm:$0xf]
    %v2902 = vld [vmem:[#allocation11 + $0x8c] sm:$0xf]
    %v2903 = vld [vmem:[#allocation11 + $0x90] sm:$0xf]
    %v2904 = vld [vmem:[#allocation11 + $0x94] sm:$0xf]
    %v2905 = vld [vmem:[#allocation11 + $0x98] sm:$0xf]
    %v2906 = vld [vmem:[#allocation11 + $0x9c] sm:$0xf]
    %v2907 = vld [vmem:[#allocation11 + $0xa0] sm:$0xf]
    %v2908 = vld [vmem:[#allocation11 + $0xa4] sm:$0xf]
    %v2909 = vld [vmem:[#allocation11 + $0xa8] sm:$0xf]
    %v2910 = vld [vmem:[#allocation11 + $0xac] sm:$0xf]
    %v2911 = vld [vmem:[#allocation11 + $0xb0] sm:$0xf]
    %v2912 = vld [vmem:[#allocation11 + $0xb4] sm:$0xf]
    %v2913 = vld [vmem:[#allocation11 + $0xb8] sm:$0xf]
    %v2914 = vld [vmem:[#allocation11 + $0xbc] sm:$0xf]
    %v2915 = vld [vmem:[#allocation11 + $0xc0] sm:$0xf]
    %v2916 = vld [vmem:[#allocation11 + $0xc4] sm:$0xf]
    %v2917 = vld [vmem:[#allocation11 + $0xc8] sm:$0xf]
    %v2918 = vld [vmem:[#allocation11 + $0xcc] sm:$0xf]
    %v2919 = vld [vmem:[#allocation11 + $0xd0] sm:$0xf]
    %v2920 = vld [vmem:[#allocation11 + $0xd4] sm:$0xf]
    %v2921 = vld [vmem:[#allocation11 + $0xd8] sm:$0xf]
    %v2922 = vld [vmem:[#allocation11 + $0xdc] sm:$0xf]
    %v2923 = vld [vmem:[#allocation11 + $0xe0] sm:$0xf]
    %v2924 = vld [vmem:[#allocation11 + $0xe4] sm:$0xf]
    %v2925 = vld [vmem:[#allocation11 + $0xe8] sm:$0xf]
    %v2926 = vld [vmem:[#allocation11 + $0xec] sm:$0xf]
    %v2927 = vld [vmem:[#allocation11 + $0xf0] sm:$0xf]
    %v2928 = vld [vmem:[#allocation11 + $0xf4] sm:$0xf]
    %v2929 = vld [vmem:[#allocation11 + $0xf8] sm:$0xf]
    %v2930 = vld [vmem:[#allocation11 + $0xfc] sm:$0xf]
    %v2931 = vld [vmem:[#allocation11 + $0x100] sm:$0xf]
    %v2932 = vld [vmem:[#allocation11 + $0x104] sm:$0xf]
    %v2933 = vld [vmem:[#allocation11 + $0x108] sm:$0xf]
    %v2934 = vld [vmem:[#allocation11 + $0x10c] sm:$0xf]
    %v2935 = vld [vmem:[#allocation11 + $0x110] sm:$0xf]
    %v2936 = vld [vmem:[#allocation11 + $0x114] sm:$0xf]
    %v2937 = vld [vmem:[#allocation11 + $0x118] sm:$0xf]
    %v2938 = vld [vmem:[#allocation11 + $0x11c] sm:$0xf]
    %v2939 = vld [vmem:[#allocation11 + $0x120] sm:$0xf]
    %v2940 = vld [vmem:[#allocation11 + $0x124] sm:$0xf]
    %v2941 = vld [vmem:[#allocation11 + $0x128] sm:$0xf]
    %v2942 = vld [vmem:[#allocation11 + $0x12c] sm:$0xf]
    %v2943 = vld [vmem:[#allocation11 + $0x130] sm:$0xf]
    %v2944 = vld [vmem:[#allocation11 + $0x134] sm:$0xf]
    %v2945 = vld [vmem:[#allocation11 + $0x138] sm:$0xf]
    %v2946 = vld [vmem:[#allocation11 + $0x13c] sm:$0xf]
    %v2947 = vld [vmem:[#allocation11 + $0x140] sm:$0xf]
    %v2948 = vld [vmem:[#allocation11 + $0x144] sm:$0xf]
    %v2949 = vld [vmem:[#allocation11 + $0x148] sm:$0xf]
    %v2950 = vld [vmem:[#allocation11 + $0x14c] sm:$0xf]
    %v2951 = vld [vmem:[#allocation11 + $0x150] sm:$0xf]
    %v2952 = vld [vmem:[#allocation11 + $0x154] sm:$0xf]
    %v2953 = vld [vmem:[#allocation11 + $0x158] sm:$0xf]
    %v2954 = vld [vmem:[#allocation11 + $0x15c] sm:$0xf]
    %v2955 = vld [vmem:[#allocation11 + $0x160] sm:$0xf]
    %v2956 = vld [vmem:[#allocation11 + $0x164] sm:$0xf]
    %v2957 = vld [vmem:[#allocation11 + $0x168] sm:$0xf]
    %v2958 = vld [vmem:[#allocation11 + $0x16c] sm:$0xf]
    %v2959 = vld [vmem:[#allocation11 + $0x170] sm:$0xf]
    %v2960 = vld [vmem:[#allocation11 + $0x174] sm:$0xf]
    %v2961 = vld [vmem:[#allocation11 + $0x178] sm:$0xf]
    %v2962 = vld [vmem:[#allocation11 + $0x17c] sm:$0xf]
    %v2963 = vld [vmem:[#allocation11 + $0x180] sm:$0xf]
    %v2964 = vld [vmem:[#allocation11 + $0x184] sm:$0xf]
    %v2965 = vld [vmem:[#allocation11 + $0x188] sm:$0xf]
    %v2966 = vld [vmem:[#allocation11 + $0x18c] sm:$0xf]
    %v2967 = vld [vmem:[#allocation11 + $0x190] sm:$0xf]
    %v2968 = vld [vmem:[#allocation11 + $0x194] sm:$0xf]
    %v2969 = vld [vmem:[#allocation11 + $0x198] sm:$0xf]
    %v2970 = vld [vmem:[#allocation11 + $0x19c] sm:$0xf]
    %v2971 = vld [vmem:[#allocation11 + $0x1a0] sm:$0xf]
    %v2972 = vld [vmem:[#allocation11 + $0x1a4] sm:$0xf]
    %v2973 = vld [vmem:[#allocation11 + $0x1a8] sm:$0xf]
    %v2974 = vld [vmem:[#allocation11 + $0x1ac] sm:$0xf]
    %v2975 = vld [vmem:[#allocation11 + $0x1b0] sm:$0xf]
    %v2976 = vld [vmem:[#allocation11 + $0x1b4] sm:$0xf]
    %v2977 = vld [vmem:[#allocation11 + $0x1b8] sm:$0xf]
    %v2978 = vld [vmem:[#allocation11 + $0x1bc] sm:$0xf]
    %v2979 = vld [vmem:[#allocation11 + $0x1c0] sm:$0xf]
    %v2980 = vld [vmem:[#allocation11 + $0x1c4] sm:$0xf]
    %v2981 = vld [vmem:[#allocation11 + $0x1c8] sm:$0xf]
    %v2982 = vld [vmem:[#allocation11 + $0x1cc] sm:$0xf]
    %v2983 = vld [vmem:[#allocation11 + $0x1d0] sm:$0xf]
    %v2984 = vld [vmem:[#allocation11 + $0x1d4] sm:$0xf]
    %v2985 = vld [vmem:[#allocation11 + $0x1d8] sm:$0xf]
    %v2986 = vld [vmem:[#allocation11 + $0x1dc] sm:$0xf]
    %v2987 = vld [vmem:[#allocation11 + $0x1e0] sm:$0xf]
    %v2988 = vld [vmem:[#allocation11 + $0x1e4] sm:$0xf]
    %v2989 = vld [vmem:[#allocation11 + $0x1e8] sm:$0xf]
    %v2990 = vld [vmem:[#allocation11 + $0x1ec] sm:$0xf]
    %v2991 = vld [vmem:[#allocation11 + $0x1f0] sm:$0xf]
    %v2992 = vld [vmem:[#allocation11 + $0x1f4] sm:$0xf]
    %v2993 = vld [vmem:[#allocation11 + $0x1f8] sm:$0xf]
    %v2994 = vld [vmem:[#allocation11 + $0x1fc] sm:$0xf]
    %v2995 = vld [vmem:[%s10] sm:$0x1]
    %v2997 = vlaneseq
    %v2998 = vshrl.u32 %v2997, 7
    %v2999 = vsub.s32 0, %v2998
    %v3000 = vrot.slane %v2995, %v2999
    %v3130 = vunpack.c.l.b16 %v2867
    %v3131 = vunpack.c.l.b16 %v2868
    %v3132 = vunpack.c.l.b16 %v2869
    %v3133 = vunpack.c.l.b16 %v2870
    %v3134 = vunpack.c.l.b16 %v2871
    %v3135 = vunpack.c.l.b16 %v2872
    %v3136 = vunpack.c.l.b16 %v2873
    %v3137 = vunpack.c.l.b16 %v2874
    %v3138 = vunpack.c.l.b16 %v2875
    %v3139 = vunpack.c.l.b16 %v2876
    %v3140 = vunpack.c.l.b16 %v2877
    %v3141 = vunpack.c.l.b16 %v2878
    %v3142 = vunpack.c.l.b16 %v2879
    %v3143 = vunpack.c.l.b16 %v2880
    %v3144 = vunpack.c.l.b16 %v2881
    %v3145 = vunpack.c.l.b16 %v2882
    %v3146 = vunpack.c.l.b16 %v2883
    %v3147 = vunpack.c.l.b16 %v2884
    %v3148 = vunpack.c.l.b16 %v2885
    %v3149 = vunpack.c.l.b16 %v2886
    %v3150 = vunpack.c.l.b16 %v2887
    %v3151 = vunpack.c.l.b16 %v2888
    %v3152 = vunpack.c.l.b16 %v2889
    %v3153 = vunpack.c.l.b16 %v2890
    %v3154 = vunpack.c.l.b16 %v2891
    %v3155 = vunpack.c.l.b16 %v2892
    %v3156 = vunpack.c.l.b16 %v2893
    %v3157 = vunpack.c.l.b16 %v2894
    %v3158 = vunpack.c.l.b16 %v2895
    %v3159 = vunpack.c.l.b16 %v2896
    %v3160 = vunpack.c.l.b16 %v2897
    %v3161 = vunpack.c.l.b16 %v2898
    %v3162 = vunpack.c.l.b16 %v2899
    %v3163 = vunpack.c.l.b16 %v2900
    %v3164 = vunpack.c.l.b16 %v2901
    %v3165 = vunpack.c.l.b16 %v2902
    %v3166 = vunpack.c.l.b16 %v2903
    %v3167 = vunpack.c.l.b16 %v2904
    %v3168 = vunpack.c.l.b16 %v2905
    %v3169 = vunpack.c.l.b16 %v2906
    %v3170 = vunpack.c.l.b16 %v2907
    %v3171 = vunpack.c.l.b16 %v2908
    %v3172 = vunpack.c.l.b16 %v2909
    %v3173 = vunpack.c.l.b16 %v2910
    %v3174 = vunpack.c.l.b16 %v2911
    %v3175 = vunpack.c.l.b16 %v2912
    %v3176 = vunpack.c.l.b16 %v2913
    %v3177 = vunpack.c.l.b16 %v2914
    %v3178 = vunpack.c.l.b16 %v2915
    %v3179 = vunpack.c.l.b16 %v2916
    %v3180 = vunpack.c.l.b16 %v2917
    %v3181 = vunpack.c.l.b16 %v2918
    %v3182 = vunpack.c.l.b16 %v2919
    %v3183 = vunpack.c.l.b16 %v2920
    %v3184 = vunpack.c.l.b16 %v2921
    %v3185 = vunpack.c.l.b16 %v2922
    %v3186 = vunpack.c.l.b16 %v2923
    %v3187 = vunpack.c.l.b16 %v2924
    %v3188 = vunpack.c.l.b16 %v2925
    %v3189 = vunpack.c.l.b16 %v2926
    %v3190 = vunpack.c.l.b16 %v2927
    %v3191 = vunpack.c.l.b16 %v2928
    %v3192 = vunpack.c.l.b16 %v2929
    %v3193 = vunpack.c.l.b16 %v2930
    %v3194 = vunpack.c.l.b16 %v2931
    %v3195 = vunpack.c.l.b16 %v2932
    %v3196 = vunpack.c.l.b16 %v2933
    %v3197 = vunpack.c.l.b16 %v2934
    %v3198 = vunpack.c.l.b16 %v2935
    %v3199 = vunpack.c.l.b16 %v2936
    %v3200 = vunpack.c.l.b16 %v2937
    %v3201 = vunpack.c.l.b16 %v2938
    %v3202 = vunpack.c.l.b16 %v2939
    %v3203 = vunpack.c.l.b16 %v2940
    %v3204 = vunpack.c.l.b16 %v2941
    %v3205 = vunpack.c.l.b16 %v2942
    %v3206 = vunpack.c.l.b16 %v2943
    %v3207 = vunpack.c.l.b16 %v2944
    %v3208 = vunpack.c.l.b16 %v2945
    %v3209 = vunpack.c.l.b16 %v2946
    %v3210 = vunpack.c.l.b16 %v2947
    %v3211 = vunpack.c.l.b16 %v2948
    %v3212 = vunpack.c.l.b16 %v2949
    %v3213 = vunpack.c.l.b16 %v2950
    %v3214 = vunpack.c.l.b16 %v2951
    %v3215 = vunpack.c.l.b16 %v2952
    %v3216 = vunpack.c.l.b16 %v2953
    %v3217 = vunpack.c.l.b16 %v2954
    %v3218 = vunpack.c.l.b16 %v2955
    %v3219 = vunpack.c.l.b16 %v2956
    %v3220 = vunpack.c.l.b16 %v2957
    %v3221 = vunpack.c.l.b16 %v2958
    %v3222 = vunpack.c.l.b16 %v2959
    %v3223 = vunpack.c.l.b16 %v2960
    %v3224 = vunpack.c.l.b16 %v2961
    %v3225 = vunpack.c.l.b16 %v2962
    %v3226 = vunpack.c.l.b16 %v2963
    %v3227 = vunpack.c.l.b16 %v2964
    %v3228 = vunpack.c.l.b16 %v2965
    %v3229 = vunpack.c.l.b16 %v2966
    %v3230 = vunpack.c.l.b16 %v2967
    %v3231 = vunpack.c.l.b16 %v2968
    %v3232 = vunpack.c.l.b16 %v2969
    %v3233 = vunpack.c.l.b16 %v2970
    %v3234 = vunpack.c.l.b16 %v2971
    %v3235 = vunpack.c.l.b16 %v2972
    %v3236 = vunpack.c.l.b16 %v2973
    %v3237 = vunpack.c.l.b16 %v2974
    %v3238 = vunpack.c.l.b16 %v2975
    %v3239 = vunpack.c.l.b16 %v2976
    %v3240 = vunpack.c.l.b16 %v2977
    %v3241 = vunpack.c.l.b16 %v2978
    %v3242 = vunpack.c.l.b16 %v2979
    %v3243 = vunpack.c.l.b16 %v2980
    %v3244 = vunpack.c.l.b16 %v2981
    %v3245 = vunpack.c.l.b16 %v2982
    %v3246 = vunpack.c.l.b16 %v2983
    %v3247 = vunpack.c.l.b16 %v2984
    %v3248 = vunpack.c.l.b16 %v2985
    %v3249 = vunpack.c.l.b16 %v2986
    %v3250 = vunpack.c.l.b16 %v2987
    %v3251 = vunpack.c.l.b16 %v2988
    %v3252 = vunpack.c.l.b16 %v2989
    %v3253 = vunpack.c.l.b16 %v2990
    %v3254 = vunpack.c.l.b16 %v2991
    %v3255 = vunpack.c.l.b16 %v2992
    %v3256 = vunpack.c.l.b16 %v2993
    %v3257 = vunpack.c.l.b16 %v2994
    %v3258 = vpack.c.b16 %v3131, %v3130
    %v3259 = vpack.c.b16 %v3133, %v3132
    %v3260 = vpack.c.b16 %v3135, %v3134
    %v3261 = vpack.c.b16 %v3137, %v3136
    %v3262 = vpack.c.b16 %v3139, %v3138
    %v3263 = vpack.c.b16 %v3141, %v3140
    %v3264 = vpack.c.b16 %v3143, %v3142
    %v3265 = vpack.c.b16 %v3145, %v3144
    %v3266 = vpack.c.b16 %v3147, %v3146
    %v3267 = vpack.c.b16 %v3149, %v3148
    %v3268 = vpack.c.b16 %v3151, %v3150
    %v3269 = vpack.c.b16 %v3153, %v3152
    %v3270 = vpack.c.b16 %v3155, %v3154
    %v3271 = vpack.c.b16 %v3157, %v3156
    %v3272 = vpack.c.b16 %v3159, %v3158
    %v3273 = vpack.c.b16 %v3161, %v3160
    %v3274 = vpack.c.b16 %v3163, %v3162
    %v3275 = vpack.c.b16 %v3165, %v3164
    %v3276 = vpack.c.b16 %v3167, %v3166
    %v3277 = vpack.c.b16 %v3169, %v3168
    %v3278 = vpack.c.b16 %v3171, %v3170
    %v3279 = vpack.c.b16 %v3173, %v3172
    %v3280 = vpack.c.b16 %v3175, %v3174
    %v3281 = vpack.c.b16 %v3177, %v3176
    %v3282 = vpack.c.b16 %v3179, %v3178
    %v3283 = vpack.c.b16 %v3181, %v3180
    %v3284 = vpack.c.b16 %v3183, %v3182
    %v3285 = vpack.c.b16 %v3185, %v3184
    %v3286 = vpack.c.b16 %v3187, %v3186
    %v3287 = vpack.c.b16 %v3189, %v3188
    %v3288 = vpack.c.b16 %v3191, %v3190
    %v3289 = vpack.c.b16 %v3193, %v3192
    %v3290 = vpack.c.b16 %v3195, %v3194
    %v3291 = vpack.c.b16 %v3197, %v3196
    %v3292 = vpack.c.b16 %v3199, %v3198
    %v3293 = vpack.c.b16 %v3201, %v3200
    %v3294 = vpack.c.b16 %v3203, %v3202
    %v3295 = vpack.c.b16 %v3205, %v3204
    %v3296 = vpack.c.b16 %v3207, %v3206
    %v3297 = vpack.c.b16 %v3209, %v3208
    %v3298 = vpack.c.b16 %v3211, %v3210
    %v3299 = vpack.c.b16 %v3213, %v3212
    %v3300 = vpack.c.b16 %v3215, %v3214
    %v3301 = vpack.c.b16 %v3217, %v3216
    %v3302 = vpack.c.b16 %v3219, %v3218
    %v3303 = vpack.c.b16 %v3221, %v3220
    %v3304 = vpack.c.b16 %v3223, %v3222
    %v3305 = vpack.c.b16 %v3225, %v3224
    %v3306 = vpack.c.b16 %v3227, %v3226
    %v3307 = vpack.c.b16 %v3229, %v3228
    %v3308 = vpack.c.b16 %v3231, %v3230
    %v3309 = vpack.c.b16 %v3233, %v3232
    %v3310 = vpack.c.b16 %v3235, %v3234
    %v3311 = vpack.c.b16 %v3237, %v3236
    %v3312 = vpack.c.b16 %v3239, %v3238
    %v3313 = vpack.c.b16 %v3241, %v3240
    %v3314 = vpack.c.b16 %v3243, %v3242
    %v3315 = vpack.c.b16 %v3245, %v3244
    %v3316 = vpack.c.b16 %v3247, %v3246
    %v3317 = vpack.c.b16 %v3249, %v3248
    %v3318 = vpack.c.b16 %v3251, %v3250
    %v3319 = vpack.c.b16 %v3253, %v3252
    %v3320 = vpack.c.b16 %v3255, %v3254
    %v3321 = vpack.c.b16 %v3257, %v3256
    %3386 = vmatprep.subr.bf16.mxu0 0
    %3387 = vmatpush1.bf16.msra.mxu0 %v3258
    %3388 = vmatprep.subr.bf16.mxu0 0
    %3389 = vmatpush1.bf16.msra.mxu0 %v3259
    %3390 = vmatprep.subr.bf16.mxu0 0
    %3391 = vmatpush1.bf16.msra.mxu0 %v3260
    %3392 = vmatprep.subr.bf16.mxu0 0
    %3393 = vmatpush1.bf16.msra.mxu0 %v3261
    %3394 = vmatprep.subr.bf16.mxu0 0
    %3395 = vmatpush1.bf16.msra.mxu0 %v3262
    %3396 = vmatprep.subr.bf16.mxu0 0
    %3397 = vmatpush1.bf16.msra.mxu0 %v3263
    %3398 = vmatprep.subr.bf16.mxu0 0
    %3399 = vmatpush1.bf16.msra.mxu0 %v3264
    %3400 = vmatprep.subr.bf16.mxu0 0
    %3401 = vmatpush1.bf16.msra.mxu0 %v3265
    %3402 = vmatprep.subr.bf16.mxu0 0
    %3403 = vmatpush1.bf16.msra.mxu0 %v3266
    %3404 = vmatprep.subr.bf16.mxu0 0
    %3405 = vmatpush1.bf16.msra.mxu0 %v3267
    %3406 = vmatprep.subr.bf16.mxu0 0
    %3407 = vmatpush1.bf16.msra.mxu0 %v3268
    %3408 = vmatprep.subr.bf16.mxu0 0
    %3409 = vmatpush1.bf16.msra.mxu0 %v3269
    %3410 = vmatprep.subr.bf16.mxu0 0
    %3411 = vmatpush1.bf16.msra.mxu0 %v3270
    %3412 = vmatprep.subr.bf16.mxu0 0
    %3413 = vmatpush1.bf16.msra.mxu0 %v3271
    %3414 = vmatprep.subr.bf16.mxu0 0
    %3415 = vmatpush1.bf16.msra.mxu0 %v3272
    %3416 = vmatprep.subr.bf16.mxu0 0
    %3417 = vmatpush1.bf16.msra.mxu0 %v3273
    %3418 = vmatprep.mubr.bf16.mxu0 %v2860
    %3419 = vmatmul.mubr.bf16.gmra.mrb[0].mxu0 %v2859
    %v3420 = vpop.f32.mrb[0].mxu0
    %v3421 = vadd.f32 %v3000, %v3420
    %v3422 = vpop.f32.mrb[0].mxu0
    %v3423 = vpop.f32.mrb[0].mxu0
    %v3424 = vadd.f32 %v3000, %v3423
    %v3425 = vpop.f32.mrb[0].mxu0
    %3426 = vdwg.mxu0
    %3427 = vmatprep.subr.bf16.mxu0 0
    %3428 = vmatpush1.bf16.msra.mxu0 %v3274
    %3429 = vmatprep.subr.bf16.mxu0 0
    %3430 = vmatpush1.bf16.msra.mxu0 %v3275
    %3431 = vmatprep.subr.bf16.mxu0 0
    %3432 = vmatpush1.bf16.msra.mxu0 %v3276
    %3433 = vmatprep.subr.bf16.mxu0 0
    %3434 = vmatpush1.bf16.msra.mxu0 %v3277
    %3435 = vmatprep.subr.bf16.mxu0 0
    %3436 = vmatpush1.bf16.msra.mxu0 %v3278
    %3437 = vmatprep.subr.bf16.mxu0 0
    %3438 = vmatpush1.bf16.msra.mxu0 %v3279
    %3439 = vmatprep.subr.bf16.mxu0 0
    %3440 = vmatpush1.bf16.msra.mxu0 %v3280
    %3441 = vmatprep.subr.bf16.mxu0 0
    %3442 = vmatpush1.bf16.msra.mxu0 %v3281
    %3443 = vmatprep.subr.bf16.mxu0 0
    %3444 = vmatpush1.bf16.msra.mxu0 %v3282
    %3445 = vmatprep.subr.bf16.mxu0 0
    %3446 = vmatpush1.bf16.msra.mxu0 %v3283
    %3447 = vmatprep.subr.bf16.mxu0 0
    %3448 = vmatpush1.bf16.msra.mxu0 %v3284
    %3449 = vmatprep.subr.bf16.mxu0 0
    %3450 = vmatpush1.bf16.msra.mxu0 %v3285
    %3451 = vmatprep.subr.bf16.mxu0 0
    %3452 = vmatpush1.bf16.msra.mxu0 %v3286
    %3453 = vmatprep.subr.bf16.mxu0 0
    %3454 = vmatpush1.bf16.msra.mxu0 %v3287
    %3455 = vmatprep.subr.bf16.mxu0 0
    %3456 = vmatpush1.bf16.msra.mxu0 %v3288
    %3457 = vmatprep.subr.bf16.mxu0 0
    %3458 = vmatpush1.bf16.msra.mxu0 %v3289
    %3459 = vmatprep.mubr.bf16.mxu0 %v2862
    %3460 = vmatmul.mubr.bf16.gmra.mrb[0].mxu0 %v2861
    %v3461 = vpop.f32.mrb[0].mxu0
    %v3462 = vadd.f32 %v3421, %v3461
    %v3463 = vpop.f32.mrb[0].mxu0
    %v3464 = vpop.f32.mrb[0].mxu0
    %v3465 = vadd.f32 %v3424, %v3464
    %v3466 = vpop.f32.mrb[0].mxu0
    %3467 = vdwg.mxu0
    %3468 = vmatprep.subr.bf16.mxu0 0
    %3469 = vmatpush1.bf16.msra.mxu0 %v3290
    %3470 = vmatprep.subr.bf16.mxu0 0
    %3471 = vmatpush1.bf16.msra.mxu0 %v3291
    %3472 = vmatprep.subr.bf16.mxu0 0
    %3473 = vmatpush1.bf16.msra.mxu0 %v3292
    %3474 = vmatprep.subr.bf16.mxu0 0
    %3475 = vmatpush1.bf16.msra.mxu0 %v3293
    %3476 = vmatprep.subr.bf16.mxu0 0
    %3477 = vmatpush1.bf16.msra.mxu0 %v3294
    %3478 = vmatprep.subr.bf16.mxu0 0
    %3479 = vmatpush1.bf16.msra.mxu0 %v3295
    %3480 = vmatprep.subr.bf16.mxu0 0
    %3481 = vmatpush1.bf16.msra.mxu0 %v3296
    %3482 = vmatprep.subr.bf16.mxu0 0
    %3483 = vmatpush1.bf16.msra.mxu0 %v3297
    %3484 = vmatprep.subr.bf16.mxu0 0
    %3485 = vmatpush1.bf16.msra.mxu0 %v3298
    %3486 = vmatprep.subr.bf16.mxu0 0
    %3487 = vmatpush1.bf16.msra.mxu0 %v3299
    %3488 = vmatprep.subr.bf16.mxu0 0
    %3489 = vmatpush1.bf16.msra.mxu0 %v3300
    %3490 = vmatprep.subr.bf16.mxu0 0
    %3491 = vmatpush1.bf16.msra.mxu0 %v3301
    %3492 = vmatprep.subr.bf16.mxu0 0
    %3493 = vmatpush1.bf16.msra.mxu0 %v3302
    %3494 = vmatprep.subr.bf16.mxu0 0
    %3495 = vmatpush1.bf16.msra.mxu0 %v3303
    %3496 = vmatprep.subr.bf16.mxu0 0
    %3497 = vmatpush1.bf16.msra.mxu0 %v3304
    %3498 = vmatprep.subr.bf16.mxu0 0
    %3499 = vmatpush1.bf16.msra.mxu0 %v3305
    %3500 = vmatprep.mubr.bf16.mxu0 %v2864
    %3501 = vmatmul.mubr.bf16.gmra.mrb[0].mxu0 %v2863
    %v3502 = vpop.f32.mrb[0].mxu0
    %v3503 = vadd.f32 %v3462, %v3502
    %v3504 = vpop.f32.mrb[0].mxu0
    %v3505 = vpop.f32.mrb[0].mxu0
    %v3506 = vadd.f32 %v3465, %v3505
    %v3507 = vpop.f32.mrb[0].mxu0
    %3508 = vdwg.mxu0
    %3509 = vmatprep.subr.bf16.mxu0 0
    %3510 = vmatpush1.bf16.msra.mxu0 %v3306
    %3511 = vmatprep.subr.bf16.mxu0 0
    %3512 = vmatpush1.bf16.msra.mxu0 %v3307
    %3513 = vmatprep.subr.bf16.mxu0 0
    %3514 = vmatpush1.bf16.msra.mxu0 %v3308
    %3515 = vmatprep.subr.bf16.mxu0 0
    %3516 = vmatpush1.bf16.msra.mxu0 %v3309
    %3517 = vmatprep.subr.bf16.mxu0 0
    %3518 = vmatpush1.bf16.msra.mxu0 %v3310
    %3519 = vmatprep.subr.bf16.mxu0 0
    %3520 = vmatpush1.bf16.msra.mxu0 %v3311
    %3521 = vmatprep.subr.bf16.mxu0 0
    %3522 = vmatpush1.bf16.msra.mxu0 %v3312
    %3523 = vmatprep.subr.bf16.mxu0 0
    %3524 = vmatpush1.bf16.msra.mxu0 %v3313
    %3525 = vmatprep.subr.bf16.mxu0 0
    %3526 = vmatpush1.bf16.msra.mxu0 %v3314
    %3527 = vmatprep.subr.bf16.mxu0 0
    %3528 = vmatpush1.bf16.msra.mxu0 %v3315
    %3529 = vmatprep.subr.bf16.mxu0 0
    %3530 = vmatpush1.bf16.msra.mxu0 %v3316
    %3531 = vmatprep.subr.bf16.mxu0 0
    %3532 = vmatpush1.bf16.msra.mxu0 %v3317
    %3533 = vmatprep.subr.bf16.mxu0 0
    %3534 = vmatpush1.bf16.msra.mxu0 %v3318
    %3535 = vmatprep.subr.bf16.mxu0 0
    %3536 = vmatpush1.bf16.msra.mxu0 %v3319
    %3537 = vmatprep.subr.bf16.mxu0 0
    %3538 = vmatpush1.bf16.msra.mxu0 %v3320
    %3539 = vmatprep.subr.bf16.mxu0 0
    %3540 = vmatpush1.bf16.msra.mxu0 %v3321
    %3541 = vmatprep.mubr.bf16.mxu0 %v2866
    %3542 = vmatmul.mubr.bf16.gmra.mrb[0].mxu0 %v2865
    %v3543 = vpop.f32.mrb[0].mxu0
    %v3544 = vadd.f32 %v3503, %v3543
    %v3545 = vpop.f32.mrb[0].mxu0
    %v3546 = vpop.f32.mrb[0].mxu0
    %v3547 = vadd.f32 %v3506, %v3546
    %v3548 = vpop.f32.mrb[0].mxu0
    %3549 = vdwg.mxu0
    %v3550 = vmax.f32 %v3544, -1.0
    %v3551 = vmax.f32 %v3547, -1.0
    %v3552 = vmin.f32 %v3550, 1.0
    %v3553 = vmin.f32 %v3551, 1.0
    %3554 = vst [vmem:[#allocation13] sm:$0xff] %v3552
    %3555 = vst [vmem:[#allocation13 + $0x8] sm:$0xff] %v3553
    // Predicated region
    $region70: #{tpu_custom_call.1} parent=1 // pred_check
      _
    $region71: #{tpu_custom_call.1} parent=1 // pred_check_branch
      %3557 = sbr.rel (0) target = $region73
    $region72: #{tpu_custom_call.1} parent=1 // pred_region
      %s3559 = ssub.s32 256, 256
      %3560 = vsyncadd [#allocation4], %s3559
      %s3561 = sshll.u32 [#allocation13], 4
      %s3562 = int_to_ptr.vmem [resolvable:$true] %s3561
      %3567 = dma.vmem_to_hbm [thread:$0]  %s3562, 256, %s11, [#allocation4], 128, 128, 8
    $region73: #{tpu_custom_call.1} parent=1 // pred_fallthru
      _
    // Predicated region
    $region74: #{tpu_custom_call.1} parent=1 // pred_check
      _
    $region75: #{tpu_custom_call.1} parent=1 // pred_check_branch
      %3569 = sbr.rel (0) target = $region77
    $region76: #{tpu_custom_call.1} parent=1 // pred_region
      %3570 = dma.done [#allocation4], 256
    $region77: #{tpu_custom_call.1} parent=1 // pred_fallthru
      _
    %3571 = vsyncpa [#allocation3], 1
    %3572 = vsyncpa [#allocation6], 1
    %3573 = vsyncpa [#allocation9], 1
    %3574 = vsyncpa [#allocation12], 1
    %3575 = vsyncpa [#allocation4], 1

</llo_original>
